<compile_context>
chip_gen: v7x
topology: tpu7x:2x2x1
jax: 0.10.0
libtpu: 0.0.40
codegen_flags: <defaults>
</compile_context>

<pallas_src>
import functools

import jax
import jax.numpy as jnp
from jax.experimental import pallas as pl
from jax.experimental.pallas import tpu as pltpu

# Module constants (fixed by the PyTorch class).
INPUT_LAYER_OUTPUT_SIZE = 2048
HIDDEN_LAYER_SIZE = 512
OUTPUT_LAYER_INPUT_SIZE = 128
BOARD_FEATS = 64                       # 8x8 board per piece tensor
BOARD_IN = 4 * BOARD_FEATS             # 256 (MXU-friendly part of K)
D_IN = BOARD_IN + 2                    # 258 (LazyLinear inferred input dim)
NEG_SLOPE = 0.01                       # F.leaky_relu default


def _leaky_relu(x):
    return jnp.where(x > 0, x, NEG_SLOPE * x)


def _mlp_kernel(xb_ref, xe_ref,
                w1_ref, w1e_ref, b1_ref,
                w2_ref, b2_ref,
                w3_ref, b3_ref,
                w4_ref, b4_ref,
                o_ref):
    # Every ref carries a leading size-1 quarter dim selected by the grid.
    xb = xb_ref[0]                                            # (TN, 256) bf16 (0/1 bits, exact)
    xe = xe_ref[0]                                            # (TN, 2)   f32 (eval before/after)

    # Layer 1: 256-wide MXU matmul (bf16 in, f32 acc) + two rank-1 VPU updates
    # for the two eval columns, kept in f32 for precision.  The kernel is
    # weight-DMA bound, so these VPU passes ride otherwise-idle VALU slots;
    # if a profile ever shows VALU as the saturating slot at large TN, fold
    # them into one small MXU dot instead:
    #   h = h + jnp.dot(xe, w1e_ref[0], preferred_element_type=jnp.float32)
    h = jnp.dot(xb, w1_ref[0], preferred_element_type=jnp.float32)   # (TN, 2048)
    w1e = w1e_ref[0]                                          # (2, 2048) f32
    h = h + xe[:, 0:1] * w1e[0:1, :]
    h = h + xe[:, 1:2] * w1e[1:2, :]
    h = _leaky_relu(h + b1_ref[0])

    # Layer 2: 2048 -> 512
    h = jnp.dot(h.astype(jnp.bfloat16), w2_ref[0],
                preferred_element_type=jnp.float32) + b2_ref[0]
    h = _leaky_relu(h)                                        # (TN, 512)

    # Layer 3: 512 -> 128
    h = jnp.dot(h.astype(jnp.bfloat16), w3_ref[0],
                preferred_element_type=jnp.float32) + b3_ref[0]
    h = _leaky_relu(h)                                        # (TN, 128)

    # Output layer 128 -> 1 as a VPU multiply + cross-lane (XLU) reduce,
    # w4 stored lane-dense as (1, 128): no lane-sparse MXU pass.
    out = jnp.sum(h * w4_ref[0], axis=-1, keepdims=True) + b4_ref[0]   # (TN, 1)
    o_ref[0] = out.astype(o_ref.dtype)


def _round_up(n, m):
    return ((n + m - 1) // m) * m


def _tile_config():
    """Per-generation batch-tile size and scoped-VMEM budget."""
    try:
        kind = jax.devices()[0].device_kind.lower()
    except Exception:
        kind = ""
    # v5e / v6e: 128 MiB VMEM -> bigger tiles amortize per-step (~0.35us)
    # overhead and keep the MXU fed over more LHS rows.
    if ("v5" in kind) or ("v6" in kind):
        return 512, 64 << 20
    # v7x (or unknown): only 64 MiB physical VMEM per TC, ~3.2 TB/s HBM ->
    # conservative tile and scoped limit.
    return 256, 32 << 20


def _weight_bytes_per_call():
    per_q = (BOARD_IN * INPUT_LAYER_OUTPUT_SIZE * 2            # w1  bf16
             + 2 * INPUT_LAYER_OUTPUT_SIZE * 4                 # w1e f32
             + INPUT_LAYER_OUTPUT_SIZE * 4                     # b1
             + INPUT_LAYER_OUTPUT_SIZE * HIDDEN_LAYER_SIZE * 2 # w2  bf16
             + HIDDEN_LAYER_SIZE * 4                           # b2
             + HIDDEN_LAYER_SIZE * OUTPUT_LAYER_INPUT_SIZE * 2 # w3  bf16
             + OUTPUT_LAYER_INPUT_SIZE * 4                     # b3
             + OUTPUT_LAYER_INPUT_SIZE * 4                     # w4  f32
             + 4)                                              # b4
    return 4 * per_q


def cuttlefish_forward(x_board, x_eval, params, *, weight_buffers=3):
    """x_board: (4, N, 256) board bits (cast to bf16 in here — exact for 0/1).
    x_eval: (4, N, 2) f32 eval-before/after columns.
    params: dict of stacked per-quarter weights/biases (see make_params).
    Returns (4*N, 1) f32, quarters concatenated in order (q1..q4)."""
    Q, N, Db = x_board.shape
    assert Q == 4 and Db == BOARD_IN
    assert x_eval.shape == (Q, N, 2)

    if N == 0:
        # Ragged/empty quarters: PyTorch returns an empty tensor per quarter.
        return jnp.zeros((0, 1), jnp.float32)

    # Cast (no-op if caller already passed bf16) and pad; both fuse under jit.
    x_board = x_board.astype(jnp.bfloat16)
    x_eval = x_eval.astype(jnp.float32)

    TN_pref, vmem_limit = _tile_config()
    if N <= TN_pref:
        TN = _round_up(N, 8)           # keep (8,128) sublane alignment
    else:
        TN = TN_pref
    N_pad = _round_up(N, TN)
    NB = N_pad // TN

    if N_pad != N:
        pad = ((0, 0), (0, N_pad - N), (0, 0))
        x_board = jnp.pad(x_board, pad)
        x_eval = jnp.pad(x_eval, pad)

    def qmap(q, b):          # weights: ignore batch index -> stay VMEM-resident
        return (q, 0, 0)

    def xmap(q, b):          # activations / output: tile over batch
        return (q, b, 0)

    def wspec(shape):
        # Deeper lookahead on the big weight streams so the next quarter's
        # weight set starts DMAing more than one batch tile early.
        if weight_buffers and weight_buffers > 2 and hasattr(pl, "Buffered"):
            try:
                return pl.BlockSpec(shape, qmap,
                                    pipeline_mode=pl.Buffered(weight_buffers))
            except TypeError:
                pass
        return pl.BlockSpec(shape, qmap)

    grid_spec = pltpu.PrefetchScalarGridSpec(
        num_scalar_prefetch=0,
        grid=(Q, NB),
        in_specs=[
            pl.BlockSpec((1, TN, BOARD_IN), xmap),
            pl.BlockSpec((1, TN, 2), xmap),
            wspec((1, BOARD_IN, INPUT_LAYER_OUTPUT_SIZE)),
            pl.BlockSpec((1, 2, INPUT_LAYER_OUTPUT_SIZE), qmap),
            pl.BlockSpec((1, 1, INPUT_LAYER_OUTPUT_SIZE), qmap),
            wspec((1, INPUT_LAYER_OUTPUT_SIZE, HIDDEN_LAYER_SIZE)),
            pl.BlockSpec((1, 1, HIDDEN_LAYER_SIZE), qmap),
            wspec((1, HIDDEN_LAYER_SIZE, OUTPUT_LAYER_INPUT_SIZE)),
            pl.BlockSpec((1, 1, OUTPUT_LAYER_INPUT_SIZE), qmap),
            pl.BlockSpec((1, 1, OUTPUT_LAYER_INPUT_SIZE), qmap),
            pl.BlockSpec((1, 1, 1), qmap),
        ],
        out_specs=pl.BlockSpec((1, TN, 1), xmap),
    )

    flops = 2 * Q * N_pad * (BOARD_IN * INPUT_LAYER_OUTPUT_SIZE
                             + INPUT_LAYER_OUTPUT_SIZE * HIDDEN_LAYER_SIZE
                             + HIDDEN_LAYER_SIZE * OUTPUT_LAYER_INPUT_SIZE
                             + OUTPUT_LAYER_INPUT_SIZE
                             + 2 * INPUT_LAYER_OUTPUT_SIZE)
    bytes_accessed = (_weight_bytes_per_call()
                      + Q * N_pad * (BOARD_IN * 2 + 2 * 4)   # bf16 boards + f32 evals
                      + Q * N_pad * 4)                       # outputs

    out = pl.pallas_call(
        _mlp_kernel,
        out_shape=jax.ShapeDtypeStruct((Q, N_pad, 1), jnp.float32),
        grid_spec=grid_spec,
        compiler_params=pltpu.CompilerParams(
            # quarter axis parallel (megacore split); batch axis arbitrary so
            # each quarter's weights stay resident across its batch tiles.
            dimension_semantics=("parallel", "arbitrary"),
            vmem_limit_bytes=vmem_limit,
        ),
        cost_estimate=pl.CostEstimate(
            flops=flops, transcendentals=0, bytes_accessed=bytes_accessed),
    )(x_board, x_eval,
      params["w1"], params["w1e"], params["b1"],
      params["w2"], params["b2"],
      params["w3"], params["b3"],
      params["w4"], params["b4"])

    # torch.cat([q1, q2, q3, q4]) along dim 0 -> (4*N, 1); drop padded rows.
    return out[:, :N, :].reshape(Q * N, 1)


def _linear_init(key, fan_in, fan_out):
    """PyTorch nn.Linear default init: U(-1/sqrt(fan_in), 1/sqrt(fan_in))."""
    kw, kb = jax.random.split(key)
    bound = 1.0 / jnp.sqrt(jnp.float32(fan_in))
    w = jax.random.uniform(kw, (fan_in, fan_out), jnp.float32, -bound, bound)
    b = jax.random.uniform(kb, (1, fan_out), jnp.float32, -bound, bound)
    return w, b


def make_params(key):
    # TODO(synk): on v7x store w1/w2 as fp8(e4m3) with per-column scales folded
    # into b1/b2 (int8 on v5e/v6e) to halve weight DMA again; skipped here to
    # keep numerics close to the f32 PyTorch module (bf16 already diverges).
    dims = [(D_IN, INPUT_LAYER_OUTPUT_SIZE),
            (INPUT_LAYER_OUTPUT_SIZE, HIDDEN_LAYER_SIZE),
            (HIDDEN_LAYER_SIZE, OUTPUT_LAYER_INPUT_SIZE),
            (OUTPUT_LAYER_INPUT_SIZE, 1)]
    w_all = [[None] * 4 for _ in range(4)]   # [layer][quarter]
    b_all = [[None] * 4 for _ in range(4)]
    for li, (fi, fo) in enumerate(dims):
        for q in range(4):
            w, b = _linear_init(jax.random.fold_in(key, q * 4 + li), fi, fo)
            w_all[li][q] = w
            b_all[li][q] = b

    params = {}
    w1_full = jnp.stack(w_all[0])                                  # (4, 258, 2048) f32
    params["w1"] = w1_full[:, :BOARD_IN, :].astype(jnp.bfloat16)   # (4, 256, 2048) bf16
    params["w1e"] = w1_full[:, BOARD_IN:, :]                       # (4, 2, 2048)   f32
    params["b1"] = jnp.stack(b_all[0])                             # (4, 1, 2048)   f32
    params["w2"] = jnp.stack(w_all[1]).astype(jnp.bfloat16)        # (4, 2048, 512) bf16
    params["b2"] = jnp.stack(b_all[1])                             # (4, 1, 512)
    params["w3"] = jnp.stack(w_all[2]).astype(jnp.bfloat16)        # (4, 512, 128)  bf16
    params["b3"] = jnp.stack(b_all[2])                             # (4, 1, 128)
    # Output layer stored lane-dense: y = sum(h * w4, -1) + b4
    params["w4"] = jnp.transpose(jnp.stack(w_all[3]), (0, 2, 1))   # (4, 1, 128)    f32
    params["b4"] = jnp.stack(b_all[3])                             # (4, 1, 1)
    return params


def reference_forward(x_board, x_eval, params):
    """Pure-JAX reference using identical numerics (bf16 weights, f32 acc)."""
    outs = []
    for q in range(4):
        xb = x_board[q].astype(jnp.bfloat16)
        xe = x_eval[q].astype(jnp.float32)
        h = jnp.dot(xb, params["w1"][q], preferred_element_type=jnp.float32)
        h = (h + xe[:, 0:1] * params["w1e"][q, 0:1, :]
               + xe[:, 1:2] * params["w1e"][q, 1:2, :] + params["b1"][q])
        h = _leaky_relu(h)
        h = jnp.dot(h.astype(jnp.bfloat16), params["w2"][q],
                    preferred_element_type=jnp.float32) + params["b2"][q]
        h = _leaky_relu(h)
        h = jnp.dot(h.astype(jnp.bfloat16), params["w3"][q],
                    preferred_element_type=jnp.float32) + params["b3"][q]
        h = _leaky_relu(h)
        out = jnp.sum(h * params["w4"][q], axis=-1, keepdims=True) + params["b4"][q]
        outs.append(out)
    return jnp.concatenate(outs, axis=0)


if __name__ == "__main__":
    key = jax.random.PRNGKey(0)
    k_params, k_data = jax.random.split(key)

    N = 8  # moves per quarter (small batch)

    # Build per-quarter inputs as the PyTorch forward would, but keep the board
    # block and eval block separate (no (N,258) concat that the wrapper would
    # have to re-slice) and pre-cast the 0/1 board bits to bf16 (exact).
    ks = jax.random.split(k_data, 4)
    boards, evals = [], []
    for q in range(4):
        kf, ku, kfa, kua, keb, kea = jax.random.split(ks[q], 6)
        board_q = jnp.concatenate(
            [jax.random.bernoulli(kf, 0.3, (N, BOARD_FEATS)),
             jax.random.bernoulli(ku, 0.3, (N, BOARD_FEATS)),
             jax.random.bernoulli(kfa, 0.3, (N, BOARD_FEATS)),
             jax.random.bernoulli(kua, 0.3, (N, BOARD_FEATS))],
            axis=1).astype(jnp.float32)
        eval_q = jnp.concatenate(
            [jax.random.normal(keb, (N, 1), jnp.float32),
             jax.random.normal(kea, (N, 1), jnp.float32)], axis=1)
        boards.append(board_q)
        evals.append(eval_q)
    x_board = jnp.stack(boards).astype(jnp.bfloat16)   # (4, N, 256) bf16, exact 0/1
    x_eval = jnp.stack(evals)                          # (4, N, 2)   f32

    params = make_params(k_params)

    fwd = jax.jit(cuttlefish_forward)
    try:
        out = jax.block_until_ready(fwd(x_board, x_eval, params))
    except Exception:
        # Fallback for Pallas versions without pipeline_mode deep buffering.
        fwd = jax.jit(functools.partial(cuttlefish_forward, weight_buffers=0))
        out = jax.block_until_ready(fwd(x_board, x_eval, params))

    ref = reference_forward(x_board, x_eval, params)
    assert out.shape == (4 * N, 1), out.shape
    max_err = float(jnp.max(jnp.abs(out - ref)))
    assert jnp.allclose(out, ref, atol=1e-2, rtol=1e-2), max_err

    print("KERNEL_OK")
</pallas_src>

<mosaic_0001>
module attributes {stable_mosaic.version = 11 : i64} {
  func.func @_mlp_kernel(%arg0: i32, %arg1: i32, %arg2: memref<1x8x256xbf16, #tpu.memory_space<vmem>>, %arg3: memref<1x8x2xf32, #tpu.memory_space<vmem>>, %arg4: memref<1x256x2048xbf16, #tpu.memory_space<vmem>>, %arg5: memref<1x2x2048xf32, #tpu.memory_space<vmem>>, %arg6: memref<1x1x2048xf32, #tpu.memory_space<vmem>>, %arg7: memref<1x2048x512xbf16, #tpu.memory_space<vmem>>, %arg8: memref<1x1x512xf32, #tpu.memory_space<vmem>>, %arg9: memref<1x512x128xbf16, #tpu.memory_space<vmem>>, %arg10: memref<1x1x128xf32, #tpu.memory_space<vmem>>, %arg11: memref<1x1x128xf32, #tpu.memory_space<vmem>>, %arg12: memref<1x1x1xf32, #tpu.memory_space<vmem>>, %arg13: memref<1x8x1xf32, #tpu.memory_space<vmem>>) attributes {dimension_semantics = [#tpu.dimension_semantics<parallel>, #tpu.dimension_semantics<arbitrary>], iteration_bounds = array<i64: 4, 1>, scalar_prefetch = 0 : i64, scratch_operands = 0 : i64, tpu.core_type = #tpu.core_type<tc>, window_params = [{transform_indices = @transform_0, window_bounds = array<i64: 1, 8, 256>}, {transform_indices = @transform_1, window_bounds = array<i64: 1, 8, 2>}, {transform_indices = @transform_2, window_bounds = array<i64: 1, 256, 2048>}, {transform_indices = @transform_3, window_bounds = array<i64: 1, 2, 2048>}, {transform_indices = @transform_4, window_bounds = array<i64: 1, 1, 2048>}, {transform_indices = @transform_5, window_bounds = array<i64: 1, 2048, 512>}, {transform_indices = @transform_6, window_bounds = array<i64: 1, 1, 512>}, {transform_indices = @transform_7, window_bounds = array<i64: 1, 512, 128>}, {transform_indices = @transform_8, window_bounds = array<i64: 1, 1, 128>}, {transform_indices = @transform_9, window_bounds = array<i64: 1, 1, 128>}, {transform_indices = @transform_10, window_bounds = array<i64: 1, 1, 1>}, {transform_indices = @transform_11, window_bounds = array<i64: 1, 8, 1>}]} {
    %c0 = arith.constant 0 : index
    %c0_0 = arith.constant 0 : index
    %c0_1 = arith.constant 0 : index
    %0 = vector.load %arg2[%c0, %c0_0, %c0_1] : memref<1x8x256xbf16, #tpu.memory_space<vmem>>, vector<1x8x256xbf16>
    %1 = vector.shape_cast %0 : vector<1x8x256xbf16> to vector<8x256xbf16>
    %c0_2 = arith.constant 0 : index
    %c0_3 = arith.constant 0 : index
    %c0_4 = arith.constant 0 : index
    %2 = vector.load %arg3[%c0_2, %c0_3, %c0_4] : memref<1x8x2xf32, #tpu.memory_space<vmem>>, vector<1x8x2xf32>
    %3 = vector.shape_cast %2 : vector<1x8x2xf32> to vector<8x2xf32>
    %c0_5 = arith.constant 0 : index
    %c0_6 = arith.constant 0 : index
    %c0_7 = arith.constant 0 : index
    %4 = vector.load %arg4[%c0_5, %c0_6, %c0_7] : memref<1x256x2048xbf16, #tpu.memory_space<vmem>>, vector<1x256x2048xbf16>
    %5 = vector.shape_cast %4 : vector<1x256x2048xbf16> to vector<256x2048xbf16>
    %cst = arith.constant dense<0.000000e+00> : vector<8x2048xf32>
    %6 = tpu.matmul %1, %5, %cst {dimension_numbers = #tpu.dot_dimension_numbers<[1], [0], [0], [1], [0, 0, 1, 1], [], []>} : vector<8x256xbf16>, vector<256x2048xbf16>, vector<8x2048xf32> -> vector<8x2048xf32>
    %c0_8 = arith.constant 0 : index
    %c0_9 = arith.constant 0 : index
    %c0_10 = arith.constant 0 : index
    %7 = vector.load %arg5[%c0_8, %c0_9, %c0_10] : memref<1x2x2048xf32, #tpu.memory_space<vmem>>, vector<1x2x2048xf32>
    %8 = vector.shape_cast %7 : vector<1x2x2048xf32> to vector<2x2048xf32>
    %9 = vector.extract_strided_slice %3 {offsets = [0, 0], sizes = [8, 1], strides = [1, 1]} : vector<8x2xf32> to vector<8x1xf32>
    %10 = vector.extract_strided_slice %8 {offsets = [0, 0], sizes = [1, 2048], strides = [1, 1]} : vector<2x2048xf32> to vector<1x2048xf32>
    %11 = vector.broadcast %9 : vector<8x1xf32> to vector<8x2048xf32>
    %12 = vector.broadcast %10 : vector<1x2048xf32> to vector<8x2048xf32>
    %13 = arith.mulf %11, %12 : vector<8x2048xf32>
    %14 = arith.addf %6, %13 : vector<8x2048xf32>
    %15 = vector.extract_strided_slice %3 {offsets = [0, 1], sizes = [8, 1], strides = [1, 1]} : vector<8x2xf32> to vector<8x1xf32>
    %16 = vector.extract_strided_slice %8 {offsets = [1, 0], sizes = [1, 2048], strides = [1, 1]} : vector<2x2048xf32> to vector<1x2048xf32>
    %17 = vector.broadcast %15 : vector<8x1xf32> to vector<8x2048xf32>
    %18 = vector.broadcast %16 : vector<1x2048xf32> to vector<8x2048xf32>
    %19 = arith.mulf %17, %18 : vector<8x2048xf32>
    %20 = arith.addf %14, %19 : vector<8x2048xf32>
    %c0_11 = arith.constant 0 : index
    %c0_12 = arith.constant 0 : index
    %c0_13 = arith.constant 0 : index
    %21 = vector.load %arg6[%c0_11, %c0_12, %c0_13] : memref<1x1x2048xf32, #tpu.memory_space<vmem>>, vector<1x1x2048xf32>
    %22 = vector.shape_cast %21 : vector<1x1x2048xf32> to vector<1x2048xf32>
    %23 = vector.broadcast %22 : vector<1x2048xf32> to vector<8x2048xf32>
    %24 = arith.addf %20, %23 : vector<8x2048xf32>
    %cst_14 = arith.constant 0.000000e+00 : f32
    %25 = vector.broadcast %cst_14 : f32 to vector<8x2048xf32>
    %26 = arith.cmpf ogt, %24, %25 : vector<8x2048xf32>
    %cst_15 = arith.constant 0.00999999977 : f32
    %27 = vector.broadcast %cst_15 : f32 to vector<8x2048xf32>
    %28 = arith.mulf %27, %24 : vector<8x2048xf32>
    %29 = arith.select %26, %24, %28 : vector<8x2048xi1>, vector<8x2048xf32>
    %30 = arith.truncf %29 : vector<8x2048xf32> to vector<8x2048xbf16>
    %c0_16 = arith.constant 0 : index
    %c0_17 = arith.constant 0 : index
    %c0_18 = arith.constant 0 : index
    %31 = vector.load %arg7[%c0_16, %c0_17, %c0_18] : memref<1x2048x512xbf16, #tpu.memory_space<vmem>>, vector<1x2048x512xbf16>
    %32 = vector.shape_cast %31 : vector<1x2048x512xbf16> to vector<2048x512xbf16>
    %cst_19 = arith.constant dense<0.000000e+00> : vector<8x512xf32>
    %33 = tpu.matmul %30, %32, %cst_19 {dimension_numbers = #tpu.dot_dimension_numbers<[1], [0], [0], [1], [0, 0, 1, 1], [], []>} : vector<8x2048xbf16>, vector<2048x512xbf16>, vector<8x512xf32> -> vector<8x512xf32>
    %c0_20 = arith.constant 0 : index
    %c0_21 = arith.constant 0 : index
    %c0_22 = arith.constant 0 : index
    %34 = vector.load %arg8[%c0_20, %c0_21, %c0_22] : memref<1x1x512xf32, #tpu.memory_space<vmem>>, vector<1x1x512xf32>
    %35 = vector.shape_cast %34 : vector<1x1x512xf32> to vector<1x512xf32>
    %36 = vector.broadcast %35 : vector<1x512xf32> to vector<8x512xf32>
    %37 = arith.addf %33, %36 : vector<8x512xf32>
    %cst_23 = arith.constant 0.000000e+00 : f32
    %38 = vector.broadcast %cst_23 : f32 to vector<8x512xf32>
    %39 = arith.cmpf ogt, %37, %38 : vector<8x512xf32>
    %cst_24 = arith.constant 0.00999999977 : f32
    %40 = vector.broadcast %cst_24 : f32 to vector<8x512xf32>
    %41 = arith.mulf %40, %37 : vector<8x512xf32>
    %42 = arith.select %39, %37, %41 : vector<8x512xi1>, vector<8x512xf32>
    %43 = arith.truncf %42 : vector<8x512xf32> to vector<8x512xbf16>
    %c0_25 = arith.constant 0 : index
    %c0_26 = arith.constant 0 : index
    %c0_27 = arith.constant 0 : index
    %44 = vector.load %arg9[%c0_25, %c0_26, %c0_27] : memref<1x512x128xbf16, #tpu.memory_space<vmem>>, vector<1x512x128xbf16>
    %45 = vector.shape_cast %44 : vector<1x512x128xbf16> to vector<512x128xbf16>
    %cst_28 = arith.constant dense<0.000000e+00> : vector<8x128xf32>
    %46 = tpu.matmul %43, %45, %cst_28 {dimension_numbers = #tpu.dot_dimension_numbers<[1], [0], [0], [1], [0, 0, 1, 1], [], []>} : vector<8x512xbf16>, vector<512x128xbf16>, vector<8x128xf32> -> vector<8x128xf32>
    %c0_29 = arith.constant 0 : index
    %c0_30 = arith.constant 0 : index
    %c0_31 = arith.constant 0 : index
    %47 = vector.load %arg10[%c0_29, %c0_30, %c0_31] : memref<1x1x128xf32, #tpu.memory_space<vmem>>, vector<1x1x128xf32>
    %48 = vector.shape_cast %47 : vector<1x1x128xf32> to vector<1x128xf32>
    %49 = vector.broadcast %48 : vector<1x128xf32> to vector<8x128xf32>
    %50 = arith.addf %46, %49 : vector<8x128xf32>
    %cst_32 = arith.constant 0.000000e+00 : f32
    %51 = vector.broadcast %cst_32 : f32 to vector<8x128xf32>
    %52 = arith.cmpf ogt, %50, %51 : vector<8x128xf32>
    %cst_33 = arith.constant 0.00999999977 : f32
    %53 = vector.broadcast %cst_33 : f32 to vector<8x128xf32>
    %54 = arith.mulf %53, %50 : vector<8x128xf32>
    %55 = arith.select %52, %50, %54 : vector<8x128xi1>, vector<8x128xf32>
    %c0_34 = arith.constant 0 : index
    %c0_35 = arith.constant 0 : index
    %c0_36 = arith.constant 0 : index
    %56 = vector.load %arg11[%c0_34, %c0_35, %c0_36] : memref<1x1x128xf32, #tpu.memory_space<vmem>>, vector<1x1x128xf32>
    %57 = vector.shape_cast %56 : vector<1x1x128xf32> to vector<1x128xf32>
    %58 = vector.broadcast %57 : vector<1x128xf32> to vector<8x128xf32>
    %59 = arith.mulf %55, %58 : vector<8x128xf32>
    %cst_37 = arith.constant dense<0.000000e+00> : vector<8xf32>
    %60 = vector.multi_reduction <add>, %59, %cst_37 [1] : vector<8x128xf32> to vector<8xf32>
    %61 = vector.shape_cast %60 : vector<8xf32> to vector<8x1xf32>
    %c0_38 = arith.constant 0 : index
    %c0_39 = arith.constant 0 : index
    %c0_40 = arith.constant 0 : index
    %62 = vector.load %arg12[%c0_38, %c0_39, %c0_40] : memref<1x1x1xf32, #tpu.memory_space<vmem>>, vector<1x1x1xf32>
    %63 = vector.shape_cast %62 : vector<1x1x1xf32> to vector<1x1xf32>
    %64 = vector.broadcast %63 : vector<1x1xf32> to vector<8x1xf32>
    %65 = arith.addf %61, %64 : vector<8x1xf32>
    %c0_41 = arith.constant 0 : index
    %c0_42 = arith.constant 0 : index
    %c0_43 = arith.constant 0 : index
    %66 = vector.load %arg13[%c0_41, %c0_42, %c0_43] : memref<1x8x1xf32, #tpu.memory_space<vmem>>, vector<1x8x1xf32>
    %67 = vector.shape_cast %66 : vector<1x8x1xf32> to vector<8x1xf32>
    %68 = vector.shape_cast %65 : vector<8x1xf32> to vector<1x8x1xf32>
    tpu.vector_store %arg13[%c0_41, %c0_42, %c0_43], %68 {strides = array<i32>} : memref<1x8x1xf32, #tpu.memory_space<vmem>>, vector<1x8x1xf32>,
    return
  }
  func.func @transform_0(%arg0: i32, %arg1: i32) -> (i32, i32, i32) {
    %c0_i32 = arith.constant 0 : i32
    %c0_i32_0 = arith.constant 0 : i32
    return %arg0, %arg1, %c0_i32 : i32, i32, i32
  }
  func.func @transform_1(%arg0: i32, %arg1: i32) -> (i32, i32, i32) {
    %c0_i32 = arith.constant 0 : i32
    %c0_i32_0 = arith.constant 0 : i32
    return %arg0, %arg1, %c0_i32 : i32, i32, i32
  }
  func.func @transform_2(%arg0: i32, %arg1: i32) -> (i32, i32, i32) {
    %c0_i32 = arith.constant 0 : i32
    %c0_i32_0 = arith.constant 0 : i32
    %c0_i32_1 = arith.constant 0 : i32
    return %arg0, %c0_i32, %c0_i32_0 : i32, i32, i32
  }
  func.func @transform_3(%arg0: i32, %arg1: i32) -> (i32, i32, i32) {
    %c0_i32 = arith.constant 0 : i32
    %c0_i32_0 = arith.constant 0 : i32
    %c0_i32_1 = arith.constant 0 : i32
    return %arg0, %c0_i32, %c0_i32_0 : i32, i32, i32
  }
  func.func @transform_4(%arg0: i32, %arg1: i32) -> (i32, i32, i32) {
    %c0_i32 = arith.constant 0 : i32
    %c0_i32_0 = arith.constant 0 : i32
    %c0_i32_1 = arith.constant 0 : i32
    return %arg0, %c0_i32, %c0_i32_0 : i32, i32, i32
  }
  func.func @transform_5(%arg0: i32, %arg1: i32) -> (i32, i32, i32) {
    %c0_i32 = arith.constant 0 : i32
    %c0_i32_0 = arith.constant 0 : i32
    %c0_i32_1 = arith.constant 0 : i32
    return %arg0, %c0_i32, %c0_i32_0 : i32, i32, i32
  }
  func.func @transform_6(%arg0: i32, %arg1: i32) -> (i32, i32, i32) {
    %c0_i32 = arith.constant 0 : i32
    %c0_i32_0 = arith.constant 0 : i32
    %c0_i32_1 = arith.constant 0 : i32
    return %arg0, %c0_i32, %c0_i32_0 : i32, i32, i32
  }
  func.func @transform_7(%arg0: i32, %arg1: i32) -> (i32, i32, i32) {
    %c0_i32 = arith.constant 0 : i32
    %c0_i32_0 = arith.constant 0 : i32
    %c0_i32_1 = arith.constant 0 : i32
    return %arg0, %c0_i32, %c0_i32_0 : i32, i32, i32
  }
  func.func @transform_8(%arg0: i32, %arg1: i32) -> (i32, i32, i32) {
    %c0_i32 = arith.constant 0 : i32
    %c0_i32_0 = arith.constant 0 : i32
    %c0_i32_1 = arith.constant 0 : i32
    return %arg0, %c0_i32, %c0_i32_0 : i32, i32, i32
  }
  func.func @transform_9(%arg0: i32, %arg1: i32) -> (i32, i32, i32) {
    %c0_i32 = arith.constant 0 : i32
    %c0_i32_0 = arith.constant 0 : i32
    %c0_i32_1 = arith.constant 0 : i32
    return %arg0, %c0_i32, %c0_i32_0 : i32, i32, i32
  }
  func.func @transform_10(%arg0: i32, %arg1: i32) -> (i32, i32, i32) {
    %c0_i32 = arith.constant 0 : i32
    %c0_i32_0 = arith.constant 0 : i32
    %c0_i32_1 = arith.constant 0 : i32
    return %arg0, %c0_i32, %c0_i32_0 : i32, i32, i32
  }
  func.func @transform_11(%arg0: i32, %arg1: i32) -> (i32, i32, i32) {
    %c0_i32 = arith.constant 0 : i32
    %c0_i32_0 = arith.constant 0 : i32
    return %arg0, %arg1, %c0_i32 : i32, i32, i32
  }
}

</mosaic_0001>

<llo_original>
// kernel: cuttlefish_forward.1
$region0: #{cuttlefish_forward.1}
  #allocation0 [shape = 'u32[]', space=smem, size = 0x4, offset = 0x4, fixed_abs, tag = 'smem constant byte address 0x4 - core index']
  #allocation1 [shape = 'u32[144,128]{1,0:T(1,128)}', space=vmem, size = 0x12000, scoped, tag = 'internal scratch']
  %s0 = inlined_call_operand.hbm [shape: bf16[4,8,256], index: 0, kind: input, shape index: {}]
  %s1 = inlined_call_operand.vmem [shape: f32[4,8,2], index: 1, kind: input, shape index: {}]
  %s2 = inlined_call_operand.hbm [shape: bf16[4,256,2048], index: 2, kind: input, shape index: {}]
  %s3 = inlined_call_operand.hbm [shape: f32[4,2,2048], index: 3, kind: input, shape index: {}]
  %s4 = inlined_call_operand.hbm [shape: f32[4,1,2048], index: 4, kind: input, shape index: {}]
  %s5 = inlined_call_operand.hbm [shape: bf16[4,2048,512], index: 5, kind: input, shape index: {}]
  %s6 = inlined_call_operand.hbm [shape: f32[4,1,512], index: 6, kind: input, shape index: {}]
  %s7 = inlined_call_operand.hbm [shape: bf16[4,512,128], index: 7, kind: input, shape index: {}]
  %s8 = inlined_call_operand.hbm [shape: f32[4,1,128], index: 8, kind: input, shape index: {}]
  %s9 = inlined_call_operand.hbm [shape: f32[4,1,128], index: 9, kind: input, shape index: {}]
  %s10 = inlined_call_operand.vmem [shape: f32[4,1,1], index: 10, kind: input, shape index: {}]
  %s11 = inlined_call_operand.vmem [shape: f32[4,8,1], index: 11, kind: output, shape index: {}]
  %s12 = sld [smem:[#allocation0]]
  $region113: #{cuttlefish_forward.1} parent=0
    _
  %s14 = ssub.s32 1, %s12
  %s15 = scalar_select 0, %s14, %s12
  $region1: #{cuttlefish_forward.1} parent=0
    #allocation2 [shape = 'u8[8192]{0}', space=vmem, size = 0x2000, scoped, tag = 'input window, operand 0']
    #allocation3 [shape = 's32[2]{0}', space=sflag, size = 0x8, scoped, tag = 'scoped memory for cuttlefish_forward.1']
    #allocation4 [shape = 'u8[2097152]{0}', space=vmem, size = 0x200000, scoped, tag = 'input window, operand 2']
    #allocation5 [shape = 's32[2]{0}', space=sflag, size = 0x8, scoped, tag = 'scoped memory for cuttlefish_forward.1']
    #allocation6 [shape = 'u8[32768]{0}', space=vmem, size = 0x8000, scoped, tag = 'input window, operand 3']
    #allocation7 [shape = 'u8[16384]{0}', space=vmem, size = 0x4000, scoped, tag = 'input window, operand 4']
    #allocation8 [shape = 's32[2]{0}', space=sflag, size = 0x8, scoped, tag = 'scoped memory for cuttlefish_forward.1']
    #allocation9 [shape = 'u8[4194304]{0}', space=vmem, size = 0x400000, scoped, tag = 'input window, operand 5']
    #allocation10 [shape = 'u8[4096]{0}', space=vmem, size = 0x1000, scoped, tag = 'input window, operand 6']
    #allocation11 [shape = 's32[2]{0}', space=sflag, size = 0x8, scoped, tag = 'scoped memory for cuttlefish_forward.1']
    #allocation12 [shape = 'u8[262144]{0}', space=vmem, size = 0x40000, scoped, tag = 'input window, operand 7']
    #allocation13 [shape = 'u8[1024]{0}', space=vmem, size = 0x400, scoped, tag = 'input window, operand 8']
    #allocation14 [shape = 's32[2]{0}', space=sflag, size = 0x8, scoped, tag = 'scoped memory for cuttlefish_forward.1']
    #allocation15 [shape = 'u8[1024]{0}', space=vmem, size = 0x400, scoped, tag = 'input window, operand 9']
    %16 = vsyncpa [#allocation3], 0
    %s17 = scalar_lea.sflag [#allocation3], 1
    %18 = vsyncpa %s17, 0
    %19 = vsyncpa [#allocation5], 0
    %s20 = scalar_lea.sflag [#allocation5], 1
    %21 = vsyncpa %s20, 0
    %22 = vsyncpa [#allocation8], 0
    %s23 = scalar_lea.sflag [#allocation8], 1
    %24 = vsyncpa %s23, 0
    %25 = vsyncpa [#allocation11], 0
    %s26 = scalar_lea.sflag [#allocation11], 1
    %27 = vsyncpa %s26, 0
    %28 = vsyncpa [#allocation14], 0
    %s29 = scalar_lea.sflag [#allocation14], 1
    %30 = vsyncpa %s29, 0
    loop: start=0, step=1, limit=6
    $region2: #{cuttlefish_forward.1} parent=1 // loop_pre_header
      _
    $region3: #{cuttlefish_forward.1} parent=1 // loop_header
      %s32 = sphi 0, %s36
      %p33 = scmp.ge.s32.totalorder %s32, 6
      %s39 = sphi 0, %s51
      %s40 = sphi 0, %s47
      %s41 = sphi 0, %s39
      %s42 = sphi 0, %s40
      %s43 = sphi 0, %s41
      %s44 = sphi 0, %s42
      %s56 = sphi 0, %s58
      %s59 = sphi 0, %s56
      %s60 = sphi 0, %s59
      %s76 = sphi 0, %s60
      %s84 = sphi 0, %s86
      %s87 = sphi 0, %s84
      %s88 = sphi 0, %s87
      %s104 = sphi 0, %s88
      %s110 = sphi 0, %s112
      %s113 = sphi 0, %s110
      %s114 = sphi 0, %s113
      %s130 = sphi 0, %s114
      %s136 = sphi 0, %s138
      %s139 = sphi 0, %s136
      %s140 = sphi 0, %s139
      %s156 = sphi 0, %s140
      %s162 = sphi 0, %s164
      %s165 = sphi 0, %s162
      %s166 = sphi 0, %s165
      %s182 = sphi 0, %s166
      %s188 = sphi 0, %s190
      %s191 = sphi 0, %s188
      %s192 = sphi 0, %s191
      %s208 = sphi 0, %s192
      %s214 = sphi 0, %s216
      %s217 = sphi 0, %s214
      %s218 = sphi 0, %s217
      %s234 = sphi 0, %s218
      %s240 = sphi 0, %s242
      %s243 = sphi 0, %s240
      %s244 = sphi 0, %s243
      %s260 = sphi 0, %s244
      %s266 = sphi 0, %s268
      %s269 = sphi 0, %s266
      %s270 = sphi 0, %s269
      %s286 = sphi 0, %s270
      %s292 = sphi 0, %s294
      %s295 = sphi 0, %s292
      %s296 = sphi 0, %s295
      %s312 = sphi 0, %s296
      %s318 = sphi 0, %s320
      %s321 = sphi 0, %s318
      %s322 = sphi 0, %s321
      %s338 = sphi 0, %s322
      %s346 = sphi 0, %s348
      %s349 = sphi 0, %s346
      %s350 = sphi 0, %s349
      %s366 = sphi 0, %s350
    $region4: #{cuttlefish_forward.1} parent=1 // loop_header_branch
      %35 = sbr.rel (%p33) target = $region8
    $region5: #{cuttlefish_forward.1} parent=1 // loop_body
      %s37 = ssub.s32 %s32, 1
      %s38 = ssub.s32 %s32, 2
      %s45 = sadd.s32 1, %s40
      %p46 = scmp.ge.s32.totalorder %s45, 1
      %s47 = scalar_select %p46, 0, %s45
      %s48 = sadd.s32 1, %s39
      %s49 = scalar_select %p46, %s48, %s39
      %p50 = scmp.ge.s32.totalorder %s49, 4
      %s51 = scalar_select %p50, 0, %s49
      %s52 = ssub.s32 %s39, %s51
      %s53 = ssub.s32 %s40, %s47
      %s54 = sor.u32 %s52, %s53
      %p55 = scmp.eq.s32.totalorder %s54, 0
      %s57 = sadd.s32 %s56, 1
      %s58 = scalar_select %p55, %s56, %s57
      %p61 = pneg %p55
      %p62 = scmp.eq.s32.totalorder %s32, 3
      %p63 = por %p61, %p62
      %p64 = scmp.ne.s32.totalorder %s56, %s59
      %p65 = scmp.eq.s32.totalorder %s32, 0
      %p66 = por %p64, %p65
      %p67 = scmp.ne.s32.totalorder %s56, %s59
      %p68 = scmp.eq.s32.totalorder %s37, 3
      %p69 = por %p67, %p68
      %p70 = scmp.ne.s32.totalorder %s59, %s60
      %p71 = scmp.eq.s32.totalorder %s37, 0
      %p72 = por %p70, %p71
      %p73 = scmp.ne.s32.totalorder %s59, %s60
      %p74 = scmp.eq.s32.totalorder %s38, 3
      %p75 = por %p73, %p74
      %p77 = scmp.ne.s32.totalorder %s60, %s76
      %p78 = scmp.eq.s32.totalorder %s38, 0
      %p79 = por %p77, %p78
      %s80 = ssub.s32 %s39, %s51
      %s81 = ssub.s32 %s40, %s47
      %s82 = sor.u32 %s80, %s81
      %p83 = scmp.eq.s32.totalorder %s82, 0
      %s85 = sadd.s32 %s84, 1
      %s86 = scalar_select %p83, %s84, %s85
      %p89 = pneg %p83
      %p90 = scmp.eq.s32.totalorder %s32, 3
      %p91 = por %p89, %p90
      %p92 = scmp.ne.s32.totalorder %s84, %s87
      %p93 = scmp.eq.s32.totalorder %s32, 0
      %p94 = por %p92, %p93
      %p95 = scmp.ne.s32.totalorder %s84, %s87
      %p96 = scmp.eq.s32.totalorder %s37, 3
      %p97 = por %p95, %p96
      %p98 = scmp.ne.s32.totalorder %s87, %s88
      %p99 = scmp.eq.s32.totalorder %s37, 0
      %p100 = por %p98, %p99
      %p101 = scmp.ne.s32.totalorder %s87, %s88
      %p102 = scmp.eq.s32.totalorder %s38, 3
      %p103 = por %p101, %p102
      %p105 = scmp.ne.s32.totalorder %s88, %s104
      %p106 = scmp.eq.s32.totalorder %s38, 0
      %p107 = por %p105, %p106
      %s108 = ssub.s32 %s39, %s51
      %p109 = scmp.eq.s32.totalorder %s108, 0
      %s111 = sadd.s32 %s110, 1
      %s112 = scalar_select %p109, %s110, %s111
      %p115 = pneg %p109
      %p116 = scmp.eq.s32.totalorder %s32, 3
      %p117 = por %p115, %p116
      %p118 = scmp.ne.s32.totalorder %s110, %s113
      %p119 = scmp.eq.s32.totalorder %s32, 0
      %p120 = por %p118, %p119
      %p121 = scmp.ne.s32.totalorder %s110, %s113
      %p122 = scmp.eq.s32.totalorder %s37, 3
      %p123 = por %p121, %p122
      %p124 = scmp.ne.s32.totalorder %s113, %s114
      %p125 = scmp.eq.s32.totalorder %s37, 0
      %p126 = por %p124, %p125
      %p127 = scmp.ne.s32.totalorder %s113, %s114
      %p128 = scmp.eq.s32.totalorder %s38, 3
      %p129 = por %p127, %p128
      %p131 = scmp.ne.s32.totalorder %s114, %s130
      %p132 = scmp.eq.s32.totalorder %s38, 0
      %p133 = por %p131, %p132
      %s134 = ssub.s32 %s39, %s51
      %p135 = scmp.eq.s32.totalorder %s134, 0
      %s137 = sadd.s32 %s136, 1
      %s138 = scalar_select %p135, %s136, %s137
      %p141 = pneg %p135
      %p142 = scmp.eq.s32.totalorder %s32, 3
      %p143 = por %p141, %p142
      %p144 = scmp.ne.s32.totalorder %s136, %s139
      %p145 = scmp.eq.s32.totalorder %s32, 0
      %p146 = por %p144, %p145
      %p147 = scmp.ne.s32.totalorder %s136, %s139
      %p148 = scmp.eq.s32.totalorder %s37, 3
      %p149 = por %p147, %p148
      %p150 = scmp.ne.s32.totalorder %s139, %s140
      %p151 = scmp.eq.s32.totalorder %s37, 0
      %p152 = por %p150, %p151
      %p153 = scmp.ne.s32.totalorder %s139, %s140
      %p154 = scmp.eq.s32.totalorder %s38, 3
      %p155 = por %p153, %p154
      %p157 = scmp.ne.s32.totalorder %s140, %s156
      %p158 = scmp.eq.s32.totalorder %s38, 0
      %p159 = por %p157, %p158
      %s160 = ssub.s32 %s39, %s51
      %p161 = scmp.eq.s32.totalorder %s160, 0
      %s163 = sadd.s32 %s162, 1
      %s164 = scalar_select %p161, %s162, %s163
      %p167 = pneg %p161
      %p168 = scmp.eq.s32.totalorder %s32, 3
      %p169 = por %p167, %p168
      %p170 = scmp.ne.s32.totalorder %s162, %s165
      %p171 = scmp.eq.s32.totalorder %s32, 0
      %p172 = por %p170, %p171
      %p173 = scmp.ne.s32.totalorder %s162, %s165
      %p174 = scmp.eq.s32.totalorder %s37, 3
      %p175 = por %p173, %p174
      %p176 = scmp.ne.s32.totalorder %s165, %s166
      %p177 = scmp.eq.s32.totalorder %s37, 0
      %p178 = por %p176, %p177
      %p179 = scmp.ne.s32.totalorder %s165, %s166
      %p180 = scmp.eq.s32.totalorder %s38, 3
      %p181 = por %p179, %p180
      %p183 = scmp.ne.s32.totalorder %s166, %s182
      %p184 = scmp.eq.s32.totalorder %s38, 0
      %p185 = por %p183, %p184
      %s186 = ssub.s32 %s39, %s51
      %p187 = scmp.eq.s32.totalorder %s186, 0
      %s189 = sadd.s32 %s188, 1
      %s190 = scalar_select %p187, %s188, %s189
      %p193 = pneg %p187
      %p194 = scmp.eq.s32.totalorder %s32, 3
      %p195 = por %p193, %p194
      %p196 = scmp.ne.s32.totalorder %s188, %s191
      %p197 = scmp.eq.s32.totalorder %s32, 0
      %p198 = por %p196, %p197
      %p199 = scmp.ne.s32.totalorder %s188, %s191
      %p200 = scmp.eq.s32.totalorder %s37, 3
      %p201 = por %p199, %p200
      %p202 = scmp.ne.s32.totalorder %s191, %s192
      %p203 = scmp.eq.s32.totalorder %s37, 0
      %p204 = por %p202, %p203
      %p205 = scmp.ne.s32.totalorder %s191, %s192
      %p206 = scmp.eq.s32.totalorder %s38, 3
      %p207 = por %p205, %p206
      %p209 = scmp.ne.s32.totalorder %s192, %s208
      %p210 = scmp.eq.s32.totalorder %s38, 0
      %p211 = por %p209, %p210
      %s212 = ssub.s32 %s39, %s51
      %p213 = scmp.eq.s32.totalorder %s212, 0
      %s215 = sadd.s32 %s214, 1
      %s216 = scalar_select %p213, %s214, %s215
      %p219 = pneg %p213
      %p220 = scmp.eq.s32.totalorder %s32, 3
      %p221 = por %p219, %p220
      %p222 = scmp.ne.s32.totalorder %s214, %s217
      %p223 = scmp.eq.s32.totalorder %s32, 0
      %p224 = por %p222, %p223
      %p225 = scmp.ne.s32.totalorder %s214, %s217
      %p226 = scmp.eq.s32.totalorder %s37, 3
      %p227 = por %p225, %p226
      %p228 = scmp.ne.s32.totalorder %s217, %s218
      %p229 = scmp.eq.s32.totalorder %s37, 0
      %p230 = por %p228, %p229
      %p231 = scmp.ne.s32.totalorder %s217, %s218
      %p232 = scmp.eq.s32.totalorder %s38, 3
      %p233 = por %p231, %p232
      %p235 = scmp.ne.s32.totalorder %s218, %s234
      %p236 = scmp.eq.s32.totalorder %s38, 0
      %p237 = por %p235, %p236
      %s238 = ssub.s32 %s39, %s51
      %p239 = scmp.eq.s32.totalorder %s238, 0
      %s241 = sadd.s32 %s240, 1
      %s242 = scalar_select %p239, %s240, %s241
      %p245 = pneg %p239
      %p246 = scmp.eq.s32.totalorder %s32, 3
      %p247 = por %p245, %p246
      %p248 = scmp.ne.s32.totalorder %s240, %s243
      %p249 = scmp.eq.s32.totalorder %s32, 0
      %p250 = por %p248, %p249
      %p251 = scmp.ne.s32.totalorder %s240, %s243
      %p252 = scmp.eq.s32.totalorder %s37, 3
      %p253 = por %p251, %p252
      %p254 = scmp.ne.s32.totalorder %s243, %s244
      %p255 = scmp.eq.s32.totalorder %s37, 0
      %p256 = por %p254, %p255
      %p257 = scmp.ne.s32.totalorder %s243, %s244
      %p258 = scmp.eq.s32.totalorder %s38, 3
      %p259 = por %p257, %p258
      %p261 = scmp.ne.s32.totalorder %s244, %s260
      %p262 = scmp.eq.s32.totalorder %s38, 0
      %p263 = por %p261, %p262
      %s264 = ssub.s32 %s39, %s51
      %p265 = scmp.eq.s32.totalorder %s264, 0
      %s267 = sadd.s32 %s266, 1
      %s268 = scalar_select %p265, %s266, %s267
      %p271 = pneg %p265
      %p272 = scmp.eq.s32.totalorder %s32, 3
      %p273 = por %p271, %p272
      %p274 = scmp.ne.s32.totalorder %s266, %s269
      %p275 = scmp.eq.s32.totalorder %s32, 0
      %p276 = por %p274, %p275
      %p277 = scmp.ne.s32.totalorder %s266, %s269
      %p278 = scmp.eq.s32.totalorder %s37, 3
      %p279 = por %p277, %p278
      %p280 = scmp.ne.s32.totalorder %s269, %s270
      %p281 = scmp.eq.s32.totalorder %s37, 0
      %p282 = por %p280, %p281
      %p283 = scmp.ne.s32.totalorder %s269, %s270
      %p284 = scmp.eq.s32.totalorder %s38, 3
      %p285 = por %p283, %p284
      %p287 = scmp.ne.s32.totalorder %s270, %s286
      %p288 = scmp.eq.s32.totalorder %s38, 0
      %p289 = por %p287, %p288
      %s290 = ssub.s32 %s39, %s51
      %p291 = scmp.eq.s32.totalorder %s290, 0
      %s293 = sadd.s32 %s292, 1
      %s294 = scalar_select %p291, %s292, %s293
      %p297 = pneg %p291
      %p298 = scmp.eq.s32.totalorder %s32, 3
      %p299 = por %p297, %p298
      %p300 = scmp.ne.s32.totalorder %s292, %s295
      %p301 = scmp.eq.s32.totalorder %s32, 0
      %p302 = por %p300, %p301
      %p303 = scmp.ne.s32.totalorder %s292, %s295
      %p304 = scmp.eq.s32.totalorder %s37, 3
      %p305 = por %p303, %p304
      %p306 = scmp.ne.s32.totalorder %s295, %s296
      %p307 = scmp.eq.s32.totalorder %s37, 0
      %p308 = por %p306, %p307
      %p309 = scmp.ne.s32.totalorder %s295, %s296
      %p310 = scmp.eq.s32.totalorder %s38, 3
      %p311 = por %p309, %p310
      %p313 = scmp.ne.s32.totalorder %s296, %s312
      %p314 = scmp.eq.s32.totalorder %s38, 0
      %p315 = por %p313, %p314
      %s316 = ssub.s32 %s39, %s51
      %p317 = scmp.eq.s32.totalorder %s316, 0
      %s319 = sadd.s32 %s318, 1
      %s320 = scalar_select %p317, %s318, %s319
      %p323 = pneg %p317
      %p324 = scmp.eq.s32.totalorder %s32, 3
      %p325 = por %p323, %p324
      %p326 = scmp.ne.s32.totalorder %s318, %s321
      %p327 = scmp.eq.s32.totalorder %s32, 0
      %p328 = por %p326, %p327
      %p329 = scmp.ne.s32.totalorder %s318, %s321
      %p330 = scmp.eq.s32.totalorder %s37, 3
      %p331 = por %p329, %p330
      %p332 = scmp.ne.s32.totalorder %s321, %s322
      %p333 = scmp.eq.s32.totalorder %s37, 0
      %p334 = por %p332, %p333
      %p335 = scmp.ne.s32.totalorder %s321, %s322
      %p336 = scmp.eq.s32.totalorder %s38, 3
      %p337 = por %p335, %p336
      %p339 = scmp.ne.s32.totalorder %s322, %s338
      %p340 = scmp.eq.s32.totalorder %s38, 0
      %p341 = por %p339, %p340
      %s342 = ssub.s32 %s39, %s51
      %s343 = ssub.s32 %s40, %s47
      %s344 = sor.u32 %s342, %s343
      %p345 = scmp.eq.s32.totalorder %s344, 0
      %s347 = sadd.s32 %s346, 1
      %s348 = scalar_select %p345, %s346, %s347
      %p351 = pneg %p345
      %p352 = scmp.eq.s32.totalorder %s32, 3
      %p353 = por %p351, %p352
      %p354 = scmp.ne.s32.totalorder %s346, %s349
      %p355 = scmp.eq.s32.totalorder %s32, 0
      %p356 = por %p354, %p355
      %p357 = scmp.ne.s32.totalorder %s346, %s349
      %p358 = scmp.eq.s32.totalorder %s37, 3
      %p359 = por %p357, %p358
      %p360 = scmp.ne.s32.totalorder %s349, %s350
      %p361 = scmp.eq.s32.totalorder %s37, 0
      %p362 = por %p360, %p361
      %p363 = scmp.ne.s32.totalorder %s349, %s350
      %p364 = scmp.eq.s32.totalorder %s38, 3
      %p365 = por %p363, %p364
      %p367 = scmp.ne.s32.totalorder %s350, %s366
      %p368 = scmp.eq.s32.totalorder %s38, 0
      %p369 = por %p367, %p368
      %p370 = scmp.le.s32.totalorder 1, %s32
      %p371 = scmp.lt.s32.totalorder %s32, 5
      %p372 = pnand %p370, %p371
      %p373 = pneg %p372
      // Predicated region
      $region9: #{cuttlefish_forward.1} parent=5 // pred_check
        _
      $region10: #{cuttlefish_forward.1} parent=5 // pred_check_branch
        %375 = sbr.rel (%p372) target = $region12
      $region11: #{cuttlefish_forward.1} parent=5 // pred_region
        %s376 = ssub.s32 %s32, 1
      $region12: #{cuttlefish_forward.1} parent=5 // pred_fallthru
        _
      %p377 = scmp.lt.s32.totalorder %s32, 4
      // Predicated region
      $region13: #{cuttlefish_forward.1} parent=5 // pred_check
        %p378 = pneg %p377
      $region14: #{cuttlefish_forward.1} parent=5 // pred_check_branch
        %380 = sbr.rel (%p378) target = $region16
      $region15: #{cuttlefish_forward.1} parent=5 // pred_region
        // Predicated region
        $region17: #{cuttlefish_forward.1} parent=15 // pred_check
          %p381 = pneg %p66
        $region18: #{cuttlefish_forward.1} parent=15 // pred_check_branch
          %383 = sbr.rel (%p381) target = $region20
        $region19: #{cuttlefish_forward.1} parent=15 // pred_region
          %s384 = sand.u32 %s56, 1
          %s385 = scalar_lea.sflag [#allocation3], %s384
          %s386 = sand.u32 %s56, 1
          %s387 = smul.addr %s386, 8
          %s388 = scalar_lea.vmem [#allocation2], %s387
          %s390 = ssub.s32 128, 128
          %391 = vsyncadd %s385, %s390
          %s392 = smul.addr %s40, 2
          %s393 = smul.addr %s39, 2
          %s394 = sadd.s32 %s392, %s393
          %s395 = smul.addr %s394, 64
          %s396 = scalar_lea.hbm %s0, %s395
          %s398 = sshll.u32 %s388, 4
          %s399 = int_to_ptr.vmem [resolvable:$true] %s398
          %401 = dma.hbm_to_vmem [thread:$0]  %s396, 128, %s399, %s385
        $region20: #{cuttlefish_forward.1} parent=15 // pred_fallthru
          _
        // Predicated region
        $region21: #{cuttlefish_forward.1} parent=15 // pred_check
          %p402 = pneg %p94
        $region22: #{cuttlefish_forward.1} parent=15 // pred_check_branch
          %404 = sbr.rel (%p402) target = $region24
        $region23: #{cuttlefish_forward.1} parent=15 // pred_region
          %p405 = scmp.lt.s32.totalorder %s39, 3
          %s406 = scalar_select %p405, %s39, 3
          %p407 = scmp.lt.s32.totalorder %s40, 0
          %s408 = scalar_select %p407, %s40, 0
          %s409 = sadd.s32 %s408, %s406
          %s410 = smul.addr %s409, 8
          %s411 = scalar_lea.vmem %s1, %s410
        $region24: #{cuttlefish_forward.1} parent=15 // pred_fallthru
          _
        // Predicated region
        $region25: #{cuttlefish_forward.1} parent=15 // pred_check
          %p412 = pneg %p120
        $region26: #{cuttlefish_forward.1} parent=15 // pred_check_branch
          %414 = sbr.rel (%p412) target = $region28
        $region27: #{cuttlefish_forward.1} parent=15 // pred_region
          %s415 = sand.u32 %s32, 1
          %s416 = scalar_lea.sflag [#allocation5], %s415
          %s417 = sand.u32 %s110, 1
          %s418 = smul.addr %s417, 2048
          %s419 = scalar_lea.vmem [#allocation4], %s418
          %s421 = ssub.s32 32768, 32768
          %422 = vsyncadd %s416, %s421
          %s423 = smul.addr %s39, 512
          %s424 = smul.addr %s423, 64
          %s425 = scalar_lea.hbm %s2, %s424
          %s426 = sshll.u32 %s419, 4
          %s427 = int_to_ptr.vmem [resolvable:$true] %s426
          %432 = dma.hbm_to_vmem [thread:$0]  %s425, 32768, %s427, %s416, 1024, 1024, 64
        $region28: #{cuttlefish_forward.1} parent=15 // pred_fallthru
          _
        // Predicated region
        $region29: #{cuttlefish_forward.1} parent=15 // pred_check
          %p433 = pneg %p146
        $region30: #{cuttlefish_forward.1} parent=15 // pred_check_branch
          %435 = sbr.rel (%p433) target = $region32
        $region31: #{cuttlefish_forward.1} parent=15 // pred_region
          %s436 = sand.u32 %s32, 1
          %s437 = scalar_lea.sflag [#allocation5], %s436
          %s438 = sand.u32 %s136, 1
          %s439 = smul.addr %s438, 32
          %s440 = scalar_lea.vmem [#allocation6], %s439
          %s442 = ssub.s32 512, 512
          %443 = vsyncadd %s437, %s442
          %s444 = smul.addr %s39, 16
          %s445 = smul.addr %s444, 32
          %s446 = scalar_lea.hbm %s3, %s445
          %s448 = sshll.u32 %s440, 4
          %s449 = int_to_ptr.vmem [resolvable:$true] %s448
          %451 = dma.hbm_to_vmem [thread:$0]  %s446, 512, %s449, %s437
        $region32: #{cuttlefish_forward.1} parent=15 // pred_fallthru
          _
        // Predicated region
        $region33: #{cuttlefish_forward.1} parent=15 // pred_check
          %p452 = pneg %p172
        $region34: #{cuttlefish_forward.1} parent=15 // pred_check_branch
          %454 = sbr.rel (%p452) target = $region36
        $region35: #{cuttlefish_forward.1} parent=15 // pred_region
          %s455 = sand.u32 %s32, 1
          %s456 = scalar_lea.sflag [#allocation8], %s455
          %s457 = sand.u32 %s162, 1
          %s458 = smul.addr %s457, 16
          %s459 = scalar_lea.vmem [#allocation7], %s458
          %s461 = ssub.s32 256, 256
          %462 = vsyncadd %s456, %s461
          %s463 = smul.addr %s39, 16
          %s464 = smul.addr %s463, 16
          %s465 = scalar_lea.hbm %s4, %s464
          %s467 = sshll.u32 %s459, 4
          %s468 = int_to_ptr.vmem [resolvable:$true] %s467
          %470 = dma.hbm_to_vmem [thread:$0]  %s465, 256, %s468, %s456
        $region36: #{cuttlefish_forward.1} parent=15 // pred_fallthru
          _
        // Predicated region
        $region37: #{cuttlefish_forward.1} parent=15 // pred_check
          %p471 = pneg %p198
        $region38: #{cuttlefish_forward.1} parent=15 // pred_check_branch
          %473 = sbr.rel (%p471) target = $region40
        $region39: #{cuttlefish_forward.1} parent=15 // pred_region
          %s474 = sand.u32 %s32, 1
          %s475 = scalar_lea.sflag [#allocation8], %s474
          %s476 = sand.u32 %s188, 1
          %s477 = smul.addr %s476, 4096
          %s478 = scalar_lea.vmem [#allocation9], %s477
          %s480 = ssub.s32 65536, 65536
          %481 = vsyncadd %s475, %s480
          %s482 = smul.addr %s39, 1024
          %s483 = smul.addr %s482, 64
          %s484 = scalar_lea.hbm %s5, %s483
          %s485 = sshll.u32 %s478, 4
          %s486 = int_to_ptr.vmem [resolvable:$true] %s485
          %491 = dma.hbm_to_vmem [thread:$0]  %s484, 65536, %s486, %s475, 256, 256, 16
        $region40: #{cuttlefish_forward.1} parent=15 // pred_fallthru
          _
        // Predicated region
        $region41: #{cuttlefish_forward.1} parent=15 // pred_check
          %p492 = pneg %p224
        $region42: #{cuttlefish_forward.1} parent=15 // pred_check_branch
          %494 = sbr.rel (%p492) target = $region44
        $region43: #{cuttlefish_forward.1} parent=15 // pred_region
          %s495 = sand.u32 %s32, 1
          %s496 = scalar_lea.sflag [#allocation11], %s495
          %s497 = sand.u32 %s214, 1
          %s498 = smul.addr %s497, 4
          %s499 = scalar_lea.vmem [#allocation10], %s498
          %s501 = ssub.s32 64, 64
          %502 = vsyncadd %s496, %s501
          %s503 = smul.addr %s39, 4
          %s504 = smul.addr %s503, 16
          %s505 = scalar_lea.hbm %s6, %s504
          %s507 = sshll.u32 %s499, 4
          %s508 = int_to_ptr.vmem [resolvable:$true] %s507
          %510 = dma.hbm_to_vmem [thread:$0]  %s505, 64, %s508, %s496
        $region44: #{cuttlefish_forward.1} parent=15 // pred_fallthru
          _
        // Predicated region
        $region45: #{cuttlefish_forward.1} parent=15 // pred_check
          %p511 = pneg %p250
        $region46: #{cuttlefish_forward.1} parent=15 // pred_check_branch
          %513 = sbr.rel (%p511) target = $region48
        $region47: #{cuttlefish_forward.1} parent=15 // pred_region
          %s514 = sand.u32 %s32, 1
          %s515 = scalar_lea.sflag [#allocation11], %s514
          %s516 = sand.u32 %s240, 1
          %s517 = smul.addr %s516, 256
          %s518 = scalar_lea.vmem [#allocation12], %s517
          %s520 = ssub.s32 4096, 4096
          %521 = vsyncadd %s515, %s520
          %s522 = smul.addr %s39, 64
          %s523 = smul.addr %s522, 64
          %s524 = scalar_lea.hbm %s7, %s523
          %s525 = sshll.u32 %s518, 4
          %s526 = int_to_ptr.vmem [resolvable:$true] %s525
          %531 = dma.hbm_to_vmem [thread:$0]  %s524, 4096, %s526, %s515, 64, 64, 4
        $region48: #{cuttlefish_forward.1} parent=15 // pred_fallthru
          _
        // Predicated region
        $region49: #{cuttlefish_forward.1} parent=15 // pred_check
          %p532 = pneg %p276
        $region50: #{cuttlefish_forward.1} parent=15 // pred_check_branch
          %534 = sbr.rel (%p532) target = $region52
        $region51: #{cuttlefish_forward.1} parent=15 // pred_region
          %s535 = sand.u32 %s32, 1
          %s536 = scalar_lea.sflag [#allocation14], %s535
          %s537 = sand.u32 %s266, 1
          %s538 = scalar_lea.vmem [#allocation13], %s537
          %s540 = ssub.s32 16, 16
          %541 = vsyncadd %s536, %s540
          %s542 = smul.addr %s39, 16
          %s543 = scalar_lea.hbm %s8, %s542
          %s545 = sshll.u32 %s538, 4
          %s546 = int_to_ptr.vmem [resolvable:$true] %s545
          %548 = dma.hbm_to_vmem [thread:$0]  %s543, 16, %s546, %s536
        $region52: #{cuttlefish_forward.1} parent=15 // pred_fallthru
          _
        // Predicated region
        $region53: #{cuttlefish_forward.1} parent=15 // pred_check
          %p549 = pneg %p302
        $region54: #{cuttlefish_forward.1} parent=15 // pred_check_branch
          %551 = sbr.rel (%p549) target = $region56
        $region55: #{cuttlefish_forward.1} parent=15 // pred_region
          %s552 = sand.u32 %s32, 1
          %s553 = scalar_lea.sflag [#allocation14], %s552
          %s554 = sand.u32 %s292, 1
          %s555 = scalar_lea.vmem [#allocation15], %s554
          %s557 = ssub.s32 16, 16
          %558 = vsyncadd %s553, %s557
          %s559 = smul.addr %s39, 16
          %s560 = scalar_lea.hbm %s9, %s559
          %s562 = sshll.u32 %s555, 4
          %s563 = int_to_ptr.vmem [resolvable:$true] %s562
          %565 = dma.hbm_to_vmem [thread:$0]  %s560, 16, %s563, %s553
        $region56: #{cuttlefish_forward.1} parent=15 // pred_fallthru
          _
        // Predicated region
        $region57: #{cuttlefish_forward.1} parent=15 // pred_check
          %p566 = pneg %p328
        $region58: #{cuttlefish_forward.1} parent=15 // pred_check_branch
          %568 = sbr.rel (%p566) target = $region60
        $region59: #{cuttlefish_forward.1} parent=15 // pred_region
          %p569 = scmp.lt.s32.totalorder %s39, 3
          %s570 = scalar_select %p569, %s39, 3
          %s571 = scalar_lea.vmem %s10, %s570
        $region60: #{cuttlefish_forward.1} parent=15 // pred_fallthru
          _
      $region16: #{cuttlefish_forward.1} parent=5 // pred_fallthru
        _
      %p572 = scmp.le.s32.totalorder 1, %s32
      %p573 = scmp.lt.s32.totalorder %s32, 5
      %p574 = pnand %p572, %p573
      %p575 = pneg %p574
      // Predicated region
      $region61: #{cuttlefish_forward.1} parent=5 // pred_check
        _
      $region62: #{cuttlefish_forward.1} parent=5 // pred_check_branch
        %577 = sbr.rel (%p574) target = $region64
      $region63: #{cuttlefish_forward.1} parent=5 // pred_region
        %s578 = ssub.s32 %s32, 1
        %s579 = sand.u32 %s59, 1
        %s580 = scalar_lea.sflag [#allocation3], %s579
        %s581 = sand.u32 %s59, 1
        %s582 = smul.addr %s581, 8
        %s583 = scalar_lea.vmem [#allocation2], %s582
        // Predicated region
        $region65: #{cuttlefish_forward.1} parent=63 // pred_check
          %p584 = pneg %p72
        $region66: #{cuttlefish_forward.1} parent=63 // pred_check_branch
          %586 = sbr.rel (%p584) target = $region68
        $region67: #{cuttlefish_forward.1} parent=63 // pred_region
          %587 = dma.done %s580, 128
        $region68: #{cuttlefish_forward.1} parent=63 // pred_fallthru
          _
        %s588 = sand.u32 %s37, 1
        %s589 = scalar_lea.sflag [#allocation5], %s588
        %s590 = sand.u32 %s113, 1
        %s591 = smul.addr %s590, 2048
        %s592 = scalar_lea.vmem [#allocation4], %s591
        // Predicated region
        $region69: #{cuttlefish_forward.1} parent=63 // pred_check
          %p593 = pneg %p126
        $region70: #{cuttlefish_forward.1} parent=63 // pred_check_branch
          %595 = sbr.rel (%p593) target = $region72
        $region71: #{cuttlefish_forward.1} parent=63 // pred_region
          %596 = dma.done %s589, 32768
        $region72: #{cuttlefish_forward.1} parent=63 // pred_fallthru
          _
        %s597 = sand.u32 %s37, 1
        %s598 = scalar_lea.sflag [#allocation5], %s597
        %s599 = sand.u32 %s139, 1
        %s600 = smul.addr %s599, 32
        %s601 = scalar_lea.vmem [#allocation6], %s600
        // Predicated region
        $region73: #{cuttlefish_forward.1} parent=63 // pred_check
          %p602 = pneg %p152
        $region74: #{cuttlefish_forward.1} parent=63 // pred_check_branch
          %604 = sbr.rel (%p602) target = $region76
        $region75: #{cuttlefish_forward.1} parent=63 // pred_region
          %605 = dma.done %s598, 512
        $region76: #{cuttlefish_forward.1} parent=63 // pred_fallthru
          _
        %s606 = sand.u32 %s37, 1
        %s607 = scalar_lea.sflag [#allocation8], %s606
        %s608 = sand.u32 %s165, 1
        %s609 = smul.addr %s608, 16
        %s610 = scalar_lea.vmem [#allocation7], %s609
        // Predicated region
        $region77: #{cuttlefish_forward.1} parent=63 // pred_check
          %p611 = pneg %p178
        $region78: #{cuttlefish_forward.1} parent=63 // pred_check_branch
          %613 = sbr.rel (%p611) target = $region80
        $region79: #{cuttlefish_forward.1} parent=63 // pred_region
          %614 = dma.done %s607, 256
        $region80: #{cuttlefish_forward.1} parent=63 // pred_fallthru
          _
        %s615 = sand.u32 %s37, 1
        %s616 = scalar_lea.sflag [#allocation8], %s615
        %s617 = sand.u32 %s191, 1
        %s618 = smul.addr %s617, 4096
        %s619 = scalar_lea.vmem [#allocation9], %s618
        // Predicated region
        $region81: #{cuttlefish_forward.1} parent=63 // pred_check
          %p620 = pneg %p204
        $region82: #{cuttlefish_forward.1} parent=63 // pred_check_branch
          %622 = sbr.rel (%p620) target = $region84
        $region83: #{cuttlefish_forward.1} parent=63 // pred_region
          %623 = dma.done %s616, 65536
        $region84: #{cuttlefish_forward.1} parent=63 // pred_fallthru
          _
        %s624 = sand.u32 %s37, 1
        %s625 = scalar_lea.sflag [#allocation11], %s624
        %s626 = sand.u32 %s217, 1
        %s627 = smul.addr %s626, 4
        %s628 = scalar_lea.vmem [#allocation10], %s627
        // Predicated region
        $region85: #{cuttlefish_forward.1} parent=63 // pred_check
          %p629 = pneg %p230
        $region86: #{cuttlefish_forward.1} parent=63 // pred_check_branch
          %631 = sbr.rel (%p629) target = $region88
        $region87: #{cuttlefish_forward.1} parent=63 // pred_region
          %632 = dma.done %s625, 64
        $region88: #{cuttlefish_forward.1} parent=63 // pred_fallthru
          _
        %s633 = sand.u32 %s37, 1
        %s634 = scalar_lea.sflag [#allocation11], %s633
        %s635 = sand.u32 %s243, 1
        %s636 = smul.addr %s635, 256
        %s637 = scalar_lea.vmem [#allocation12], %s636
        // Predicated region
        $region89: #{cuttlefish_forward.1} parent=63 // pred_check
          %p638 = pneg %p256
        $region90: #{cuttlefish_forward.1} parent=63 // pred_check_branch
          %640 = sbr.rel (%p638) target = $region92
        $region91: #{cuttlefish_forward.1} parent=63 // pred_region
          %641 = dma.done %s634, 4096
        $region92: #{cuttlefish_forward.1} parent=63 // pred_fallthru
          _
        %s642 = sand.u32 %s37, 1
        %s643 = scalar_lea.sflag [#allocation14], %s642
        %s644 = sand.u32 %s269, 1
        %s645 = scalar_lea.vmem [#allocation13], %s644
        // Predicated region
        $region93: #{cuttlefish_forward.1} parent=63 // pred_check
          %p646 = pneg %p282
        $region94: #{cuttlefish_forward.1} parent=63 // pred_check_branch
          %648 = sbr.rel (%p646) target = $region96
        $region95: #{cuttlefish_forward.1} parent=63 // pred_region
          %649 = dma.done %s643, 16
        $region96: #{cuttlefish_forward.1} parent=63 // pred_fallthru
          _
        %s650 = sand.u32 %s37, 1
        %s651 = scalar_lea.sflag [#allocation14], %s650
        %s652 = sand.u32 %s295, 1
        %s653 = scalar_lea.vmem [#allocation15], %s652
        // Predicated region
        $region97: #{cuttlefish_forward.1} parent=63 // pred_check
          %p654 = pneg %p308
        $region98: #{cuttlefish_forward.1} parent=63 // pred_check_branch
          %656 = sbr.rel (%p654) target = $region100
        $region99: #{cuttlefish_forward.1} parent=63 // pred_region
          %657 = dma.done %s651, 16
        $region100: #{cuttlefish_forward.1} parent=63 // pred_fallthru
          _
        %s658 = sand.u32 %s59, 1
        %s659 = scalar_lea.sflag [#allocation3], %s658
        %s660 = sand.u32 %s59, 1
        %s661 = smul.addr %s660, 8
        %s662 = scalar_lea.vmem [#allocation2], %s661
        %p663 = pneg %p72
        %p664 = pneg %p69
        %p665 = scmp.lt.s32.totalorder %s41, 3
        %s666 = scalar_select %p665, %s41, 3
        %p667 = scmp.lt.s32.totalorder %s42, 0
        %s668 = scalar_select %p667, %s42, 0
        %s669 = sadd.s32 %s668, %s666
        %s670 = smul.addr %s669, 8
        %s671 = scalar_lea.vmem %s1, %s670
        %p672 = pneg %p100
        %p673 = pneg %p97
        %s674 = sand.u32 %s37, 1
        %s675 = scalar_lea.sflag [#allocation5], %s674
        %s676 = sand.u32 %s113, 1
        %s677 = smul.addr %s676, 2048
        %s678 = scalar_lea.vmem [#allocation4], %s677
        %p679 = pneg %p126
        %p680 = pneg %p123
        %s681 = sand.u32 %s37, 1
        %s682 = scalar_lea.sflag [#allocation5], %s681
        %s683 = sand.u32 %s139, 1
        %s684 = smul.addr %s683, 32
        %s685 = scalar_lea.vmem [#allocation6], %s684
        %p686 = pneg %p152
        %p687 = pneg %p149
        %s688 = sand.u32 %s37, 1
        %s689 = scalar_lea.sflag [#allocation8], %s688
        %s690 = sand.u32 %s165, 1
        %s691 = smul.addr %s690, 16
        %s692 = scalar_lea.vmem [#allocation7], %s691
        %p693 = pneg %p178
        %p694 = pneg %p175
        %s695 = sand.u32 %s37, 1
        %s696 = scalar_lea.sflag [#allocation8], %s695
        %s697 = sand.u32 %s191, 1
        %s698 = smul.addr %s697, 4096
        %s699 = scalar_lea.vmem [#allocation9], %s698
        %p700 = pneg %p204
        %p701 = pneg %p201
        %s702 = sand.u32 %s37, 1
        %s703 = scalar_lea.sflag [#allocation11], %s702
        %s704 = sand.u32 %s217, 1
        %s705 = smul.addr %s704, 4
        %s706 = scalar_lea.vmem [#allocation10], %s705
        %p707 = pneg %p230
        %p708 = pneg %p227
        %s709 = sand.u32 %s37, 1
        %s710 = scalar_lea.sflag [#allocation11], %s709
        %s711 = sand.u32 %s243, 1
        %s712 = smul.addr %s711, 256
        %s713 = scalar_lea.vmem [#allocation12], %s712
        %p714 = pneg %p256
        %p715 = pneg %p253
        %s716 = sand.u32 %s37, 1
        %s717 = scalar_lea.sflag [#allocation14], %s716
        %s718 = sand.u32 %s269, 1
        %s719 = scalar_lea.vmem [#allocation13], %s718
        %p720 = pneg %p282
        %p721 = pneg %p279
        %s722 = sand.u32 %s37, 1
        %s723 = scalar_lea.sflag [#allocation14], %s722
        %s724 = sand.u32 %s295, 1
        %s725 = scalar_lea.vmem [#allocation15], %s724
        %p726 = pneg %p308
        %p727 = pneg %p305
        %p728 = scmp.lt.s32.totalorder %s41, 3
        %s729 = scalar_select %p728, %s41, 3
        %s730 = scalar_lea.vmem %s10, %s729
        %p731 = pneg %p334
        %p732 = pneg %p331
        %p733 = pneg %p362
        %p734 = pneg %p359
        %p735 = scmp.lt.s32.totalorder %s41, 3
        %s736 = scalar_select %p735, %s41, 3
        %p737 = scmp.lt.s32.totalorder %s42, 0
        %s738 = scalar_select %p737, %s42, 0
        %s739 = sadd.s32 %s738, %s736
        %s740 = smul.addr %s739, 8
        %s741 = scalar_lea.vmem %s11, %s740
        %p742 = scmp.lt.s32.totalorder %s41, 3
        %s743 = scalar_select %p742, %s41, 3
        %p744 = scmp.lt.s32.totalorder %s42, 0
        %s745 = scalar_select %p744, %s42, 0
        %s746 = sadd.s32 %s745, %s743
        %s747 = smul.addr %s746, 8
        %s748 = scalar_lea.vmem %s1, %s747
        %p749 = scmp.lt.s32.totalorder %s41, 3
        %s750 = scalar_select %p749, %s41, 3
        %s751 = scalar_lea.vmem %s10, %s750
        %p752 = scmp.lt.s32.totalorder %s41, 3
        %s753 = scalar_select %p752, %s41, 3
        %p754 = scmp.lt.s32.totalorder %s42, 0
        %s755 = scalar_select %p754, %s42, 0
        %s756 = sadd.s32 %s755, %s753
        %s757 = smul.addr %s756, 8
        %s758 = scalar_lea.vmem %s11, %s757
        %v760 = vld [vmem:[%s583] sm:$0xff]
        %v761 = vld [vmem:[%s748] sm:$0xff]
        %v762 = vld [vmem:[%s592] sm:$0xff]
        %v763 = vld [vmem:[%s592 + $0x8] sm:$0xff]
        %v764 = vld [vmem:[%s592 + $0x10] sm:$0xff]
        %v765 = vld [vmem:[%s592 + $0x18] sm:$0xff]
        %v766 = vld [vmem:[%s592 + $0x20] sm:$0xff]
        %v767 = vld [vmem:[%s592 + $0x28] sm:$0xff]
        %v768 = vld [vmem:[%s592 + $0x30] sm:$0xff]
        %v769 = vld [vmem:[%s592 + $0x38] sm:$0xff]
        %v770 = vld [vmem:[%s592 + $0x40] sm:$0xff]
        %v771 = vld [vmem:[%s592 + $0x48] sm:$0xff]
        %v772 = vld [vmem:[%s592 + $0x50] sm:$0xff]
        %v773 = vld [vmem:[%s592 + $0x58] sm:$0xff]
        %v774 = vld [vmem:[%s592 + $0x60] sm:$0xff]
        %v775 = vld [vmem:[%s592 + $0x68] sm:$0xff]
        %v776 = vld [vmem:[%s592 + $0x70] sm:$0xff]
        %v777 = vld [vmem:[%s592 + $0x78] sm:$0xff]
        %v778 = vld [vmem:[%s592 + $0x80] sm:$0xff]
        %v779 = vld [vmem:[%s592 + $0x88] sm:$0xff]
        %v780 = vld [vmem:[%s592 + $0x90] sm:$0xff]
        %v781 = vld [vmem:[%s592 + $0x98] sm:$0xff]
        %v782 = vld [vmem:[%s592 + $0xa0] sm:$0xff]
        %v783 = vld [vmem:[%s592 + $0xa8] sm:$0xff]
        %v784 = vld [vmem:[%s592 + $0xb0] sm:$0xff]
        %v785 = vld [vmem:[%s592 + $0xb8] sm:$0xff]
        %v786 = vld [vmem:[%s592 + $0xc0] sm:$0xff]
        %v787 = vld [vmem:[%s592 + $0xc8] sm:$0xff]
        %v788 = vld [vmem:[%s592 + $0xd0] sm:$0xff]
        %v789 = vld [vmem:[%s592 + $0xd8] sm:$0xff]
        %v790 = vld [vmem:[%s592 + $0xe0] sm:$0xff]
        %v791 = vld [vmem:[%s592 + $0xe8] sm:$0xff]
        %v792 = vld [vmem:[%s592 + $0xf0] sm:$0xff]
        %v793 = vld [vmem:[%s592 + $0xf8] sm:$0xff]
        %v794 = vld [vmem:[%s592 + $0x100] sm:$0xff]
        %v795 = vld [vmem:[%s592 + $0x108] sm:$0xff]
        %v796 = vld [vmem:[%s592 + $0x110] sm:$0xff]
        %v797 = vld [vmem:[%s592 + $0x118] sm:$0xff]
        %v798 = vld [vmem:[%s592 + $0x120] sm:$0xff]
        %v799 = vld [vmem:[%s592 + $0x128] sm:$0xff]
        %v800 = vld [vmem:[%s592 + $0x130] sm:$0xff]
        %v801 = vld [vmem:[%s592 + $0x138] sm:$0xff]
        %v802 = vld [vmem:[%s592 + $0x140] sm:$0xff]
        %v803 = vld [vmem:[%s592 + $0x148] sm:$0xff]
        %v804 = vld [vmem:[%s592 + $0x150] sm:$0xff]
        %v805 = vld [vmem:[%s592 + $0x158] sm:$0xff]
        %v806 = vld [vmem:[%s592 + $0x160] sm:$0xff]
        %v807 = vld [vmem:[%s592 + $0x168] sm:$0xff]
        %v808 = vld [vmem:[%s592 + $0x170] sm:$0xff]
        %v809 = vld [vmem:[%s592 + $0x178] sm:$0xff]
        %v810 = vld [vmem:[%s592 + $0x180] sm:$0xff]
        %v811 = vld [vmem:[%s592 + $0x188] sm:$0xff]
        %v812 = vld [vmem:[%s592 + $0x190] sm:$0xff]
        %v813 = vld [vmem:[%s592 + $0x198] sm:$0xff]
        %v814 = vld [vmem:[%s592 + $0x1a0] sm:$0xff]
        %v815 = vld [vmem:[%s592 + $0x1a8] sm:$0xff]
        %v816 = vld [vmem:[%s592 + $0x1b0] sm:$0xff]
        %v817 = vld [vmem:[%s592 + $0x1b8] sm:$0xff]
        %v818 = vld [vmem:[%s592 + $0x1c0] sm:$0xff]
        %v819 = vld [vmem:[%s592 + $0x1c8] sm:$0xff]
        %v820 = vld [vmem:[%s592 + $0x1d0] sm:$0xff]
        %v821 = vld [vmem:[%s592 + $0x1d8] sm:$0xff]
        %v822 = vld [vmem:[%s592 + $0x1e0] sm:$0xff]
        %v823 = vld [vmem:[%s592 + $0x1e8] sm:$0xff]
        %v824 = vld [vmem:[%s592 + $0x1f0] sm:$0xff]
        %v825 = vld [vmem:[%s592 + $0x1f8] sm:$0xff]
        %v826 = vld [vmem:[%s592 + $0x200] sm:$0xff]
        %v827 = vld [vmem:[%s592 + $0x208] sm:$0xff]
        %v828 = vld [vmem:[%s592 + $0x210] sm:$0xff]
        %v829 = vld [vmem:[%s592 + $0x218] sm:$0xff]
        %v830 = vld [vmem:[%s592 + $0x220] sm:$0xff]
        %v831 = vld [vmem:[%s592 + $0x228] sm:$0xff]
        %v832 = vld [vmem:[%s592 + $0x230] sm:$0xff]
        %v833 = vld [vmem:[%s592 + $0x238] sm:$0xff]
        %v834 = vld [vmem:[%s592 + $0x240] sm:$0xff]
        %v835 = vld [vmem:[%s592 + $0x248] sm:$0xff]
        %v836 = vld [vmem:[%s592 + $0x250] sm:$0xff]
        %v837 = vld [vmem:[%s592 + $0x258] sm:$0xff]
        %v838 = vld [vmem:[%s592 + $0x260] sm:$0xff]
        %v839 = vld [vmem:[%s592 + $0x268] sm:$0xff]
        %v840 = vld [vmem:[%s592 + $0x270] sm:$0xff]
        %v841 = vld [vmem:[%s592 + $0x278] sm:$0xff]
        %v842 = vld [vmem:[%s592 + $0x280] sm:$0xff]
        %v843 = vld [vmem:[%s592 + $0x288] sm:$0xff]
        %v844 = vld [vmem:[%s592 + $0x290] sm:$0xff]
        %v845 = vld [vmem:[%s592 + $0x298] sm:$0xff]
        %v846 = vld [vmem:[%s592 + $0x2a0] sm:$0xff]
        %v847 = vld [vmem:[%s592 + $0x2a8] sm:$0xff]
        %v848 = vld [vmem:[%s592 + $0x2b0] sm:$0xff]
        %v849 = vld [vmem:[%s592 + $0x2b8] sm:$0xff]
        %v850 = vld [vmem:[%s592 + $0x2c0] sm:$0xff]
        %v851 = vld [vmem:[%s592 + $0x2c8] sm:$0xff]
        %v852 = vld [vmem:[%s592 + $0x2d0] sm:$0xff]
        %v853 = vld [vmem:[%s592 + $0x2d8] sm:$0xff]
        %v854 = vld [vmem:[%s592 + $0x2e0] sm:$0xff]
        %v855 = vld [vmem:[%s592 + $0x2e8] sm:$0xff]
        %v856 = vld [vmem:[%s592 + $0x2f0] sm:$0xff]
        %v857 = vld [vmem:[%s592 + $0x2f8] sm:$0xff]
        %v858 = vld [vmem:[%s592 + $0x300] sm:$0xff]
        %v859 = vld [vmem:[%s592 + $0x308] sm:$0xff]
        %v860 = vld [vmem:[%s592 + $0x310] sm:$0xff]
        %v861 = vld [vmem:[%s592 + $0x318] sm:$0xff]
        %v862 = vld [vmem:[%s592 + $0x320] sm:$0xff]
        %v863 = vld [vmem:[%s592 + $0x328] sm:$0xff]
        %v864 = vld [vmem:[%s592 + $0x330] sm:$0xff]
        %v865 = vld [vmem:[%s592 + $0x338] sm:$0xff]
        %v866 = vld [vmem:[%s592 + $0x340] sm:$0xff]
        %v867 = vld [vmem:[%s592 + $0x348] sm:$0xff]
        %v868 = vld [vmem:[%s592 + $0x350] sm:$0xff]
        %v869 = vld [vmem:[%s592 + $0x358] sm:$0xff]
        %v870 = vld [vmem:[%s592 + $0x360] sm:$0xff]
        %v871 = vld [vmem:[%s592 + $0x368] sm:$0xff]
        %v872 = vld [vmem:[%s592 + $0x370] sm:$0xff]
        %v873 = vld [vmem:[%s592 + $0x378] sm:$0xff]
        %v874 = vld [vmem:[%s592 + $0x380] sm:$0xff]
        %v875 = vld [vmem:[%s592 + $0x388] sm:$0xff]
        %v876 = vld [vmem:[%s592 + $0x390] sm:$0xff]
        %v877 = vld [vmem:[%s592 + $0x398] sm:$0xff]
        %v878 = vld [vmem:[%s592 + $0x3a0] sm:$0xff]
        %v879 = vld [vmem:[%s592 + $0x3a8] sm:$0xff]
        %v880 = vld [vmem:[%s592 + $0x3b0] sm:$0xff]
        %v881 = vld [vmem:[%s592 + $0x3b8] sm:$0xff]
        %v882 = vld [vmem:[%s592 + $0x3c0] sm:$0xff]
        %v883 = vld [vmem:[%s592 + $0x3c8] sm:$0xff]
        %v884 = vld [vmem:[%s592 + $0x3d0] sm:$0xff]
        %v885 = vld [vmem:[%s592 + $0x3d8] sm:$0xff]
        %v886 = vld [vmem:[%s592 + $0x3e0] sm:$0xff]
        %v887 = vld [vmem:[%s592 + $0x3e8] sm:$0xff]
        %v888 = vld [vmem:[%s592 + $0x3f0] sm:$0xff]
        %v889 = vld [vmem:[%s592 + $0x3f8] sm:$0xff]
        %v890 = vld [vmem:[%s592 + $0x400] sm:$0xff]
        %v891 = vld [vmem:[%s592 + $0x408] sm:$0xff]
        %v892 = vld [vmem:[%s592 + $0x410] sm:$0xff]
        %v893 = vld [vmem:[%s592 + $0x418] sm:$0xff]
        %v894 = vld [vmem:[%s592 + $0x420] sm:$0xff]
        %v895 = vld [vmem:[%s592 + $0x428] sm:$0xff]
        %v896 = vld [vmem:[%s592 + $0x430] sm:$0xff]
        %v897 = vld [vmem:[%s592 + $0x438] sm:$0xff]
        %v898 = vld [vmem:[%s592 + $0x440] sm:$0xff]
        %v899 = vld [vmem:[%s592 + $0x448] sm:$0xff]
        %v900 = vld [vmem:[%s592 + $0x450] sm:$0xff]
        %v901 = vld [vmem:[%s592 + $0x458] sm:$0xff]
        %v902 = vld [vmem:[%s592 + $0x460] sm:$0xff]
        %v903 = vld [vmem:[%s592 + $0x468] sm:$0xff]
        %v904 = vld [vmem:[%s592 + $0x470] sm:$0xff]
        %v905 = vld [vmem:[%s592 + $0x478] sm:$0xff]
        %v906 = vld [vmem:[%s592 + $0x480] sm:$0xff]
        %v907 = vld [vmem:[%s592 + $0x488] sm:$0xff]
        %v908 = vld [vmem:[%s592 + $0x490] sm:$0xff]
        %v909 = vld [vmem:[%s592 + $0x498] sm:$0xff]
        %v910 = vld [vmem:[%s592 + $0x4a0] sm:$0xff]
        %v911 = vld [vmem:[%s592 + $0x4a8] sm:$0xff]
        %v912 = vld [vmem:[%s592 + $0x4b0] sm:$0xff]
        %v913 = vld [vmem:[%s592 + $0x4b8] sm:$0xff]
        %v914 = vld [vmem:[%s592 + $0x4c0] sm:$0xff]
        %v915 = vld [vmem:[%s592 + $0x4c8] sm:$0xff]
        %v916 = vld [vmem:[%s592 + $0x4d0] sm:$0xff]
        %v917 = vld [vmem:[%s592 + $0x4d8] sm:$0xff]
        %v918 = vld [vmem:[%s592 + $0x4e0] sm:$0xff]
        %v919 = vld [vmem:[%s592 + $0x4e8] sm:$0xff]
        %v920 = vld [vmem:[%s592 + $0x4f0] sm:$0xff]
        %v921 = vld [vmem:[%s592 + $0x4f8] sm:$0xff]
        %v922 = vld [vmem:[%s592 + $0x500] sm:$0xff]
        %v923 = vld [vmem:[%s592 + $0x508] sm:$0xff]
        %v924 = vld [vmem:[%s592 + $0x510] sm:$0xff]
        %v925 = vld [vmem:[%s592 + $0x518] sm:$0xff]
        %v926 = vld [vmem:[%s592 + $0x520] sm:$0xff]
        %v927 = vld [vmem:[%s592 + $0x528] sm:$0xff]
        %v928 = vld [vmem:[%s592 + $0x530] sm:$0xff]
        %v929 = vld [vmem:[%s592 + $0x538] sm:$0xff]
        %v930 = vld [vmem:[%s592 + $0x540] sm:$0xff]
        %v931 = vld [vmem:[%s592 + $0x548] sm:$0xff]
        %v932 = vld [vmem:[%s592 + $0x550] sm:$0xff]
        %v933 = vld [vmem:[%s592 + $0x558] sm:$0xff]
        %v934 = vld [vmem:[%s592 + $0x560] sm:$0xff]
        %v935 = vld [vmem:[%s592 + $0x568] sm:$0xff]
        %v936 = vld [vmem:[%s592 + $0x570] sm:$0xff]
        %v937 = vld [vmem:[%s592 + $0x578] sm:$0xff]
        %v938 = vld [vmem:[%s592 + $0x580] sm:$0xff]
        %v939 = vld [vmem:[%s592 + $0x588] sm:$0xff]
        %v940 = vld [vmem:[%s592 + $0x590] sm:$0xff]
        %v941 = vld [vmem:[%s592 + $0x598] sm:$0xff]
        %v942 = vld [vmem:[%s592 + $0x5a0] sm:$0xff]
        %v943 = vld [vmem:[%s592 + $0x5a8] sm:$0xff]
        %v944 = vld [vmem:[%s592 + $0x5b0] sm:$0xff]
        %v945 = vld [vmem:[%s592 + $0x5b8] sm:$0xff]
        %v946 = vld [vmem:[%s592 + $0x5c0] sm:$0xff]
        %v947 = vld [vmem:[%s592 + $0x5c8] sm:$0xff]
        %v948 = vld [vmem:[%s592 + $0x5d0] sm:$0xff]
        %v949 = vld [vmem:[%s592 + $0x5d8] sm:$0xff]
        %v950 = vld [vmem:[%s592 + $0x5e0] sm:$0xff]
        %v951 = vld [vmem:[%s592 + $0x5e8] sm:$0xff]
        %v952 = vld [vmem:[%s592 + $0x5f0] sm:$0xff]
        %v953 = vld [vmem:[%s592 + $0x5f8] sm:$0xff]
        %v954 = vld [vmem:[%s592 + $0x600] sm:$0xff]
        %v955 = vld [vmem:[%s592 + $0x608] sm:$0xff]
        %v956 = vld [vmem:[%s592 + $0x610] sm:$0xff]
        %v957 = vld [vmem:[%s592 + $0x618] sm:$0xff]
        %v958 = vld [vmem:[%s592 + $0x620] sm:$0xff]
        %v959 = vld [vmem:[%s592 + $0x628] sm:$0xff]
        %v960 = vld [vmem:[%s592 + $0x630] sm:$0xff]
        %v961 = vld [vmem:[%s592 + $0x638] sm:$0xff]
        %v962 = vld [vmem:[%s592 + $0x640] sm:$0xff]
        %v963 = vld [vmem:[%s592 + $0x648] sm:$0xff]
        %v964 = vld [vmem:[%s592 + $0x650] sm:$0xff]
        %v965 = vld [vmem:[%s592 + $0x658] sm:$0xff]
        %v966 = vld [vmem:[%s592 + $0x660] sm:$0xff]
        %v967 = vld [vmem:[%s592 + $0x668] sm:$0xff]
        %v968 = vld [vmem:[%s592 + $0x670] sm:$0xff]
        %v969 = vld [vmem:[%s592 + $0x678] sm:$0xff]
        %v970 = vld [vmem:[%s592 + $0x680] sm:$0xff]
        %v971 = vld [vmem:[%s592 + $0x688] sm:$0xff]
        %v972 = vld [vmem:[%s592 + $0x690] sm:$0xff]
        %v973 = vld [vmem:[%s592 + $0x698] sm:$0xff]
        %v974 = vld [vmem:[%s592 + $0x6a0] sm:$0xff]
        %v975 = vld [vmem:[%s592 + $0x6a8] sm:$0xff]
        %v976 = vld [vmem:[%s592 + $0x6b0] sm:$0xff]
        %v977 = vld [vmem:[%s592 + $0x6b8] sm:$0xff]
        %v978 = vld [vmem:[%s592 + $0x6c0] sm:$0xff]
        %v979 = vld [vmem:[%s592 + $0x6c8] sm:$0xff]
        %v980 = vld [vmem:[%s592 + $0x6d0] sm:$0xff]
        %v981 = vld [vmem:[%s592 + $0x6d8] sm:$0xff]
        %v982 = vld [vmem:[%s592 + $0x6e0] sm:$0xff]
        %v983 = vld [vmem:[%s592 + $0x6e8] sm:$0xff]
        %v984 = vld [vmem:[%s592 + $0x6f0] sm:$0xff]
        %v985 = vld [vmem:[%s592 + $0x6f8] sm:$0xff]
        %v986 = vld [vmem:[%s592 + $0x700] sm:$0xff]
        %v987 = vld [vmem:[%s592 + $0x708] sm:$0xff]
        %v988 = vld [vmem:[%s592 + $0x710] sm:$0xff]
        %v989 = vld [vmem:[%s592 + $0x718] sm:$0xff]
        %v990 = vld [vmem:[%s592 + $0x720] sm:$0xff]
        %v991 = vld [vmem:[%s592 + $0x728] sm:$0xff]
        %v992 = vld [vmem:[%s592 + $0x730] sm:$0xff]
        %v993 = vld [vmem:[%s592 + $0x738] sm:$0xff]
        %v994 = vld [vmem:[%s592 + $0x740] sm:$0xff]
        %v995 = vld [vmem:[%s592 + $0x748] sm:$0xff]
        %v996 = vld [vmem:[%s592 + $0x750] sm:$0xff]
        %v997 = vld [vmem:[%s592 + $0x758] sm:$0xff]
        %v998 = vld [vmem:[%s592 + $0x760] sm:$0xff]
        %v999 = vld [vmem:[%s592 + $0x768] sm:$0xff]
        %v1000 = vld [vmem:[%s592 + $0x770] sm:$0xff]
        %v1001 = vld [vmem:[%s592 + $0x778] sm:$0xff]
        %v1002 = vld [vmem:[%s592 + $0x780] sm:$0xff]
        %v1003 = vld [vmem:[%s592 + $0x788] sm:$0xff]
        %v1004 = vld [vmem:[%s592 + $0x790] sm:$0xff]
        %v1005 = vld [vmem:[%s592 + $0x798] sm:$0xff]
        %v1006 = vld [vmem:[%s592 + $0x7a0] sm:$0xff]
        %v1007 = vld [vmem:[%s592 + $0x7a8] sm:$0xff]
        %v1008 = vld [vmem:[%s592 + $0x7b0] sm:$0xff]
        %v1009 = vld [vmem:[%s592 + $0x7b8] sm:$0xff]
        %v1010 = vld [vmem:[%s592 + $0x7c0] sm:$0xff]
        %v1011 = vld [vmem:[%s592 + $0x7c8] sm:$0xff]
        %v1012 = vld [vmem:[%s592 + $0x7d0] sm:$0xff]
        %v1013 = vld [vmem:[%s592 + $0x7d8] sm:$0xff]
        %v1014 = vld [vmem:[%s592 + $0x7e0] sm:$0xff]
        %v1015 = vld [vmem:[%s592 + $0x7e8] sm:$0xff]
        %v1016 = vld [vmem:[%s592 + $0x7f0] sm:$0xff]
        %v1017 = vld [vmem:[%s592 + $0x7f8] sm:$0xff]
        %v1018 = vld [vmem:[%s601] sm:$0xff]
        %v1019 = vld [vmem:[%s601 + $0x8] sm:$0xff]
        %v1020 = vld [vmem:[%s601 + $0x10] sm:$0xff]
        %v1021 = vld [vmem:[%s601 + $0x18] sm:$0xff]
        %1023 = vset.pattern.permute.xlu0 0
        %1024 = vperm.xlu0 %1023, %v761
        %v1025 = vpop.permute.xlu0 %1024
        %v1031 = vlaneseq
        %v1032 = vshrl.u32 %v1031, 7
        %v1033 = vsub.s32 0, %v1032
        %v1034 = vrot.slane %v1018, %v1033
        %v1035 = vlaneseq
        %v1036 = vshrl.u32 %v1035, 7
        %v1037 = vsub.s32 2, %v1036
        %v1038 = vrot.slane %v1018, %v1037
        %v1039 = vlaneseq
        %v1040 = vshrl.u32 %v1039, 7
        %v1041 = vsub.s32 4, %v1040
        %v1042 = vrot.slane %v1018, %v1041
        %v1043 = vlaneseq
        %v1044 = vshrl.u32 %v1043, 7
        %v1045 = vsub.s32 6, %v1044
        %v1046 = vrot.slane %v1018, %v1045
        %v1047 = vlaneseq
        %v1048 = vshrl.u32 %v1047, 7
        %v1049 = vsub.s32 0, %v1048
        %v1050 = vrot.slane %v1019, %v1049
        %v1051 = vlaneseq
        %v1052 = vshrl.u32 %v1051, 7
        %v1053 = vsub.s32 2, %v1052
        %v1054 = vrot.slane %v1019, %v1053
        %v1055 = vlaneseq
        %v1056 = vshrl.u32 %v1055, 7
        %v1057 = vsub.s32 4, %v1056
        %v1058 = vrot.slane %v1019, %v1057
        %v1059 = vlaneseq
        %v1060 = vshrl.u32 %v1059, 7
        %v1061 = vsub.s32 6, %v1060
        %v1062 = vrot.slane %v1019, %v1061
        %v1063 = vlaneseq
        %v1064 = vshrl.u32 %v1063, 7
        %v1065 = vsub.s32 0, %v1064
        %v1066 = vrot.slane %v1020, %v1065
        %v1067 = vlaneseq
        %v1068 = vshrl.u32 %v1067, 7
        %v1069 = vsub.s32 2, %v1068
        %v1070 = vrot.slane %v1020, %v1069
        %v1071 = vlaneseq
        %v1072 = vshrl.u32 %v1071, 7
        %v1073 = vsub.s32 4, %v1072
        %v1074 = vrot.slane %v1020, %v1073
        %v1075 = vlaneseq
        %v1076 = vshrl.u32 %v1075, 7
        %v1077 = vsub.s32 6, %v1076
        %v1078 = vrot.slane %v1020, %v1077
        %v1079 = vlaneseq
        %v1080 = vshrl.u32 %v1079, 7
        %v1081 = vsub.s32 0, %v1080
        %v1082 = vrot.slane %v1021, %v1081
        %v1083 = vlaneseq
        %v1084 = vshrl.u32 %v1083, 7
        %v1085 = vsub.s32 2, %v1084
        %v1086 = vrot.slane %v1021, %v1085
        %v1087 = vlaneseq
        %v1088 = vshrl.u32 %v1087, 7
        %v1089 = vsub.s32 4, %v1088
        %v1090 = vrot.slane %v1021, %v1089
        %v1091 = vlaneseq
        %v1092 = vshrl.u32 %v1091, 7
        %v1093 = vsub.s32 6, %v1092
        %v1094 = vrot.slane %v1021, %v1093
        %v1111 = vlaneseq
        %v1112 = vshrl.u32 %v1111, 7
        %v1113 = vsub.s32 0, %v1112
        %v1114 = vrot.slane %v1034, %v1113
        %v1115 = vlaneseq
        %v1116 = vshrl.u32 %v1115, 7
        %v1117 = vsub.s32 0, %v1116
        %v1118 = vrot.slane %v1038, %v1117
        %v1119 = vlaneseq
        %v1120 = vshrl.u32 %v1119, 7
        %v1121 = vsub.s32 0, %v1120
        %v1122 = vrot.slane %v1042, %v1121
        %v1123 = vlaneseq
        %v1124 = vshrl.u32 %v1123, 7
        %v1125 = vsub.s32 0, %v1124
        %v1126 = vrot.slane %v1046, %v1125
        %v1127 = vlaneseq
        %v1128 = vshrl.u32 %v1127, 7
        %v1129 = vsub.s32 0, %v1128
        %v1130 = vrot.slane %v1050, %v1129
        %v1131 = vlaneseq
        %v1132 = vshrl.u32 %v1131, 7
        %v1133 = vsub.s32 0, %v1132
        %v1134 = vrot.slane %v1054, %v1133
        %v1135 = vlaneseq
        %v1136 = vshrl.u32 %v1135, 7
        %v1137 = vsub.s32 0, %v1136
        %v1138 = vrot.slane %v1058, %v1137
        %v1139 = vlaneseq
        %v1140 = vshrl.u32 %v1139, 7
        %v1141 = vsub.s32 0, %v1140
        %v1142 = vrot.slane %v1062, %v1141
        %v1143 = vlaneseq
        %v1144 = vshrl.u32 %v1143, 7
        %v1145 = vsub.s32 0, %v1144
        %v1146 = vrot.slane %v1066, %v1145
        %v1147 = vlaneseq
        %v1148 = vshrl.u32 %v1147, 7
        %v1149 = vsub.s32 0, %v1148
        %v1150 = vrot.slane %v1070, %v1149
        %v1151 = vlaneseq
        %v1152 = vshrl.u32 %v1151, 7
        %v1153 = vsub.s32 0, %v1152
        %v1154 = vrot.slane %v1074, %v1153
        %v1155 = vlaneseq
        %v1156 = vshrl.u32 %v1155, 7
        %v1157 = vsub.s32 0, %v1156
        %v1158 = vrot.slane %v1078, %v1157
        %v1159 = vlaneseq
        %v1160 = vshrl.u32 %v1159, 7
        %v1161 = vsub.s32 0, %v1160
        %v1162 = vrot.slane %v1082, %v1161
        %v1163 = vlaneseq
        %v1164 = vshrl.u32 %v1163, 7
        %v1165 = vsub.s32 0, %v1164
        %v1166 = vrot.slane %v1086, %v1165
        %v1167 = vlaneseq
        %v1168 = vshrl.u32 %v1167, 7
        %v1169 = vsub.s32 0, %v1168
        %v1170 = vrot.slane %v1090, %v1169
        %v1171 = vlaneseq
        %v1172 = vshrl.u32 %v1171, 7
        %v1173 = vsub.s32 0, %v1172
        %v1174 = vrot.slane %v1094, %v1173
        %v1175 = vmul.f32 %v1025, %v1114
        %v1176 = vmul.f32 %v1025, %v1118
        %v1177 = vmul.f32 %v1025, %v1122
        %v1178 = vmul.f32 %v1025, %v1126
        %v1179 = vmul.f32 %v1025, %v1130
        %v1180 = vmul.f32 %v1025, %v1134
        %v1181 = vmul.f32 %v1025, %v1138
        %v1182 = vmul.f32 %v1025, %v1142
        %v1183 = vmul.f32 %v1025, %v1146
        %v1184 = vmul.f32 %v1025, %v1150
        %v1185 = vmul.f32 %v1025, %v1154
        %v1186 = vmul.f32 %v1025, %v1158
        %v1187 = vmul.f32 %v1025, %v1162
        %v1188 = vmul.f32 %v1025, %v1166
        %v1189 = vmul.f32 %v1025, %v1170
        %v1190 = vmul.f32 %v1025, %v1174
        %v1192 = vunpack.c.l.b16 %v760
        %v1193 = vunpack.c.h.b16 %v760
        %v1194 = vpack.c.b16 %v1192, %v1192
        %v1195 = vpack.c.b16 %v1193, %v1193
        %v1454 = vunpack.c.l.b16 %v762
        %v1455 = vunpack.c.h.b16 %v762
        %v1456 = vunpack.c.l.b16 %v763
        %v1457 = vunpack.c.h.b16 %v763
        %v1458 = vunpack.c.l.b16 %v764
        %v1459 = vunpack.c.h.b16 %v764
        %v1460 = vunpack.c.l.b16 %v765
        %v1461 = vunpack.c.h.b16 %v765
        %v1462 = vunpack.c.l.b16 %v766
        %v1463 = vunpack.c.h.b16 %v766
        %v1464 = vunpack.c.l.b16 %v767
        %v1465 = vunpack.c.h.b16 %v767
        %v1466 = vunpack.c.l.b16 %v768
        %v1467 = vunpack.c.h.b16 %v768
        %v1468 = vunpack.c.l.b16 %v769
        %v1469 = vunpack.c.h.b16 %v769
        %v1470 = vunpack.c.l.b16 %v770
        %v1471 = vunpack.c.h.b16 %v770
        %v1472 = vunpack.c.l.b16 %v771
        %v1473 = vunpack.c.h.b16 %v771
        %v1474 = vunpack.c.l.b16 %v772
        %v1475 = vunpack.c.h.b16 %v772
        %v1476 = vunpack.c.l.b16 %v773
        %v1477 = vunpack.c.h.b16 %v773
        %v1478 = vunpack.c.l.b16 %v774
        %v1479 = vunpack.c.h.b16 %v774
        %v1480 = vunpack.c.l.b16 %v775
        %v1481 = vunpack.c.h.b16 %v775
        %v1482 = vunpack.c.l.b16 %v776
        %v1483 = vunpack.c.h.b16 %v776
        %v1484 = vunpack.c.l.b16 %v777
        %v1485 = vunpack.c.h.b16 %v777
        %v1486 = vunpack.c.l.b16 %v778
        %v1487 = vunpack.c.h.b16 %v778
        %v1488 = vunpack.c.l.b16 %v779
        %v1489 = vunpack.c.h.b16 %v779
        %v1490 = vunpack.c.l.b16 %v780
        %v1491 = vunpack.c.h.b16 %v780
        %v1492 = vunpack.c.l.b16 %v781
        %v1493 = vunpack.c.h.b16 %v781
        %v1494 = vunpack.c.l.b16 %v782
        %v1495 = vunpack.c.h.b16 %v782
        %v1496 = vunpack.c.l.b16 %v783
        %v1497 = vunpack.c.h.b16 %v783
        %v1498 = vunpack.c.l.b16 %v784
        %v1499 = vunpack.c.h.b16 %v784
        %v1500 = vunpack.c.l.b16 %v785
        %v1501 = vunpack.c.h.b16 %v785
        %v1502 = vunpack.c.l.b16 %v786
        %v1503 = vunpack.c.h.b16 %v786
        %v1504 = vunpack.c.l.b16 %v787
        %v1505 = vunpack.c.h.b16 %v787
        %v1506 = vunpack.c.l.b16 %v788
        %v1507 = vunpack.c.h.b16 %v788
        %v1508 = vunpack.c.l.b16 %v789
        %v1509 = vunpack.c.h.b16 %v789
        %v1510 = vunpack.c.l.b16 %v790
        %v1511 = vunpack.c.h.b16 %v790
        %v1512 = vunpack.c.l.b16 %v791
        %v1513 = vunpack.c.h.b16 %v791
        %v1514 = vunpack.c.l.b16 %v792
        %v1515 = vunpack.c.h.b16 %v792
        %v1516 = vunpack.c.l.b16 %v793
        %v1517 = vunpack.c.h.b16 %v793
        %v1518 = vunpack.c.l.b16 %v794
        %v1519 = vunpack.c.h.b16 %v794
        %v1520 = vunpack.c.l.b16 %v795
        %v1521 = vunpack.c.h.b16 %v795
        %v1522 = vunpack.c.l.b16 %v796
        %v1523 = vunpack.c.h.b16 %v796
        %v1524 = vunpack.c.l.b16 %v797
        %v1525 = vunpack.c.h.b16 %v797
        %v1526 = vunpack.c.l.b16 %v798
        %v1527 = vunpack.c.h.b16 %v798
        %v1528 = vunpack.c.l.b16 %v799
        %v1529 = vunpack.c.h.b16 %v799
        %v1530 = vunpack.c.l.b16 %v800
        %v1531 = vunpack.c.h.b16 %v800
        %v1532 = vunpack.c.l.b16 %v801
        %v1533 = vunpack.c.h.b16 %v801
        %v1534 = vunpack.c.l.b16 %v802
        %v1535 = vunpack.c.h.b16 %v802
        %v1536 = vunpack.c.l.b16 %v803
        %v1537 = vunpack.c.h.b16 %v803
        %v1538 = vunpack.c.l.b16 %v804
        %v1539 = vunpack.c.h.b16 %v804
        %v1540 = vunpack.c.l.b16 %v805
        %v1541 = vunpack.c.h.b16 %v805
        %v1542 = vunpack.c.l.b16 %v806
        %v1543 = vunpack.c.h.b16 %v806
        %v1544 = vunpack.c.l.b16 %v807
        %v1545 = vunpack.c.h.b16 %v807
        %v1546 = vunpack.c.l.b16 %v808
        %v1547 = vunpack.c.h.b16 %v808
        %v1548 = vunpack.c.l.b16 %v809
        %v1549 = vunpack.c.h.b16 %v809
        %v1550 = vunpack.c.l.b16 %v810
        %v1551 = vunpack.c.h.b16 %v810
        %v1552 = vunpack.c.l.b16 %v811
        %v1553 = vunpack.c.h.b16 %v811
        %v1554 = vunpack.c.l.b16 %v812
        %v1555 = vunpack.c.h.b16 %v812
        %v1556 = vunpack.c.l.b16 %v813
        %v1557 = vunpack.c.h.b16 %v813
        %v1558 = vunpack.c.l.b16 %v814
        %v1559 = vunpack.c.h.b16 %v814
        %v1560 = vunpack.c.l.b16 %v815
        %v1561 = vunpack.c.h.b16 %v815
        %v1562 = vunpack.c.l.b16 %v816
        %v1563 = vunpack.c.h.b16 %v816
        %v1564 = vunpack.c.l.b16 %v817
        %v1565 = vunpack.c.h.b16 %v817
        %v1566 = vunpack.c.l.b16 %v818
        %v1567 = vunpack.c.h.b16 %v818
        %v1568 = vunpack.c.l.b16 %v819
        %v1569 = vunpack.c.h.b16 %v819
        %v1570 = vunpack.c.l.b16 %v820
        %v1571 = vunpack.c.h.b16 %v820
        %v1572 = vunpack.c.l.b16 %v821
        %v1573 = vunpack.c.h.b16 %v821
        %v1574 = vunpack.c.l.b16 %v822
        %v1575 = vunpack.c.h.b16 %v822
        %v1576 = vunpack.c.l.b16 %v823
        %v1577 = vunpack.c.h.b16 %v823
        %v1578 = vunpack.c.l.b16 %v824
        %v1579 = vunpack.c.h.b16 %v824
        %v1580 = vunpack.c.l.b16 %v825
        %v1581 = vunpack.c.h.b16 %v825
        %v1582 = vunpack.c.l.b16 %v826
        %v1583 = vunpack.c.h.b16 %v826
        %v1584 = vunpack.c.l.b16 %v827
        %v1585 = vunpack.c.h.b16 %v827
        %v1586 = vunpack.c.l.b16 %v828
        %v1587 = vunpack.c.h.b16 %v828
        %v1588 = vunpack.c.l.b16 %v829
        %v1589 = vunpack.c.h.b16 %v829
        %v1590 = vunpack.c.l.b16 %v830
        %v1591 = vunpack.c.h.b16 %v830
        %v1592 = vunpack.c.l.b16 %v831
        %v1593 = vunpack.c.h.b16 %v831
        %v1594 = vunpack.c.l.b16 %v832
        %v1595 = vunpack.c.h.b16 %v832
        %v1596 = vunpack.c.l.b16 %v833
        %v1597 = vunpack.c.h.b16 %v833
        %v1598 = vunpack.c.l.b16 %v834
        %v1599 = vunpack.c.h.b16 %v834
        %v1600 = vunpack.c.l.b16 %v835
        %v1601 = vunpack.c.h.b16 %v835
        %v1602 = vunpack.c.l.b16 %v836
        %v1603 = vunpack.c.h.b16 %v836
        %v1604 = vunpack.c.l.b16 %v837
        %v1605 = vunpack.c.h.b16 %v837
        %v1606 = vunpack.c.l.b16 %v838
        %v1607 = vunpack.c.h.b16 %v838
        %v1608 = vunpack.c.l.b16 %v839
        %v1609 = vunpack.c.h.b16 %v839
        %v1610 = vunpack.c.l.b16 %v840
        %v1611 = vunpack.c.h.b16 %v840
        %v1612 = vunpack.c.l.b16 %v841
        %v1613 = vunpack.c.h.b16 %v841
        %v1614 = vunpack.c.l.b16 %v842
        %v1615 = vunpack.c.h.b16 %v842
        %v1616 = vunpack.c.l.b16 %v843
        %v1617 = vunpack.c.h.b16 %v843
        %v1618 = vunpack.c.l.b16 %v844
        %v1619 = vunpack.c.h.b16 %v844
        %v1620 = vunpack.c.l.b16 %v845
        %v1621 = vunpack.c.h.b16 %v845
        %v1622 = vunpack.c.l.b16 %v846
        %v1623 = vunpack.c.h.b16 %v846
        %v1624 = vunpack.c.l.b16 %v847
        %v1625 = vunpack.c.h.b16 %v847
        %v1626 = vunpack.c.l.b16 %v848
        %v1627 = vunpack.c.h.b16 %v848
        %v1628 = vunpack.c.l.b16 %v849
        %v1629 = vunpack.c.h.b16 %v849
        %v1630 = vunpack.c.l.b16 %v850
        %v1631 = vunpack.c.h.b16 %v850
        %v1632 = vunpack.c.l.b16 %v851
        %v1633 = vunpack.c.h.b16 %v851
        %v1634 = vunpack.c.l.b16 %v852
        %v1635 = vunpack.c.h.b16 %v852
        %v1636 = vunpack.c.l.b16 %v853
        %v1637 = vunpack.c.h.b16 %v853
        %v1638 = vunpack.c.l.b16 %v854
        %v1639 = vunpack.c.h.b16 %v854
        %v1640 = vunpack.c.l.b16 %v855
        %v1641 = vunpack.c.h.b16 %v855
        %v1642 = vunpack.c.l.b16 %v856
        %v1643 = vunpack.c.h.b16 %v856
        %v1644 = vunpack.c.l.b16 %v857
        %v1645 = vunpack.c.h.b16 %v857
        %v1646 = vunpack.c.l.b16 %v858
        %v1647 = vunpack.c.h.b16 %v858
        %v1648 = vunpack.c.l.b16 %v859
        %v1649 = vunpack.c.h.b16 %v859
        %v1650 = vunpack.c.l.b16 %v860
        %v1651 = vunpack.c.h.b16 %v860
        %v1652 = vunpack.c.l.b16 %v861
        %v1653 = vunpack.c.h.b16 %v861
        %v1654 = vunpack.c.l.b16 %v862
        %v1655 = vunpack.c.h.b16 %v862
        %v1656 = vunpack.c.l.b16 %v863
        %v1657 = vunpack.c.h.b16 %v863
        %v1658 = vunpack.c.l.b16 %v864
        %v1659 = vunpack.c.h.b16 %v864
        %v1660 = vunpack.c.l.b16 %v865
        %v1661 = vunpack.c.h.b16 %v865
        %v1662 = vunpack.c.l.b16 %v866
        %v1663 = vunpack.c.h.b16 %v866
        %v1664 = vunpack.c.l.b16 %v867
        %v1665 = vunpack.c.h.b16 %v867
        %v1666 = vunpack.c.l.b16 %v868
        %v1667 = vunpack.c.h.b16 %v868
        %v1668 = vunpack.c.l.b16 %v869
        %v1669 = vunpack.c.h.b16 %v869
        %v1670 = vunpack.c.l.b16 %v870
        %v1671 = vunpack.c.h.b16 %v870
        %v1672 = vunpack.c.l.b16 %v871
        %v1673 = vunpack.c.h.b16 %v871
        %v1674 = vunpack.c.l.b16 %v872
        %v1675 = vunpack.c.h.b16 %v872
        %v1676 = vunpack.c.l.b16 %v873
        %v1677 = vunpack.c.h.b16 %v873
        %v1678 = vunpack.c.l.b16 %v874
        %v1679 = vunpack.c.h.b16 %v874
        %v1680 = vunpack.c.l.b16 %v875
        %v1681 = vunpack.c.h.b16 %v875
        %v1682 = vunpack.c.l.b16 %v876
        %v1683 = vunpack.c.h.b16 %v876
        %v1684 = vunpack.c.l.b16 %v877
        %v1685 = vunpack.c.h.b16 %v877
        %v1686 = vunpack.c.l.b16 %v878
        %v1687 = vunpack.c.h.b16 %v878
        %v1688 = vunpack.c.l.b16 %v879
        %v1689 = vunpack.c.h.b16 %v879
        %v1690 = vunpack.c.l.b16 %v880
        %v1691 = vunpack.c.h.b16 %v880
        %v1692 = vunpack.c.l.b16 %v881
        %v1693 = vunpack.c.h.b16 %v881
        %v1694 = vunpack.c.l.b16 %v882
        %v1695 = vunpack.c.h.b16 %v882
        %v1696 = vunpack.c.l.b16 %v883
        %v1697 = vunpack.c.h.b16 %v883
        %v1698 = vunpack.c.l.b16 %v884
        %v1699 = vunpack.c.h.b16 %v884
        %v1700 = vunpack.c.l.b16 %v885
        %v1701 = vunpack.c.h.b16 %v885
        %v1702 = vunpack.c.l.b16 %v886
        %v1703 = vunpack.c.h.b16 %v886
        %v1704 = vunpack.c.l.b16 %v887
        %v1705 = vunpack.c.h.b16 %v887
        %v1706 = vunpack.c.l.b16 %v888
        %v1707 = vunpack.c.h.b16 %v888
        %v1708 = vunpack.c.l.b16 %v889
        %v1709 = vunpack.c.h.b16 %v889
        %v1710 = vunpack.c.l.b16 %v890
        %v1711 = vunpack.c.h.b16 %v890
        %v1712 = vunpack.c.l.b16 %v891
        %v1713 = vunpack.c.h.b16 %v891
        %v1714 = vunpack.c.l.b16 %v892
        %v1715 = vunpack.c.h.b16 %v892
        %v1716 = vunpack.c.l.b16 %v893
        %v1717 = vunpack.c.h.b16 %v893
        %v1718 = vunpack.c.l.b16 %v894
        %v1719 = vunpack.c.h.b16 %v894
        %v1720 = vunpack.c.l.b16 %v895
        %v1721 = vunpack.c.h.b16 %v895
        %v1722 = vunpack.c.l.b16 %v896
        %v1723 = vunpack.c.h.b16 %v896
        %v1724 = vunpack.c.l.b16 %v897
        %v1725 = vunpack.c.h.b16 %v897
        %v1726 = vunpack.c.l.b16 %v898
        %v1727 = vunpack.c.h.b16 %v898
        %v1728 = vunpack.c.l.b16 %v899
        %v1729 = vunpack.c.h.b16 %v899
        %v1730 = vunpack.c.l.b16 %v900
        %v1731 = vunpack.c.h.b16 %v900
        %v1732 = vunpack.c.l.b16 %v901
        %v1733 = vunpack.c.h.b16 %v901
        %v1734 = vunpack.c.l.b16 %v902
        %v1735 = vunpack.c.h.b16 %v902
        %v1736 = vunpack.c.l.b16 %v903
        %v1737 = vunpack.c.h.b16 %v903
        %v1738 = vunpack.c.l.b16 %v904
        %v1739 = vunpack.c.h.b16 %v904
        %v1740 = vunpack.c.l.b16 %v905
        %v1741 = vunpack.c.h.b16 %v905
        %v1742 = vunpack.c.l.b16 %v906
        %v1743 = vunpack.c.h.b16 %v906
        %v1744 = vunpack.c.l.b16 %v907
        %v1745 = vunpack.c.h.b16 %v907
        %v1746 = vunpack.c.l.b16 %v908
        %v1747 = vunpack.c.h.b16 %v908
        %v1748 = vunpack.c.l.b16 %v909
        %v1749 = vunpack.c.h.b16 %v909
        %v1750 = vunpack.c.l.b16 %v910
        %v1751 = vunpack.c.h.b16 %v910
        %v1752 = vunpack.c.l.b16 %v911
        %v1753 = vunpack.c.h.b16 %v911
        %v1754 = vunpack.c.l.b16 %v912
        %v1755 = vunpack.c.h.b16 %v912
        %v1756 = vunpack.c.l.b16 %v913
        %v1757 = vunpack.c.h.b16 %v913
        %v1758 = vunpack.c.l.b16 %v914
        %v1759 = vunpack.c.h.b16 %v914
        %v1760 = vunpack.c.l.b16 %v915
        %v1761 = vunpack.c.h.b16 %v915
        %v1762 = vunpack.c.l.b16 %v916
        %v1763 = vunpack.c.h.b16 %v916
        %v1764 = vunpack.c.l.b16 %v917
        %v1765 = vunpack.c.h.b16 %v917
        %v1766 = vunpack.c.l.b16 %v918
        %v1767 = vunpack.c.h.b16 %v918
        %v1768 = vunpack.c.l.b16 %v919
        %v1769 = vunpack.c.h.b16 %v919
        %v1770 = vunpack.c.l.b16 %v920
        %v1771 = vunpack.c.h.b16 %v920
        %v1772 = vunpack.c.l.b16 %v921
        %v1773 = vunpack.c.h.b16 %v921
        %v1774 = vunpack.c.l.b16 %v922
        %v1775 = vunpack.c.h.b16 %v922
        %v1776 = vunpack.c.l.b16 %v923
        %v1777 = vunpack.c.h.b16 %v923
        %v1778 = vunpack.c.l.b16 %v924
        %v1779 = vunpack.c.h.b16 %v924
        %v1780 = vunpack.c.l.b16 %v925
        %v1781 = vunpack.c.h.b16 %v925
        %v1782 = vunpack.c.l.b16 %v926
        %v1783 = vunpack.c.h.b16 %v926
        %v1784 = vunpack.c.l.b16 %v927
        %v1785 = vunpack.c.h.b16 %v927
        %v1786 = vunpack.c.l.b16 %v928
        %v1787 = vunpack.c.h.b16 %v928
        %v1788 = vunpack.c.l.b16 %v929
        %v1789 = vunpack.c.h.b16 %v929
        %v1790 = vunpack.c.l.b16 %v930
        %v1791 = vunpack.c.h.b16 %v930
        %v1792 = vunpack.c.l.b16 %v931
        %v1793 = vunpack.c.h.b16 %v931
        %v1794 = vunpack.c.l.b16 %v932
        %v1795 = vunpack.c.h.b16 %v932
        %v1796 = vunpack.c.l.b16 %v933
        %v1797 = vunpack.c.h.b16 %v933
        %v1798 = vunpack.c.l.b16 %v934
        %v1799 = vunpack.c.h.b16 %v934
        %v1800 = vunpack.c.l.b16 %v935
        %v1801 = vunpack.c.h.b16 %v935
        %v1802 = vunpack.c.l.b16 %v936
        %v1803 = vunpack.c.h.b16 %v936
        %v1804 = vunpack.c.l.b16 %v937
        %v1805 = vunpack.c.h.b16 %v937
        %v1806 = vunpack.c.l.b16 %v938
        %v1807 = vunpack.c.h.b16 %v938
        %v1808 = vunpack.c.l.b16 %v939
        %v1809 = vunpack.c.h.b16 %v939
        %v1810 = vunpack.c.l.b16 %v940
        %v1811 = vunpack.c.h.b16 %v940
        %v1812 = vunpack.c.l.b16 %v941
        %v1813 = vunpack.c.h.b16 %v941
        %v1814 = vunpack.c.l.b16 %v942
        %v1815 = vunpack.c.h.b16 %v942
        %v1816 = vunpack.c.l.b16 %v943
        %v1817 = vunpack.c.h.b16 %v943
        %v1818 = vunpack.c.l.b16 %v944
        %v1819 = vunpack.c.h.b16 %v944
        %v1820 = vunpack.c.l.b16 %v945
        %v1821 = vunpack.c.h.b16 %v945
        %v1822 = vunpack.c.l.b16 %v946
        %v1823 = vunpack.c.h.b16 %v946
        %v1824 = vunpack.c.l.b16 %v947
        %v1825 = vunpack.c.h.b16 %v947
        %v1826 = vunpack.c.l.b16 %v948
        %v1827 = vunpack.c.h.b16 %v948
        %v1828 = vunpack.c.l.b16 %v949
        %v1829 = vunpack.c.h.b16 %v949
        %v1830 = vunpack.c.l.b16 %v950
        %v1831 = vunpack.c.h.b16 %v950
        %v1832 = vunpack.c.l.b16 %v951
        %v1833 = vunpack.c.h.b16 %v951
        %v1834 = vunpack.c.l.b16 %v952
        %v1835 = vunpack.c.h.b16 %v952
        %v1836 = vunpack.c.l.b16 %v953
        %v1837 = vunpack.c.h.b16 %v953
        %v1838 = vunpack.c.l.b16 %v954
        %v1839 = vunpack.c.h.b16 %v954
        %v1840 = vunpack.c.l.b16 %v955
        %v1841 = vunpack.c.h.b16 %v955
        %v1842 = vunpack.c.l.b16 %v956
        %v1843 = vunpack.c.h.b16 %v956
        %v1844 = vunpack.c.l.b16 %v957
        %v1845 = vunpack.c.h.b16 %v957
        %v1846 = vunpack.c.l.b16 %v958
        %v1847 = vunpack.c.h.b16 %v958
        %v1848 = vunpack.c.l.b16 %v959
        %v1849 = vunpack.c.h.b16 %v959
        %v1850 = vunpack.c.l.b16 %v960
        %v1851 = vunpack.c.h.b16 %v960
        %v1852 = vunpack.c.l.b16 %v961
        %v1853 = vunpack.c.h.b16 %v961
        %v1854 = vunpack.c.l.b16 %v962
        %v1855 = vunpack.c.h.b16 %v962
        %v1856 = vunpack.c.l.b16 %v963
        %v1857 = vunpack.c.h.b16 %v963
        %v1858 = vunpack.c.l.b16 %v964
        %v1859 = vunpack.c.h.b16 %v964
        %v1860 = vunpack.c.l.b16 %v965
        %v1861 = vunpack.c.h.b16 %v965
        %v1862 = vunpack.c.l.b16 %v966
        %v1863 = vunpack.c.h.b16 %v966
        %v1864 = vunpack.c.l.b16 %v967
        %v1865 = vunpack.c.h.b16 %v967
        %v1866 = vunpack.c.l.b16 %v968
        %v1867 = vunpack.c.h.b16 %v968
        %v1868 = vunpack.c.l.b16 %v969
        %v1869 = vunpack.c.h.b16 %v969
        %v1870 = vunpack.c.l.b16 %v970
        %v1871 = vunpack.c.h.b16 %v970
        %v1872 = vunpack.c.l.b16 %v971
        %v1873 = vunpack.c.h.b16 %v971
        %v1874 = vunpack.c.l.b16 %v972
        %v1875 = vunpack.c.h.b16 %v972
        %v1876 = vunpack.c.l.b16 %v973
        %v1877 = vunpack.c.h.b16 %v973
        %v1878 = vunpack.c.l.b16 %v974
        %v1879 = vunpack.c.h.b16 %v974
        %v1880 = vunpack.c.l.b16 %v975
        %v1881 = vunpack.c.h.b16 %v975
        %v1882 = vunpack.c.l.b16 %v976
        %v1883 = vunpack.c.h.b16 %v976
        %v1884 = vunpack.c.l.b16 %v977
        %v1885 = vunpack.c.h.b16 %v977
        %v1886 = vunpack.c.l.b16 %v978
        %v1887 = vunpack.c.h.b16 %v978
        %v1888 = vunpack.c.l.b16 %v979
        %v1889 = vunpack.c.h.b16 %v979
        %v1890 = vunpack.c.l.b16 %v980
        %v1891 = vunpack.c.h.b16 %v980
        %v1892 = vunpack.c.l.b16 %v981
        %v1893 = vunpack.c.h.b16 %v981
        %v1894 = vunpack.c.l.b16 %v982
        %v1895 = vunpack.c.h.b16 %v982
        %v1896 = vunpack.c.l.b16 %v983
        %v1897 = vunpack.c.h.b16 %v983
        %v1898 = vunpack.c.l.b16 %v984
        %v1899 = vunpack.c.h.b16 %v984
        %v1900 = vunpack.c.l.b16 %v985
        %v1901 = vunpack.c.h.b16 %v985
        %v1902 = vunpack.c.l.b16 %v986
        %v1903 = vunpack.c.h.b16 %v986
        %v1904 = vunpack.c.l.b16 %v987
        %v1905 = vunpack.c.h.b16 %v987
        %v1906 = vunpack.c.l.b16 %v988
        %v1907 = vunpack.c.h.b16 %v988
        %v1908 = vunpack.c.l.b16 %v989
        %v1909 = vunpack.c.h.b16 %v989
        %v1910 = vunpack.c.l.b16 %v990
        %v1911 = vunpack.c.h.b16 %v990
        %v1912 = vunpack.c.l.b16 %v991
        %v1913 = vunpack.c.h.b16 %v991
        %v1914 = vunpack.c.l.b16 %v992
        %v1915 = vunpack.c.h.b16 %v992
        %v1916 = vunpack.c.l.b16 %v993
        %v1917 = vunpack.c.h.b16 %v993
        %v1918 = vunpack.c.l.b16 %v994
        %v1919 = vunpack.c.h.b16 %v994
        %v1920 = vunpack.c.l.b16 %v995
        %v1921 = vunpack.c.h.b16 %v995
        %v1922 = vunpack.c.l.b16 %v996
        %v1923 = vunpack.c.h.b16 %v996
        %v1924 = vunpack.c.l.b16 %v997
        %v1925 = vunpack.c.h.b16 %v997
        %v1926 = vunpack.c.l.b16 %v998
        %v1927 = vunpack.c.h.b16 %v998
        %v1928 = vunpack.c.l.b16 %v999
        %v1929 = vunpack.c.h.b16 %v999
        %v1930 = vunpack.c.l.b16 %v1000
        %v1931 = vunpack.c.h.b16 %v1000
        %v1932 = vunpack.c.l.b16 %v1001
        %v1933 = vunpack.c.h.b16 %v1001
        %v1934 = vunpack.c.l.b16 %v1002
        %v1935 = vunpack.c.h.b16 %v1002
        %v1936 = vunpack.c.l.b16 %v1003
        %v1937 = vunpack.c.h.b16 %v1003
        %v1938 = vunpack.c.l.b16 %v1004
        %v1939 = vunpack.c.h.b16 %v1004
        %v1940 = vunpack.c.l.b16 %v1005
        %v1941 = vunpack.c.h.b16 %v1005
        %v1942 = vunpack.c.l.b16 %v1006
        %v1943 = vunpack.c.h.b16 %v1006
        %v1944 = vunpack.c.l.b16 %v1007
        %v1945 = vunpack.c.h.b16 %v1007
        %v1946 = vunpack.c.l.b16 %v1008
        %v1947 = vunpack.c.h.b16 %v1008
        %v1948 = vunpack.c.l.b16 %v1009
        %v1949 = vunpack.c.h.b16 %v1009
        %v1950 = vunpack.c.l.b16 %v1010
        %v1951 = vunpack.c.h.b16 %v1010
        %v1952 = vunpack.c.l.b16 %v1011
        %v1953 = vunpack.c.h.b16 %v1011
        %v1954 = vunpack.c.l.b16 %v1012
        %v1955 = vunpack.c.h.b16 %v1012
        %v1956 = vunpack.c.l.b16 %v1013
        %v1957 = vunpack.c.h.b16 %v1013
        %v1958 = vunpack.c.l.b16 %v1014
        %v1959 = vunpack.c.h.b16 %v1014
        %v1960 = vunpack.c.l.b16 %v1015
        %v1961 = vunpack.c.h.b16 %v1015
        %v1962 = vunpack.c.l.b16 %v1016
        %v1963 = vunpack.c.h.b16 %v1016
        %v1964 = vunpack.c.l.b16 %v1017
        %v1965 = vunpack.c.h.b16 %v1017
        %v1966 = vpack.c.b16 %v1470, %v1454
        %v1967 = vpack.c.b16 %v1471, %v1455
        %v1968 = vpack.c.b16 %v1472, %v1456
        %v1969 = vpack.c.b16 %v1473, %v1457
        %v1970 = vpack.c.b16 %v1474, %v1458
        %v1971 = vpack.c.b16 %v1475, %v1459
        %v1972 = vpack.c.b16 %v1476, %v1460
        %v1973 = vpack.c.b16 %v1477, %v1461
        %v1974 = vpack.c.b16 %v1478, %v1462
        %v1975 = vpack.c.b16 %v1479, %v1463
        %v1976 = vpack.c.b16 %v1480, %v1464
        %v1977 = vpack.c.b16 %v1481, %v1465
        %v1978 = vpack.c.b16 %v1482, %v1466
        %v1979 = vpack.c.b16 %v1483, %v1467
        %v1980 = vpack.c.b16 %v1484, %v1468
        %v1981 = vpack.c.b16 %v1485, %v1469
        %v1982 = vpack.c.b16 %v1502, %v1486
        %v1983 = vpack.c.b16 %v1503, %v1487
        %v1984 = vpack.c.b16 %v1504, %v1488
        %v1985 = vpack.c.b16 %v1505, %v1489
        %v1986 = vpack.c.b16 %v1506, %v1490
        %v1987 = vpack.c.b16 %v1507, %v1491
        %v1988 = vpack.c.b16 %v1508, %v1492
        %v1989 = vpack.c.b16 %v1509, %v1493
        %v1990 = vpack.c.b16 %v1510, %v1494
        %v1991 = vpack.c.b16 %v1511, %v1495
        %v1992 = vpack.c.b16 %v1512, %v1496
        %v1993 = vpack.c.b16 %v1513, %v1497
        %v1994 = vpack.c.b16 %v1514, %v1498
        %v1995 = vpack.c.b16 %v1515, %v1499
        %v1996 = vpack.c.b16 %v1516, %v1500
        %v1997 = vpack.c.b16 %v1517, %v1501
        %v1998 = vpack.c.b16 %v1534, %v1518
        %v1999 = vpack.c.b16 %v1535, %v1519
        %v2000 = vpack.c.b16 %v1536, %v1520
        %v2001 = vpack.c.b16 %v1537, %v1521
        %v2002 = vpack.c.b16 %v1538, %v1522
        %v2003 = vpack.c.b16 %v1539, %v1523
        %v2004 = vpack.c.b16 %v1540, %v1524
        %v2005 = vpack.c.b16 %v1541, %v1525
        %v2006 = vpack.c.b16 %v1542, %v1526
        %v2007 = vpack.c.b16 %v1543, %v1527
        %v2008 = vpack.c.b16 %v1544, %v1528
        %v2009 = vpack.c.b16 %v1545, %v1529
        %v2010 = vpack.c.b16 %v1546, %v1530
        %v2011 = vpack.c.b16 %v1547, %v1531
        %v2012 = vpack.c.b16 %v1548, %v1532
        %v2013 = vpack.c.b16 %v1549, %v1533
        %v2014 = vpack.c.b16 %v1566, %v1550
        %v2015 = vpack.c.b16 %v1567, %v1551
        %v2016 = vpack.c.b16 %v1568, %v1552
        %v2017 = vpack.c.b16 %v1569, %v1553
        %v2018 = vpack.c.b16 %v1570, %v1554
        %v2019 = vpack.c.b16 %v1571, %v1555
        %v2020 = vpack.c.b16 %v1572, %v1556
        %v2021 = vpack.c.b16 %v1573, %v1557
        %v2022 = vpack.c.b16 %v1574, %v1558
        %v2023 = vpack.c.b16 %v1575, %v1559
        %v2024 = vpack.c.b16 %v1576, %v1560
        %v2025 = vpack.c.b16 %v1577, %v1561
        %v2026 = vpack.c.b16 %v1578, %v1562
        %v2027 = vpack.c.b16 %v1579, %v1563
        %v2028 = vpack.c.b16 %v1580, %v1564
        %v2029 = vpack.c.b16 %v1581, %v1565
        %v2030 = vpack.c.b16 %v1598, %v1582
        %v2031 = vpack.c.b16 %v1599, %v1583
        %v2032 = vpack.c.b16 %v1600, %v1584
        %v2033 = vpack.c.b16 %v1601, %v1585
        %v2034 = vpack.c.b16 %v1602, %v1586
        %v2035 = vpack.c.b16 %v1603, %v1587
        %v2036 = vpack.c.b16 %v1604, %v1588
        %v2037 = vpack.c.b16 %v1605, %v1589
        %v2038 = vpack.c.b16 %v1606, %v1590
        %v2039 = vpack.c.b16 %v1607, %v1591
        %v2040 = vpack.c.b16 %v1608, %v1592
        %v2041 = vpack.c.b16 %v1609, %v1593
        %v2042 = vpack.c.b16 %v1610, %v1594
        %v2043 = vpack.c.b16 %v1611, %v1595
        %v2044 = vpack.c.b16 %v1612, %v1596
        %v2045 = vpack.c.b16 %v1613, %v1597
        %v2046 = vpack.c.b16 %v1630, %v1614
        %v2047 = vpack.c.b16 %v1631, %v1615
        %v2048 = vpack.c.b16 %v1632, %v1616
        %v2049 = vpack.c.b16 %v1633, %v1617
        %v2050 = vpack.c.b16 %v1634, %v1618
        %v2051 = vpack.c.b16 %v1635, %v1619
        %v2052 = vpack.c.b16 %v1636, %v1620
        %v2053 = vpack.c.b16 %v1637, %v1621
        %v2054 = vpack.c.b16 %v1638, %v1622
        %v2055 = vpack.c.b16 %v1639, %v1623
        %v2056 = vpack.c.b16 %v1640, %v1624
        %v2057 = vpack.c.b16 %v1641, %v1625
        %v2058 = vpack.c.b16 %v1642, %v1626
        %v2059 = vpack.c.b16 %v1643, %v1627
        %v2060 = vpack.c.b16 %v1644, %v1628
        %v2061 = vpack.c.b16 %v1645, %v1629
        %v2062 = vpack.c.b16 %v1662, %v1646
        %v2063 = vpack.c.b16 %v1663, %v1647
        %v2064 = vpack.c.b16 %v1664, %v1648
        %v2065 = vpack.c.b16 %v1665, %v1649
        %v2066 = vpack.c.b16 %v1666, %v1650
        %v2067 = vpack.c.b16 %v1667, %v1651
        %v2068 = vpack.c.b16 %v1668, %v1652
        %v2069 = vpack.c.b16 %v1669, %v1653
        %v2070 = vpack.c.b16 %v1670, %v1654
        %v2071 = vpack.c.b16 %v1671, %v1655
        %v2072 = vpack.c.b16 %v1672, %v1656
        %v2073 = vpack.c.b16 %v1673, %v1657
        %v2074 = vpack.c.b16 %v1674, %v1658
        %v2075 = vpack.c.b16 %v1675, %v1659
        %v2076 = vpack.c.b16 %v1676, %v1660
        %v2077 = vpack.c.b16 %v1677, %v1661
        %v2078 = vpack.c.b16 %v1694, %v1678
        %v2079 = vpack.c.b16 %v1695, %v1679
        %v2080 = vpack.c.b16 %v1696, %v1680
        %v2081 = vpack.c.b16 %v1697, %v1681
        %v2082 = vpack.c.b16 %v1698, %v1682
        %v2083 = vpack.c.b16 %v1699, %v1683
        %v2084 = vpack.c.b16 %v1700, %v1684
        %v2085 = vpack.c.b16 %v1701, %v1685
        %v2086 = vpack.c.b16 %v1702, %v1686
        %v2087 = vpack.c.b16 %v1703, %v1687
        %v2088 = vpack.c.b16 %v1704, %v1688
        %v2089 = vpack.c.b16 %v1705, %v1689
        %v2090 = vpack.c.b16 %v1706, %v1690
        %v2091 = vpack.c.b16 %v1707, %v1691
        %v2092 = vpack.c.b16 %v1708, %v1692
        %v2093 = vpack.c.b16 %v1709, %v1693
        %v2094 = vpack.c.b16 %v1726, %v1710
        %v2095 = vpack.c.b16 %v1727, %v1711
        %v2096 = vpack.c.b16 %v1728, %v1712
        %v2097 = vpack.c.b16 %v1729, %v1713
        %v2098 = vpack.c.b16 %v1730, %v1714
        %v2099 = vpack.c.b16 %v1731, %v1715
        %v2100 = vpack.c.b16 %v1732, %v1716
        %v2101 = vpack.c.b16 %v1733, %v1717
        %v2102 = vpack.c.b16 %v1734, %v1718
        %v2103 = vpack.c.b16 %v1735, %v1719
        %v2104 = vpack.c.b16 %v1736, %v1720
        %v2105 = vpack.c.b16 %v1737, %v1721
        %v2106 = vpack.c.b16 %v1738, %v1722
        %v2107 = vpack.c.b16 %v1739, %v1723
        %v2108 = vpack.c.b16 %v1740, %v1724
        %v2109 = vpack.c.b16 %v1741, %v1725
        %v2110 = vpack.c.b16 %v1758, %v1742
        %v2111 = vpack.c.b16 %v1759, %v1743
        %v2112 = vpack.c.b16 %v1760, %v1744
        %v2113 = vpack.c.b16 %v1761, %v1745
        %v2114 = vpack.c.b16 %v1762, %v1746
        %v2115 = vpack.c.b16 %v1763, %v1747
        %v2116 = vpack.c.b16 %v1764, %v1748
        %v2117 = vpack.c.b16 %v1765, %v1749
        %v2118 = vpack.c.b16 %v1766, %v1750
        %v2119 = vpack.c.b16 %v1767, %v1751
        %v2120 = vpack.c.b16 %v1768, %v1752
        %v2121 = vpack.c.b16 %v1769, %v1753
        %v2122 = vpack.c.b16 %v1770, %v1754
        %v2123 = vpack.c.b16 %v1771, %v1755
        %v2124 = vpack.c.b16 %v1772, %v1756
        %v2125 = vpack.c.b16 %v1773, %v1757
        %v2126 = vpack.c.b16 %v1790, %v1774
        %v2127 = vpack.c.b16 %v1791, %v1775
        %v2128 = vpack.c.b16 %v1792, %v1776
        %v2129 = vpack.c.b16 %v1793, %v1777
        %v2130 = vpack.c.b16 %v1794, %v1778
        %v2131 = vpack.c.b16 %v1795, %v1779
        %v2132 = vpack.c.b16 %v1796, %v1780
        %v2133 = vpack.c.b16 %v1797, %v1781
        %v2134 = vpack.c.b16 %v1798, %v1782
        %v2135 = vpack.c.b16 %v1799, %v1783
        %v2136 = vpack.c.b16 %v1800, %v1784
        %v2137 = vpack.c.b16 %v1801, %v1785
        %v2138 = vpack.c.b16 %v1802, %v1786
        %v2139 = vpack.c.b16 %v1803, %v1787
        %v2140 = vpack.c.b16 %v1804, %v1788
        %v2141 = vpack.c.b16 %v1805, %v1789
        %v2142 = vpack.c.b16 %v1822, %v1806
        %v2143 = vpack.c.b16 %v1823, %v1807
        %v2144 = vpack.c.b16 %v1824, %v1808
        %v2145 = vpack.c.b16 %v1825, %v1809
        %v2146 = vpack.c.b16 %v1826, %v1810
        %v2147 = vpack.c.b16 %v1827, %v1811
        %v2148 = vpack.c.b16 %v1828, %v1812
        %v2149 = vpack.c.b16 %v1829, %v1813
        %v2150 = vpack.c.b16 %v1830, %v1814
        %v2151 = vpack.c.b16 %v1831, %v1815
        %v2152 = vpack.c.b16 %v1832, %v1816
        %v2153 = vpack.c.b16 %v1833, %v1817
        %v2154 = vpack.c.b16 %v1834, %v1818
        %v2155 = vpack.c.b16 %v1835, %v1819
        %v2156 = vpack.c.b16 %v1836, %v1820
        %v2157 = vpack.c.b16 %v1837, %v1821
        %v2158 = vpack.c.b16 %v1854, %v1838
        %v2159 = vpack.c.b16 %v1855, %v1839
        %v2160 = vpack.c.b16 %v1856, %v1840
        %v2161 = vpack.c.b16 %v1857, %v1841
        %v2162 = vpack.c.b16 %v1858, %v1842
        %v2163 = vpack.c.b16 %v1859, %v1843
        %v2164 = vpack.c.b16 %v1860, %v1844
        %v2165 = vpack.c.b16 %v1861, %v1845
        %v2166 = vpack.c.b16 %v1862, %v1846
        %v2167 = vpack.c.b16 %v1863, %v1847
        %v2168 = vpack.c.b16 %v1864, %v1848
        %v2169 = vpack.c.b16 %v1865, %v1849
        %v2170 = vpack.c.b16 %v1866, %v1850
        %v2171 = vpack.c.b16 %v1867, %v1851
        %v2172 = vpack.c.b16 %v1868, %v1852
        %v2173 = vpack.c.b16 %v1869, %v1853
        %v2174 = vpack.c.b16 %v1886, %v1870
        %v2175 = vpack.c.b16 %v1887, %v1871
        %v2176 = vpack.c.b16 %v1888, %v1872
        %v2177 = vpack.c.b16 %v1889, %v1873
        %v2178 = vpack.c.b16 %v1890, %v1874
        %v2179 = vpack.c.b16 %v1891, %v1875
        %v2180 = vpack.c.b16 %v1892, %v1876
        %v2181 = vpack.c.b16 %v1893, %v1877
        %v2182 = vpack.c.b16 %v1894, %v1878
        %v2183 = vpack.c.b16 %v1895, %v1879
        %v2184 = vpack.c.b16 %v1896, %v1880
        %v2185 = vpack.c.b16 %v1897, %v1881
        %v2186 = vpack.c.b16 %v1898, %v1882
        %v2187 = vpack.c.b16 %v1899, %v1883
        %v2188 = vpack.c.b16 %v1900, %v1884
        %v2189 = vpack.c.b16 %v1901, %v1885
        %v2190 = vpack.c.b16 %v1918, %v1902
        %v2191 = vpack.c.b16 %v1919, %v1903
        %v2192 = vpack.c.b16 %v1920, %v1904
        %v2193 = vpack.c.b16 %v1921, %v1905
        %v2194 = vpack.c.b16 %v1922, %v1906
        %v2195 = vpack.c.b16 %v1923, %v1907
        %v2196 = vpack.c.b16 %v1924, %v1908
        %v2197 = vpack.c.b16 %v1925, %v1909
        %v2198 = vpack.c.b16 %v1926, %v1910
        %v2199 = vpack.c.b16 %v1927, %v1911
        %v2200 = vpack.c.b16 %v1928, %v1912
        %v2201 = vpack.c.b16 %v1929, %v1913
        %v2202 = vpack.c.b16 %v1930, %v1914
        %v2203 = vpack.c.b16 %v1931, %v1915
        %v2204 = vpack.c.b16 %v1932, %v1916
        %v2205 = vpack.c.b16 %v1933, %v1917
        %v2206 = vpack.c.b16 %v1950, %v1934
        %v2207 = vpack.c.b16 %v1951, %v1935
        %v2208 = vpack.c.b16 %v1952, %v1936
        %v2209 = vpack.c.b16 %v1953, %v1937
        %v2210 = vpack.c.b16 %v1954, %v1938
        %v2211 = vpack.c.b16 %v1955, %v1939
        %v2212 = vpack.c.b16 %v1956, %v1940
        %v2213 = vpack.c.b16 %v1957, %v1941
        %v2214 = vpack.c.b16 %v1958, %v1942
        %v2215 = vpack.c.b16 %v1959, %v1943
        %v2216 = vpack.c.b16 %v1960, %v1944
        %v2217 = vpack.c.b16 %v1961, %v1945
        %v2218 = vpack.c.b16 %v1962, %v1946
        %v2219 = vpack.c.b16 %v1963, %v1947
        %v2220 = vpack.c.b16 %v1964, %v1948
        %v2221 = vpack.c.b16 %v1965, %v1949
        %2478 = vmatprep.subr.bf16.mxu0 %v1967
        %2479 = vmatpush1.bf16.msra.mxu0 %v1966
        %2480 = vmatprep.subr.bf16.mxu0 %v1983
        %2481 = vmatpush1.bf16.msra.mxu0 %v1982
        %2482 = vmatprep.subr.bf16.mxu0 %v1999
        %2483 = vmatpush1.bf16.msra.mxu0 %v1998
        %2484 = vmatprep.subr.bf16.mxu0 %v2015
        %2485 = vmatpush1.bf16.msra.mxu0 %v2014
        %2486 = vmatprep.subr.bf16.mxu0 %v2031
        %2487 = vmatpush1.bf16.msra.mxu0 %v2030
        %2488 = vmatprep.subr.bf16.mxu0 %v2047
        %2489 = vmatpush1.bf16.msra.mxu0 %v2046
        %2490 = vmatprep.subr.bf16.mxu0 %v2063
        %2491 = vmatpush1.bf16.msra.mxu0 %v2062
        %2492 = vmatprep.subr.bf16.mxu0 %v2079
        %2493 = vmatpush1.bf16.msra.mxu0 %v2078
        %2494 = vmatprep.subr.bf16.mxu0 %v2095
        %2495 = vmatpush1.bf16.msra.mxu0 %v2094
        %2496 = vmatprep.subr.bf16.mxu0 %v2111
        %2497 = vmatpush1.bf16.msra.mxu0 %v2110
        %2498 = vmatprep.subr.bf16.mxu0 %v2127
        %2499 = vmatpush1.bf16.msra.mxu0 %v2126
        %2500 = vmatprep.subr.bf16.mxu0 %v2143
        %2501 = vmatpush1.bf16.msra.mxu0 %v2142
        %2502 = vmatprep.subr.bf16.mxu0 %v2159
        %2503 = vmatpush1.bf16.msra.mxu0 %v2158
        %2504 = vmatprep.subr.bf16.mxu0 %v2175
        %2505 = vmatpush1.bf16.msra.mxu0 %v2174
        %2506 = vmatprep.subr.bf16.mxu0 %v2191
        %2507 = vmatpush1.bf16.msra.mxu0 %v2190
        %2508 = vmatprep.subr.bf16.mxu0 %v2207
        %2509 = vmatpush1.bf16.msra.mxu0 %v2206
        %2510 = vmatprep.mubr.bf16.mxu0 %v1195
        %2511 = vmatmul.mubr.bf16.gmra.mrb[0].mxu0 %v1194
        %v2512 = vpop.f32.mrb[0].mxu0
        %v2513 = vadd.f32 %v1175, %v2512
        %v2514 = vpop.f32.mrb[0].mxu0
        %v2515 = vadd.f32 %v1176, %v2514
        %v2516 = vpop.f32.mrb[0].mxu0
        %v2517 = vpop.f32.mrb[0].mxu0
        %2518 = vdwg.mxu0
        %2519 = vmatprep.subr.bf16.mxu0 %v1969
        %2520 = vmatpush1.bf16.msra.mxu0 %v1968
        %2521 = vmatprep.subr.bf16.mxu0 %v1985
        %2522 = vmatpush1.bf16.msra.mxu0 %v1984
        %2523 = vmatprep.subr.bf16.mxu0 %v2001
        %2524 = vmatpush1.bf16.msra.mxu0 %v2000
        %2525 = vmatprep.subr.bf16.mxu0 %v2017
        %2526 = vmatpush1.bf16.msra.mxu0 %v2016
        %2527 = vmatprep.subr.bf16.mxu0 %v2033
        %2528 = vmatpush1.bf16.msra.mxu0 %v2032
        %2529 = vmatprep.subr.bf16.mxu0 %v2049
        %2530 = vmatpush1.bf16.msra.mxu0 %v2048
        %2531 = vmatprep.subr.bf16.mxu0 %v2065
        %2532 = vmatpush1.bf16.msra.mxu0 %v2064
        %2533 = vmatprep.subr.bf16.mxu0 %v2081
        %2534 = vmatpush1.bf16.msra.mxu0 %v2080
        %2535 = vmatprep.subr.bf16.mxu0 %v2097
        %2536 = vmatpush1.bf16.msra.mxu0 %v2096
        %2537 = vmatprep.subr.bf16.mxu0 %v2113
        %2538 = vmatpush1.bf16.msra.mxu0 %v2112
        %2539 = vmatprep.subr.bf16.mxu0 %v2129
        %2540 = vmatpush1.bf16.msra.mxu0 %v2128
        %2541 = vmatprep.subr.bf16.mxu0 %v2145
        %2542 = vmatpush1.bf16.msra.mxu0 %v2144
        %2543 = vmatprep.subr.bf16.mxu0 %v2161
        %2544 = vmatpush1.bf16.msra.mxu0 %v2160
        %2545 = vmatprep.subr.bf16.mxu0 %v2177
        %2546 = vmatpush1.bf16.msra.mxu0 %v2176
        %2547 = vmatprep.subr.bf16.mxu0 %v2193
        %2548 = vmatpush1.bf16.msra.mxu0 %v2192
        %2549 = vmatprep.subr.bf16.mxu0 %v2209
        %2550 = vmatpush1.bf16.msra.mxu0 %v2208
        %2551 = vmatprep.mubr.bf16.mxu0 %v1195
        %2552 = vmatmul.mubr.bf16.gmra.mrb[0].mxu0 %v1194
        %v2553 = vpop.f32.mrb[0].mxu0
        %v2554 = vadd.f32 %v1177, %v2553
        %v2555 = vpop.f32.mrb[0].mxu0
        %v2556 = vadd.f32 %v1178, %v2555
        %v2557 = vpop.f32.mrb[0].mxu0
        %v2558 = vpop.f32.mrb[0].mxu0
        %2559 = vdwg.mxu0
        %2560 = vmatprep.subr.bf16.mxu0 %v1971
        %2561 = vmatpush1.bf16.msra.mxu0 %v1970
        %2562 = vmatprep.subr.bf16.mxu0 %v1987
        %2563 = vmatpush1.bf16.msra.mxu0 %v1986
        %2564 = vmatprep.subr.bf16.mxu0 %v2003
        %2565 = vmatpush1.bf16.msra.mxu0 %v2002
        %2566 = vmatprep.subr.bf16.mxu0 %v2019
        %2567 = vmatpush1.bf16.msra.mxu0 %v2018
        %2568 = vmatprep.subr.bf16.mxu0 %v2035
        %2569 = vmatpush1.bf16.msra.mxu0 %v2034
        %2570 = vmatprep.subr.bf16.mxu0 %v2051
        %2571 = vmatpush1.bf16.msra.mxu0 %v2050
        %2572 = vmatprep.subr.bf16.mxu0 %v2067
        %2573 = vmatpush1.bf16.msra.mxu0 %v2066
        %2574 = vmatprep.subr.bf16.mxu0 %v2083
        %2575 = vmatpush1.bf16.msra.mxu0 %v2082
        %2576 = vmatprep.subr.bf16.mxu0 %v2099
        %2577 = vmatpush1.bf16.msra.mxu0 %v2098
        %2578 = vmatprep.subr.bf16.mxu0 %v2115
        %2579 = vmatpush1.bf16.msra.mxu0 %v2114
        %2580 = vmatprep.subr.bf16.mxu0 %v2131
        %2581 = vmatpush1.bf16.msra.mxu0 %v2130
        %2582 = vmatprep.subr.bf16.mxu0 %v2147
        %2583 = vmatpush1.bf16.msra.mxu0 %v2146
        %2584 = vmatprep.subr.bf16.mxu0 %v2163
        %2585 = vmatpush1.bf16.msra.mxu0 %v2162
        %2586 = vmatprep.subr.bf16.mxu0 %v2179
        %2587 = vmatpush1.bf16.msra.mxu0 %v2178
        %2588 = vmatprep.subr.bf16.mxu0 %v2195
        %2589 = vmatpush1.bf16.msra.mxu0 %v2194
        %2590 = vmatprep.subr.bf16.mxu0 %v2211
        %2591 = vmatpush1.bf16.msra.mxu0 %v2210
        %2592 = vmatprep.mubr.bf16.mxu0 %v1195
        %2593 = vmatmul.mubr.bf16.gmra.mrb[0].mxu0 %v1194
        %v2594 = vpop.f32.mrb[0].mxu0
        %v2595 = vadd.f32 %v1179, %v2594
        %v2596 = vpop.f32.mrb[0].mxu0
        %v2597 = vadd.f32 %v1180, %v2596
        %v2598 = vpop.f32.mrb[0].mxu0
        %v2599 = vpop.f32.mrb[0].mxu0
        %2600 = vdwg.mxu0
        %2601 = vmatprep.subr.bf16.mxu0 %v1973
        %2602 = vmatpush1.bf16.msra.mxu0 %v1972
        %2603 = vmatprep.subr.bf16.mxu0 %v1989
        %2604 = vmatpush1.bf16.msra.mxu0 %v1988
        %2605 = vmatprep.subr.bf16.mxu0 %v2005
        %2606 = vmatpush1.bf16.msra.mxu0 %v2004
        %2607 = vmatprep.subr.bf16.mxu0 %v2021
        %2608 = vmatpush1.bf16.msra.mxu0 %v2020
        %2609 = vmatprep.subr.bf16.mxu0 %v2037
        %2610 = vmatpush1.bf16.msra.mxu0 %v2036
        %2611 = vmatprep.subr.bf16.mxu0 %v2053
        %2612 = vmatpush1.bf16.msra.mxu0 %v2052
        %2613 = vmatprep.subr.bf16.mxu0 %v2069
        %2614 = vmatpush1.bf16.msra.mxu0 %v2068
        %2615 = vmatprep.subr.bf16.mxu0 %v2085
        %2616 = vmatpush1.bf16.msra.mxu0 %v2084
        %2617 = vmatprep.subr.bf16.mxu0 %v2101
        %2618 = vmatpush1.bf16.msra.mxu0 %v2100
        %2619 = vmatprep.subr.bf16.mxu0 %v2117
        %2620 = vmatpush1.bf16.msra.mxu0 %v2116
        %2621 = vmatprep.subr.bf16.mxu0 %v2133
        %2622 = vmatpush1.bf16.msra.mxu0 %v2132
        %2623 = vmatprep.subr.bf16.mxu0 %v2149
        %2624 = vmatpush1.bf16.msra.mxu0 %v2148
        %2625 = vmatprep.subr.bf16.mxu0 %v2165
        %2626 = vmatpush1.bf16.msra.mxu0 %v2164
        %2627 = vmatprep.subr.bf16.mxu0 %v2181
        %2628 = vmatpush1.bf16.msra.mxu0 %v2180
        %2629 = vmatprep.subr.bf16.mxu0 %v2197
        %2630 = vmatpush1.bf16.msra.mxu0 %v2196
        %2631 = vmatprep.subr.bf16.mxu0 %v2213
        %2632 = vmatpush1.bf16.msra.mxu0 %v2212
        %2633 = vmatprep.mubr.bf16.mxu0 %v1195
        %2634 = vmatmul.mubr.bf16.gmra.mrb[0].mxu0 %v1194
        %v2635 = vpop.f32.mrb[0].mxu0
        %v2636 = vadd.f32 %v1181, %v2635
        %v2637 = vpop.f32.mrb[0].mxu0
        %v2638 = vadd.f32 %v1182, %v2637
        %v2639 = vpop.f32.mrb[0].mxu0
        %v2640 = vpop.f32.mrb[0].mxu0
        %2641 = vdwg.mxu0
        %2642 = vmatprep.subr.bf16.mxu0 %v1975
        %2643 = vmatpush1.bf16.msra.mxu0 %v1974
        %2644 = vmatprep.subr.bf16.mxu0 %v1991
        %2645 = vmatpush1.bf16.msra.mxu0 %v1990
        %2646 = vmatprep.subr.bf16.mxu0 %v2007
        %2647 = vmatpush1.bf16.msra.mxu0 %v2006
        %2648 = vmatprep.subr.bf16.mxu0 %v2023
        %2649 = vmatpush1.bf16.msra.mxu0 %v2022
        %2650 = vmatprep.subr.bf16.mxu0 %v2039
        %2651 = vmatpush1.bf16.msra.mxu0 %v2038
        %2652 = vmatprep.subr.bf16.mxu0 %v2055
        %2653 = vmatpush1.bf16.msra.mxu0 %v2054
        %2654 = vmatprep.subr.bf16.mxu0 %v2071
        %2655 = vmatpush1.bf16.msra.mxu0 %v2070
        %2656 = vmatprep.subr.bf16.mxu0 %v2087
        %2657 = vmatpush1.bf16.msra.mxu0 %v2086
        %2658 = vmatprep.subr.bf16.mxu0 %v2103
        %2659 = vmatpush1.bf16.msra.mxu0 %v2102
        %2660 = vmatprep.subr.bf16.mxu0 %v2119
        %2661 = vmatpush1.bf16.msra.mxu0 %v2118
        %2662 = vmatprep.subr.bf16.mxu0 %v2135
        %2663 = vmatpush1.bf16.msra.mxu0 %v2134
        %2664 = vmatprep.subr.bf16.mxu0 %v2151
        %2665 = vmatpush1.bf16.msra.mxu0 %v2150
        %2666 = vmatprep.subr.bf16.mxu0 %v2167
        %2667 = vmatpush1.bf16.msra.mxu0 %v2166
        %2668 = vmatprep.subr.bf16.mxu0 %v2183
        %2669 = vmatpush1.bf16.msra.mxu0 %v2182
        %2670 = vmatprep.subr.bf16.mxu0 %v2199
        %2671 = vmatpush1.bf16.msra.mxu0 %v2198
        %2672 = vmatprep.subr.bf16.mxu0 %v2215
        %2673 = vmatpush1.bf16.msra.mxu0 %v2214
        %2674 = vmatprep.mubr.bf16.mxu0 %v1195
        %2675 = vmatmul.mubr.bf16.gmra.mrb[0].mxu0 %v1194
        %v2676 = vpop.f32.mrb[0].mxu0
        %v2677 = vadd.f32 %v1183, %v2676
        %v2678 = vpop.f32.mrb[0].mxu0
        %v2679 = vadd.f32 %v1184, %v2678
        %v2680 = vpop.f32.mrb[0].mxu0
        %v2681 = vpop.f32.mrb[0].mxu0
        %2682 = vdwg.mxu0
        %2683 = vmatprep.subr.bf16.mxu0 %v1977
        %2684 = vmatpush1.bf16.msra.mxu0 %v1976
        %2685 = vmatprep.subr.bf16.mxu0 %v1993
        %2686 = vmatpush1.bf16.msra.mxu0 %v1992
        %2687 = vmatprep.subr.bf16.mxu0 %v2009
        %2688 = vmatpush1.bf16.msra.mxu0 %v2008
        %2689 = vmatprep.subr.bf16.mxu0 %v2025
        %2690 = vmatpush1.bf16.msra.mxu0 %v2024
        %2691 = vmatprep.subr.bf16.mxu0 %v2041
        %2692 = vmatpush1.bf16.msra.mxu0 %v2040
        %2693 = vmatprep.subr.bf16.mxu0 %v2057
        %2694 = vmatpush1.bf16.msra.mxu0 %v2056
        %2695 = vmatprep.subr.bf16.mxu0 %v2073
        %2696 = vmatpush1.bf16.msra.mxu0 %v2072
        %2697 = vmatprep.subr.bf16.mxu0 %v2089
        %2698 = vmatpush1.bf16.msra.mxu0 %v2088
        %2699 = vmatprep.subr.bf16.mxu0 %v2105
        %2700 = vmatpush1.bf16.msra.mxu0 %v2104
        %2701 = vmatprep.subr.bf16.mxu0 %v2121
        %2702 = vmatpush1.bf16.msra.mxu0 %v2120
        %2703 = vmatprep.subr.bf16.mxu0 %v2137
        %2704 = vmatpush1.bf16.msra.mxu0 %v2136
        %2705 = vmatprep.subr.bf16.mxu0 %v2153
        %2706 = vmatpush1.bf16.msra.mxu0 %v2152
        %2707 = vmatprep.subr.bf16.mxu0 %v2169
        %2708 = vmatpush1.bf16.msra.mxu0 %v2168
        %2709 = vmatprep.subr.bf16.mxu0 %v2185
        %2710 = vmatpush1.bf16.msra.mxu0 %v2184
        %2711 = vmatprep.subr.bf16.mxu0 %v2201
        %2712 = vmatpush1.bf16.msra.mxu0 %v2200
        %2713 = vmatprep.subr.bf16.mxu0 %v2217
        %2714 = vmatpush1.bf16.msra.mxu0 %v2216
        %2715 = vmatprep.mubr.bf16.mxu0 %v1195
        %2716 = vmatmul.mubr.bf16.gmra.mrb[0].mxu0 %v1194
        %v2717 = vpop.f32.mrb[0].mxu0
        %v2718 = vadd.f32 %v1185, %v2717
        %v2719 = vpop.f32.mrb[0].mxu0
        %v2720 = vadd.f32 %v1186, %v2719
        %v2721 = vpop.f32.mrb[0].mxu0
        %v2722 = vpop.f32.mrb[0].mxu0
        %2723 = vdwg.mxu0
        %2724 = vmatprep.subr.bf16.mxu0 %v1979
        %2725 = vmatpush1.bf16.msra.mxu0 %v1978
        %2726 = vmatprep.subr.bf16.mxu0 %v1995
        %2727 = vmatpush1.bf16.msra.mxu0 %v1994
        %2728 = vmatprep.subr.bf16.mxu0 %v2011
        %2729 = vmatpush1.bf16.msra.mxu0 %v2010
        %2730 = vmatprep.subr.bf16.mxu0 %v2027
        %2731 = vmatpush1.bf16.msra.mxu0 %v2026
        %2732 = vmatprep.subr.bf16.mxu0 %v2043
        %2733 = vmatpush1.bf16.msra.mxu0 %v2042
        %2734 = vmatprep.subr.bf16.mxu0 %v2059
        %2735 = vmatpush1.bf16.msra.mxu0 %v2058
        %2736 = vmatprep.subr.bf16.mxu0 %v2075
        %2737 = vmatpush1.bf16.msra.mxu0 %v2074
        %2738 = vmatprep.subr.bf16.mxu0 %v2091
        %2739 = vmatpush1.bf16.msra.mxu0 %v2090
        %2740 = vmatprep.subr.bf16.mxu0 %v2107
        %2741 = vmatpush1.bf16.msra.mxu0 %v2106
        %2742 = vmatprep.subr.bf16.mxu0 %v2123
        %2743 = vmatpush1.bf16.msra.mxu0 %v2122
        %2744 = vmatprep.subr.bf16.mxu0 %v2139
        %2745 = vmatpush1.bf16.msra.mxu0 %v2138
        %2746 = vmatprep.subr.bf16.mxu0 %v2155
        %2747 = vmatpush1.bf16.msra.mxu0 %v2154
        %2748 = vmatprep.subr.bf16.mxu0 %v2171
        %2749 = vmatpush1.bf16.msra.mxu0 %v2170
        %2750 = vmatprep.subr.bf16.mxu0 %v2187
        %2751 = vmatpush1.bf16.msra.mxu0 %v2186
        %2752 = vmatprep.subr.bf16.mxu0 %v2203
        %2753 = vmatpush1.bf16.msra.mxu0 %v2202
        %2754 = vmatprep.subr.bf16.mxu0 %v2219
        %2755 = vmatpush1.bf16.msra.mxu0 %v2218
        %2756 = vmatprep.mubr.bf16.mxu0 %v1195
        %2757 = vmatmul.mubr.bf16.gmra.mrb[0].mxu0 %v1194
        %v2758 = vpop.f32.mrb[0].mxu0
        %v2759 = vadd.f32 %v1187, %v2758
        %v2760 = vpop.f32.mrb[0].mxu0
        %v2761 = vadd.f32 %v1188, %v2760
        %v2762 = vpop.f32.mrb[0].mxu0
        %v2763 = vpop.f32.mrb[0].mxu0
        %2764 = vdwg.mxu0
        %2765 = vmatprep.subr.bf16.mxu0 %v1981
        %2766 = vmatpush1.bf16.msra.mxu0 %v1980
        %2767 = vmatprep.subr.bf16.mxu0 %v1997
        %2768 = vmatpush1.bf16.msra.mxu0 %v1996
        %2769 = vmatprep.subr.bf16.mxu0 %v2013
        %2770 = vmatpush1.bf16.msra.mxu0 %v2012
        %2771 = vmatprep.subr.bf16.mxu0 %v2029
        %2772 = vmatpush1.bf16.msra.mxu0 %v2028
        %2773 = vmatprep.subr.bf16.mxu0 %v2045
        %2774 = vmatpush1.bf16.msra.mxu0 %v2044
        %2775 = vmatprep.subr.bf16.mxu0 %v2061
        %2776 = vmatpush1.bf16.msra.mxu0 %v2060
        %2777 = vmatprep.subr.bf16.mxu0 %v2077
        %2778 = vmatpush1.bf16.msra.mxu0 %v2076
        %2779 = vmatprep.subr.bf16.mxu0 %v2093
        %2780 = vmatpush1.bf16.msra.mxu0 %v2092
        %2781 = vmatprep.subr.bf16.mxu0 %v2109
        %2782 = vmatpush1.bf16.msra.mxu0 %v2108
        %2783 = vmatprep.subr.bf16.mxu0 %v2125
        %2784 = vmatpush1.bf16.msra.mxu0 %v2124
        %2785 = vmatprep.subr.bf16.mxu0 %v2141
        %2786 = vmatpush1.bf16.msra.mxu0 %v2140
        %2787 = vmatprep.subr.bf16.mxu0 %v2157
        %2788 = vmatpush1.bf16.msra.mxu0 %v2156
        %2789 = vmatprep.subr.bf16.mxu0 %v2173
        %2790 = vmatpush1.bf16.msra.mxu0 %v2172
        %2791 = vmatprep.subr.bf16.mxu0 %v2189
        %2792 = vmatpush1.bf16.msra.mxu0 %v2188
        %2793 = vmatprep.subr.bf16.mxu0 %v2205
        %2794 = vmatpush1.bf16.msra.mxu0 %v2204
        %2795 = vmatprep.subr.bf16.mxu0 %v2221
        %2796 = vmatpush1.bf16.msra.mxu0 %v2220
        %2797 = vmatprep.mubr.bf16.mxu0 %v1195
        %2798 = vmatmul.mubr.bf16.gmra.mrb[0].mxu0 %v1194
        %v2799 = vpop.f32.mrb[0].mxu0
        %v2800 = vadd.f32 %v1189, %v2799
        %v2801 = vpop.f32.mrb[0].mxu0
        %v2802 = vadd.f32 %v1190, %v2801
        %v2803 = vpop.f32.mrb[0].mxu0
        %v2804 = vpop.f32.mrb[0].mxu0
        %2805 = vdwg.mxu0
        %2806 = vset.pattern.permute.xlu0 1
        %2807 = vperm.xlu0 %2806, %v761
        %v2808 = vpop.permute.xlu0 %2807
        %v2810 = vlaneseq
        %v2811 = vshrl.u32 %v2810, 7
        %v2812 = vsub.s32 1, %v2811
        %v2813 = vrot.slane %v1018, %v2812
        %v2814 = vlaneseq
        %v2815 = vshrl.u32 %v2814, 7
        %v2816 = vsub.s32 3, %v2815
        %v2817 = vrot.slane %v1018, %v2816
        %v2818 = vlaneseq
        %v2819 = vshrl.u32 %v2818, 7
        %v2820 = vsub.s32 5, %v2819
        %v2821 = vrot.slane %v1018, %v2820
        %v2822 = vlaneseq
        %v2823 = vshrl.u32 %v2822, 7
        %v2824 = vsub.s32 7, %v2823
        %v2825 = vrot.slane %v1018, %v2824
        %v2826 = vlaneseq
        %v2827 = vshrl.u32 %v2826, 7
        %v2828 = vsub.s32 1, %v2827
        %v2829 = vrot.slane %v1019, %v2828
        %v2830 = vlaneseq
        %v2831 = vshrl.u32 %v2830, 7
        %v2832 = vsub.s32 3, %v2831
        %v2833 = vrot.slane %v1019, %v2832
        %v2834 = vlaneseq
        %v2835 = vshrl.u32 %v2834, 7
        %v2836 = vsub.s32 5, %v2835
        %v2837 = vrot.slane %v1019, %v2836
        %v2838 = vlaneseq
        %v2839 = vshrl.u32 %v2838, 7
        %v2840 = vsub.s32 7, %v2839
        %v2841 = vrot.slane %v1019, %v2840
        %v2842 = vlaneseq
        %v2843 = vshrl.u32 %v2842, 7
        %v2844 = vsub.s32 1, %v2843
        %v2845 = vrot.slane %v1020, %v2844
        %v2846 = vlaneseq
        %v2847 = vshrl.u32 %v2846, 7
        %v2848 = vsub.s32 3, %v2847
        %v2849 = vrot.slane %v1020, %v2848
        %v2850 = vlaneseq
        %v2851 = vshrl.u32 %v2850, 7
        %v2852 = vsub.s32 5, %v2851
        %v2853 = vrot.slane %v1020, %v2852
        %v2854 = vlaneseq
        %v2855 = vshrl.u32 %v2854, 7
        %v2856 = vsub.s32 7, %v2855
        %v2857 = vrot.slane %v1020, %v2856
        %v2858 = vlaneseq
        %v2859 = vshrl.u32 %v2858, 7
        %v2860 = vsub.s32 1, %v2859
        %v2861 = vrot.slane %v1021, %v2860
        %v2862 = vlaneseq
        %v2863 = vshrl.u32 %v2862, 7
        %v2864 = vsub.s32 3, %v2863
        %v2865 = vrot.slane %v1021, %v2864
        %v2866 = vlaneseq
        %v2867 = vshrl.u32 %v2866, 7
        %v2868 = vsub.s32 5, %v2867
        %v2869 = vrot.slane %v1021, %v2868
        %v2870 = vlaneseq
        %v2871 = vshrl.u32 %v2870, 7
        %v2872 = vsub.s32 7, %v2871
        %v2873 = vrot.slane %v1021, %v2872
        %v2890 = vlaneseq
        %v2891 = vshrl.u32 %v2890, 7
        %v2892 = vsub.s32 1, %v2891
        %v2893 = vrot.slane %v2813, %v2892
        %v2894 = vlaneseq
        %v2895 = vshrl.u32 %v2894, 7
        %v2896 = vsub.s32 1, %v2895
        %v2897 = vrot.slane %v2817, %v2896
        %v2898 = vlaneseq
        %v2899 = vshrl.u32 %v2898, 7
        %v2900 = vsub.s32 1, %v2899
        %v2901 = vrot.slane %v2821, %v2900
        %v2902 = vlaneseq
        %v2903 = vshrl.u32 %v2902, 7
        %v2904 = vsub.s32 1, %v2903
        %v2905 = vrot.slane %v2825, %v2904
        %v2906 = vlaneseq
        %v2907 = vshrl.u32 %v2906, 7
        %v2908 = vsub.s32 1, %v2907
        %v2909 = vrot.slane %v2829, %v2908
        %v2910 = vlaneseq
        %v2911 = vshrl.u32 %v2910, 7
        %v2912 = vsub.s32 1, %v2911
        %v2913 = vrot.slane %v2833, %v2912
        %v2914 = vlaneseq
        %v2915 = vshrl.u32 %v2914, 7
        %v2916 = vsub.s32 1, %v2915
        %v2917 = vrot.slane %v2837, %v2916
        %v2918 = vlaneseq
        %v2919 = vshrl.u32 %v2918, 7
        %v2920 = vsub.s32 1, %v2919
        %v2921 = vrot.slane %v2841, %v2920
        %v2922 = vlaneseq
        %v2923 = vshrl.u32 %v2922, 7
        %v2924 = vsub.s32 1, %v2923
        %v2925 = vrot.slane %v2845, %v2924
        %v2926 = vlaneseq
        %v2927 = vshrl.u32 %v2926, 7
        %v2928 = vsub.s32 1, %v2927
        %v2929 = vrot.slane %v2849, %v2928
        %v2930 = vlaneseq
        %v2931 = vshrl.u32 %v2930, 7
        %v2932 = vsub.s32 1, %v2931
        %v2933 = vrot.slane %v2853, %v2932
        %v2934 = vlaneseq
        %v2935 = vshrl.u32 %v2934, 7
        %v2936 = vsub.s32 1, %v2935
        %v2937 = vrot.slane %v2857, %v2936
        %v2938 = vlaneseq
        %v2939 = vshrl.u32 %v2938, 7
        %v2940 = vsub.s32 1, %v2939
        %v2941 = vrot.slane %v2861, %v2940
        %v2942 = vlaneseq
        %v2943 = vshrl.u32 %v2942, 7
        %v2944 = vsub.s32 1, %v2943
        %v2945 = vrot.slane %v2865, %v2944
        %v2946 = vlaneseq
        %v2947 = vshrl.u32 %v2946, 7
        %v2948 = vsub.s32 1, %v2947
        %v2949 = vrot.slane %v2869, %v2948
        %v2950 = vlaneseq
        %v2951 = vshrl.u32 %v2950, 7
        %v2952 = vsub.s32 1, %v2951
        %v2953 = vrot.slane %v2873, %v2952
        %v2954 = vmul.f32 %v2808, %v2893
        %v2955 = vmul.f32 %v2808, %v2897
        %v2956 = vmul.f32 %v2808, %v2901
        %v2957 = vmul.f32 %v2808, %v2905
        %v2958 = vmul.f32 %v2808, %v2909
        %v2959 = vmul.f32 %v2808, %v2913
        %v2960 = vmul.f32 %v2808, %v2917
        %v2961 = vmul.f32 %v2808, %v2921
        %v2962 = vmul.f32 %v2808, %v2925
        %v2963 = vmul.f32 %v2808, %v2929
        %v2964 = vmul.f32 %v2808, %v2933
        %v2965 = vmul.f32 %v2808, %v2937
        %v2966 = vmul.f32 %v2808, %v2941
        %v2967 = vmul.f32 %v2808, %v2945
        %v2968 = vmul.f32 %v2808, %v2949
        %v2969 = vmul.f32 %v2808, %v2953
        %v2970 = vadd.f32 %v2513, %v2954
        %v2971 = vadd.f32 %v2515, %v2955
        %v2972 = vadd.f32 %v2554, %v2956
        %v2973 = vadd.f32 %v2556, %v2957
        %v2974 = vadd.f32 %v2595, %v2958
        %v2975 = vadd.f32 %v2597, %v2959
        %v2976 = vadd.f32 %v2636, %v2960
        %v2977 = vadd.f32 %v2638, %v2961
        %v2978 = vadd.f32 %v2677, %v2962
        %v2979 = vadd.f32 %v2679, %v2963
        %v2980 = vadd.f32 %v2718, %v2964
        %v2981 = vadd.f32 %v2720, %v2965
        %v2982 = vadd.f32 %v2759, %v2966
        %v2983 = vadd.f32 %v2761, %v2967
        %v2984 = vadd.f32 %v2800, %v2968
        %v2985 = vadd.f32 %v2802, %v2969
        %v2986 = vld [vmem:[%s610] sm:$0xff]
        %v2987 = vld [vmem:[%s610 + $0x8] sm:$0xff]
        %v2990 = vlaneseq
        %v2991 = vshrl.u32 %v2990, 7
        %v2992 = vsub.s32 0, %v2991
        %v2993 = vrot.slane %v2986, %v2992
        %v2994 = vlaneseq
        %v2995 = vshrl.u32 %v2994, 7
        %v2996 = vsub.s32 1, %v2995
        %v2997 = vrot.slane %v2986, %v2996
        %v2998 = vlaneseq
        %v2999 = vshrl.u32 %v2998, 7
        %v3000 = vsub.s32 2, %v2999
        %v3001 = vrot.slane %v2986, %v3000
        %v3002 = vlaneseq
        %v3003 = vshrl.u32 %v3002, 7
        %v3004 = vsub.s32 3, %v3003
        %v3005 = vrot.slane %v2986, %v3004
        %v3006 = vlaneseq
        %v3007 = vshrl.u32 %v3006, 7
        %v3008 = vsub.s32 4, %v3007
        %v3009 = vrot.slane %v2986, %v3008
        %v3010 = vlaneseq
        %v3011 = vshrl.u32 %v3010, 7
        %v3012 = vsub.s32 5, %v3011
        %v3013 = vrot.slane %v2986, %v3012
        %v3014 = vlaneseq
        %v3015 = vshrl.u32 %v3014, 7
        %v3016 = vsub.s32 6, %v3015
        %v3017 = vrot.slane %v2986, %v3016
        %v3018 = vlaneseq
        %v3019 = vshrl.u32 %v3018, 7
        %v3020 = vsub.s32 7, %v3019
        %v3021 = vrot.slane %v2986, %v3020
        %v3022 = vlaneseq
        %v3023 = vshrl.u32 %v3022, 7
        %v3024 = vsub.s32 0, %v3023
        %v3025 = vrot.slane %v2987, %v3024
        %v3026 = vlaneseq
        %v3027 = vshrl.u32 %v3026, 7
        %v3028 = vsub.s32 1, %v3027
        %v3029 = vrot.slane %v2987, %v3028
        %v3030 = vlaneseq
        %v3031 = vshrl.u32 %v3030, 7
        %v3032 = vsub.s32 2, %v3031
        %v3033 = vrot.slane %v2987, %v3032
        %v3034 = vlaneseq
        %v3035 = vshrl.u32 %v3034, 7
        %v3036 = vsub.s32 3, %v3035
        %v3037 = vrot.slane %v2987, %v3036
        %v3038 = vlaneseq
        %v3039 = vshrl.u32 %v3038, 7
        %v3040 = vsub.s32 4, %v3039
        %v3041 = vrot.slane %v2987, %v3040
        %v3042 = vlaneseq
        %v3043 = vshrl.u32 %v3042, 7
        %v3044 = vsub.s32 5, %v3043
        %v3045 = vrot.slane %v2987, %v3044
        %v3046 = vlaneseq
        %v3047 = vshrl.u32 %v3046, 7
        %v3048 = vsub.s32 6, %v3047
        %v3049 = vrot.slane %v2987, %v3048
        %v3050 = vlaneseq
        %v3051 = vshrl.u32 %v3050, 7
        %v3052 = vsub.s32 7, %v3051
        %v3053 = vrot.slane %v2987, %v3052
        %v3070 = vadd.f32 %v2970, %v2993
        %v3071 = vadd.f32 %v2971, %v2997
        %v3072 = vadd.f32 %v2972, %v3001
        %v3073 = vadd.f32 %v2973, %v3005
        %v3074 = vadd.f32 %v2974, %v3009
        %v3075 = vadd.f32 %v2975, %v3013
        %v3076 = vadd.f32 %v2976, %v3017
        %v3077 = vadd.f32 %v2977, %v3021
        %v3078 = vadd.f32 %v2978, %v3025
        %v3079 = vadd.f32 %v2979, %v3029
        %v3080 = vadd.f32 %v2980, %v3033
        %v3081 = vadd.f32 %v2981, %v3037
        %v3082 = vadd.f32 %v2982, %v3041
        %v3083 = vadd.f32 %v2983, %v3045
        %v3084 = vadd.f32 %v2984, %v3049
        %v3085 = vadd.f32 %v2985, %v3053
        %vm3086 = vcmp.gt.f32.partialorder %v3070, 0.0
        %vm3087 = vcmp.gt.f32.partialorder %v3071, 0.0
        %vm3088 = vcmp.gt.f32.partialorder %v3072, 0.0
        %vm3089 = vcmp.gt.f32.partialorder %v3073, 0.0
        %vm3090 = vcmp.gt.f32.partialorder %v3074, 0.0
        %vm3091 = vcmp.gt.f32.partialorder %v3075, 0.0
        %vm3092 = vcmp.gt.f32.partialorder %v3076, 0.0
        %vm3093 = vcmp.gt.f32.partialorder %v3077, 0.0
        %vm3094 = vcmp.gt.f32.partialorder %v3078, 0.0
        %vm3095 = vcmp.gt.f32.partialorder %v3079, 0.0
        %vm3096 = vcmp.gt.f32.partialorder %v3080, 0.0
        %vm3097 = vcmp.gt.f32.partialorder %v3081, 0.0
        %vm3098 = vcmp.gt.f32.partialorder %v3082, 0.0
        %vm3099 = vcmp.gt.f32.partialorder %v3083, 0.0
        %vm3100 = vcmp.gt.f32.partialorder %v3084, 0.0
        %vm3101 = vcmp.gt.f32.partialorder %v3085, 0.0
        %v3102 = vmul.f32 %v3070, 0.01
        %v3103 = vmul.f32 %v3071, 0.01
        %v3104 = vmul.f32 %v3072, 0.01
        %v3105 = vmul.f32 %v3073, 0.01
        %v3106 = vmul.f32 %v3074, 0.01
        %v3107 = vmul.f32 %v3075, 0.01
        %v3108 = vmul.f32 %v3076, 0.01
        %v3109 = vmul.f32 %v3077, 0.01
        %v3110 = vmul.f32 %v3078, 0.01
        %v3111 = vmul.f32 %v3079, 0.01
        %v3112 = vmul.f32 %v3080, 0.01
        %v3113 = vmul.f32 %v3081, 0.01
        %v3114 = vmul.f32 %v3082, 0.01
        %v3115 = vmul.f32 %v3083, 0.01
        %v3116 = vmul.f32 %v3084, 0.01
        %v3117 = vmul.f32 %v3085, 0.01
        %v3118 = vsel %vm3086, %v3070, %v3102
        %v3119 = vsel %vm3087, %v3071, %v3103
        %v3120 = vsel %vm3088, %v3072, %v3104
        %v3121 = vsel %vm3089, %v3073, %v3105
        %v3122 = vsel %vm3090, %v3074, %v3106
        %v3123 = vsel %vm3091, %v3075, %v3107
        %v3124 = vsel %vm3092, %v3076, %v3108
        %v3125 = vsel %vm3093, %v3077, %v3109
        %v3126 = vsel %vm3094, %v3078, %v3110
        %v3127 = vsel %vm3095, %v3079, %v3111
        %v3128 = vsel %vm3096, %v3080, %v3112
        %v3129 = vsel %vm3097, %v3081, %v3113
        %v3130 = vsel %vm3098, %v3082, %v3114
        %v3131 = vsel %vm3099, %v3083, %v3115
        %v3132 = vsel %vm3100, %v3084, %v3116
        %v3133 = vsel %vm3101, %v3085, %v3117
        %v3134 = vpack.c.bf16 %v3118, %v3118
        %v3135 = vpack.c.bf16 %v3119, %v3119
        %v3136 = vpack.c.bf16 %v3120, %v3120
        %v3137 = vpack.c.bf16 %v3121, %v3121
        %v3138 = vpack.c.bf16 %v3122, %v3122
        %v3139 = vpack.c.bf16 %v3123, %v3123
        %v3140 = vpack.c.bf16 %v3124, %v3124
        %v3141 = vpack.c.bf16 %v3125, %v3125
        %v3142 = vpack.c.bf16 %v3126, %v3126
        %v3143 = vpack.c.bf16 %v3127, %v3127
        %v3144 = vpack.c.bf16 %v3128, %v3128
        %v3145 = vpack.c.bf16 %v3129, %v3129
        %v3146 = vpack.c.bf16 %v3130, %v3130
        %v3147 = vpack.c.bf16 %v3131, %v3131
        %v3148 = vpack.c.bf16 %v3132, %v3132
        %v3149 = vpack.c.bf16 %v3133, %v3133
        %v3150 = vld [vmem:[%s619] sm:$0xff]
        %v3151 = vld [vmem:[%s619 + $0x8] sm:$0xff]
        %v3152 = vld [vmem:[%s619 + $0x10] sm:$0xff]
        %v3153 = vld [vmem:[%s619 + $0x18] sm:$0xff]
        %v3154 = vld [vmem:[%s619 + $0x20] sm:$0xff]
        %v3155 = vld [vmem:[%s619 + $0x28] sm:$0xff]
        %v3156 = vld [vmem:[%s619 + $0x30] sm:$0xff]
        %v3157 = vld [vmem:[%s619 + $0x38] sm:$0xff]
        %v3158 = vld [vmem:[%s619 + $0x40] sm:$0xff]
        %v3159 = vld [vmem:[%s619 + $0x48] sm:$0xff]
        %v3160 = vld [vmem:[%s619 + $0x50] sm:$0xff]
        %v3161 = vld [vmem:[%s619 + $0x58] sm:$0xff]
        %v3162 = vld [vmem:[%s619 + $0x60] sm:$0xff]
        %v3163 = vld [vmem:[%s619 + $0x68] sm:$0xff]
        %v3164 = vld [vmem:[%s619 + $0x70] sm:$0xff]
        %v3165 = vld [vmem:[%s619 + $0x78] sm:$0xff]
        %v3166 = vld [vmem:[%s619 + $0x80] sm:$0xff]
        %v3167 = vld [vmem:[%s619 + $0x88] sm:$0xff]
        %v3168 = vld [vmem:[%s619 + $0x90] sm:$0xff]
        %v3169 = vld [vmem:[%s619 + $0x98] sm:$0xff]
        %v3170 = vld [vmem:[%s619 + $0xa0] sm:$0xff]
        %v3171 = vld [vmem:[%s619 + $0xa8] sm:$0xff]
        %v3172 = vld [vmem:[%s619 + $0xb0] sm:$0xff]
        %v3173 = vld [vmem:[%s619 + $0xb8] sm:$0xff]
        %v3174 = vld [vmem:[%s619 + $0xc0] sm:$0xff]
        %v3175 = vld [vmem:[%s619 + $0xc8] sm:$0xff]
        %v3176 = vld [vmem:[%s619 + $0xd0] sm:$0xff]
        %v3177 = vld [vmem:[%s619 + $0xd8] sm:$0xff]
        %v3178 = vld [vmem:[%s619 + $0xe0] sm:$0xff]
        %v3179 = vld [vmem:[%s619 + $0xe8] sm:$0xff]
        %v3180 = vld [vmem:[%s619 + $0xf0] sm:$0xff]
        %v3181 = vld [vmem:[%s619 + $0xf8] sm:$0xff]
        %v3182 = vld [vmem:[%s619 + $0x100] sm:$0xff]
        %v3183 = vld [vmem:[%s619 + $0x108] sm:$0xff]
        %v3184 = vld [vmem:[%s619 + $0x110] sm:$0xff]
        %v3185 = vld [vmem:[%s619 + $0x118] sm:$0xff]
        %v3186 = vld [vmem:[%s619 + $0x120] sm:$0xff]
        %v3187 = vld [vmem:[%s619 + $0x128] sm:$0xff]
        %v3188 = vld [vmem:[%s619 + $0x130] sm:$0xff]
        %v3189 = vld [vmem:[%s619 + $0x138] sm:$0xff]
        %v3190 = vld [vmem:[%s619 + $0x140] sm:$0xff]
        %v3191 = vld [vmem:[%s619 + $0x148] sm:$0xff]
        %v3192 = vld [vmem:[%s619 + $0x150] sm:$0xff]
        %v3193 = vld [vmem:[%s619 + $0x158] sm:$0xff]
        %v3194 = vld [vmem:[%s619 + $0x160] sm:$0xff]
        %v3195 = vld [vmem:[%s619 + $0x168] sm:$0xff]
        %v3196 = vld [vmem:[%s619 + $0x170] sm:$0xff]
        %v3197 = vld [vmem:[%s619 + $0x178] sm:$0xff]
        %v3198 = vld [vmem:[%s619 + $0x180] sm:$0xff]
        %v3199 = vld [vmem:[%s619 + $0x188] sm:$0xff]
        %v3200 = vld [vmem:[%s619 + $0x190] sm:$0xff]
        %v3201 = vld [vmem:[%s619 + $0x198] sm:$0xff]
        %v3202 = vld [vmem:[%s619 + $0x1a0] sm:$0xff]
        %v3203 = vld [vmem:[%s619 + $0x1a8] sm:$0xff]
        %v3204 = vld [vmem:[%s619 + $0x1b0] sm:$0xff]
        %v3205 = vld [vmem:[%s619 + $0x1b8] sm:$0xff]
        %v3206 = vld [vmem:[%s619 + $0x1c0] sm:$0xff]
        %v3207 = vld [vmem:[%s619 + $0x1c8] sm:$0xff]
        %v3208 = vld [vmem:[%s619 + $0x1d0] sm:$0xff]
        %v3209 = vld [vmem:[%s619 + $0x1d8] sm:$0xff]
        %v3210 = vld [vmem:[%s619 + $0x1e0] sm:$0xff]
        %v3211 = vld [vmem:[%s619 + $0x1e8] sm:$0xff]
        %v3212 = vld [vmem:[%s619 + $0x1f0] sm:$0xff]
        %v3213 = vld [vmem:[%s619 + $0x1f8] sm:$0xff]
        %v3214 = vld [vmem:[%s619 + $0x200] sm:$0xff]
        %v3215 = vld [vmem:[%s619 + $0x208] sm:$0xff]
        %v3216 = vld [vmem:[%s619 + $0x210] sm:$0xff]
        %v3217 = vld [vmem:[%s619 + $0x218] sm:$0xff]
        %v3218 = vld [vmem:[%s619 + $0x220] sm:$0xff]
        %v3219 = vld [vmem:[%s619 + $0x228] sm:$0xff]
        %v3220 = vld [vmem:[%s619 + $0x230] sm:$0xff]
        %v3221 = vld [vmem:[%s619 + $0x238] sm:$0xff]
        %v3222 = vld [vmem:[%s619 + $0x240] sm:$0xff]
        %v3223 = vld [vmem:[%s619 + $0x248] sm:$0xff]
        %v3224 = vld [vmem:[%s619 + $0x250] sm:$0xff]
        %v3225 = vld [vmem:[%s619 + $0x258] sm:$0xff]
        %v3226 = vld [vmem:[%s619 + $0x260] sm:$0xff]
        %v3227 = vld [vmem:[%s619 + $0x268] sm:$0xff]
        %v3228 = vld [vmem:[%s619 + $0x270] sm:$0xff]
        %v3229 = vld [vmem:[%s619 + $0x278] sm:$0xff]
        %v3230 = vld [vmem:[%s619 + $0x280] sm:$0xff]
        %v3231 = vld [vmem:[%s619 + $0x288] sm:$0xff]
        %v3232 = vld [vmem:[%s619 + $0x290] sm:$0xff]
        %v3233 = vld [vmem:[%s619 + $0x298] sm:$0xff]
        %v3234 = vld [vmem:[%s619 + $0x2a0] sm:$0xff]
        %v3235 = vld [vmem:[%s619 + $0x2a8] sm:$0xff]
        %v3236 = vld [vmem:[%s619 + $0x2b0] sm:$0xff]
        %v3237 = vld [vmem:[%s619 + $0x2b8] sm:$0xff]
        %v3238 = vld [vmem:[%s619 + $0x2c0] sm:$0xff]
        %v3239 = vld [vmem:[%s619 + $0x2c8] sm:$0xff]
        %v3240 = vld [vmem:[%s619 + $0x2d0] sm:$0xff]
        %v3241 = vld [vmem:[%s619 + $0x2d8] sm:$0xff]
        %v3242 = vld [vmem:[%s619 + $0x2e0] sm:$0xff]
        %v3243 = vld [vmem:[%s619 + $0x2e8] sm:$0xff]
        %v3244 = vld [vmem:[%s619 + $0x2f0] sm:$0xff]
        %v3245 = vld [vmem:[%s619 + $0x2f8] sm:$0xff]
        %v3246 = vld [vmem:[%s619 + $0x300] sm:$0xff]
        %v3247 = vld [vmem:[%s619 + $0x308] sm:$0xff]
        %v3248 = vld [vmem:[%s619 + $0x310] sm:$0xff]
        %v3249 = vld [vmem:[%s619 + $0x318] sm:$0xff]
        %v3250 = vld [vmem:[%s619 + $0x320] sm:$0xff]
        %v3251 = vld [vmem:[%s619 + $0x328] sm:$0xff]
        %v3252 = vld [vmem:[%s619 + $0x330] sm:$0xff]
        %v3253 = vld [vmem:[%s619 + $0x338] sm:$0xff]
        %v3254 = vld [vmem:[%s619 + $0x340] sm:$0xff]
        %v3255 = vld [vmem:[%s619 + $0x348] sm:$0xff]
        %v3256 = vld [vmem:[%s619 + $0x350] sm:$0xff]
        %v3257 = vld [vmem:[%s619 + $0x358] sm:$0xff]
        %v3258 = vld [vmem:[%s619 + $0x360] sm:$0xff]
        %v3259 = vld [vmem:[%s619 + $0x368] sm:$0xff]
        %v3260 = vld [vmem:[%s619 + $0x370] sm:$0xff]
        %v3261 = vld [vmem:[%s619 + $0x378] sm:$0xff]
        %v3262 = vld [vmem:[%s619 + $0x380] sm:$0xff]
        %v3263 = vld [vmem:[%s619 + $0x388] sm:$0xff]
        %v3264 = vld [vmem:[%s619 + $0x390] sm:$0xff]
        %v3265 = vld [vmem:[%s619 + $0x398] sm:$0xff]
        %v3266 = vld [vmem:[%s619 + $0x3a0] sm:$0xff]
        %v3267 = vld [vmem:[%s619 + $0x3a8] sm:$0xff]
        %v3268 = vld [vmem:[%s619 + $0x3b0] sm:$0xff]
        %v3269 = vld [vmem:[%s619 + $0x3b8] sm:$0xff]
        %v3270 = vld [vmem:[%s619 + $0x3c0] sm:$0xff]
        %v3271 = vld [vmem:[%s619 + $0x3c8] sm:$0xff]
        %v3272 = vld [vmem:[%s619 + $0x3d0] sm:$0xff]
        %v3273 = vld [vmem:[%s619 + $0x3d8] sm:$0xff]
        %v3274 = vld [vmem:[%s619 + $0x3e0] sm:$0xff]
        %v3275 = vld [vmem:[%s619 + $0x3e8] sm:$0xff]
        %v3276 = vld [vmem:[%s619 + $0x3f0] sm:$0xff]
        %v3277 = vld [vmem:[%s619 + $0x3f8] sm:$0xff]
        %v3278 = vld [vmem:[%s619 + $0x400] sm:$0xff]
        %v3279 = vld [vmem:[%s619 + $0x408] sm:$0xff]
        %v3280 = vld [vmem:[%s619 + $0x410] sm:$0xff]
        %v3281 = vld [vmem:[%s619 + $0x418] sm:$0xff]
        %v3282 = vld [vmem:[%s619 + $0x420] sm:$0xff]
        %v3283 = vld [vmem:[%s619 + $0x428] sm:$0xff]
        %v3284 = vld [vmem:[%s619 + $0x430] sm:$0xff]
        %v3285 = vld [vmem:[%s619 + $0x438] sm:$0xff]
        %v3286 = vld [vmem:[%s619 + $0x440] sm:$0xff]
        %v3287 = vld [vmem:[%s619 + $0x448] sm:$0xff]
        %v3288 = vld [vmem:[%s619 + $0x450] sm:$0xff]
        %v3289 = vld [vmem:[%s619 + $0x458] sm:$0xff]
        %v3290 = vld [vmem:[%s619 + $0x460] sm:$0xff]
        %v3291 = vld [vmem:[%s619 + $0x468] sm:$0xff]
        %v3292 = vld [vmem:[%s619 + $0x470] sm:$0xff]
        %v3293 = vld [vmem:[%s619 + $0x478] sm:$0xff]
        %v3294 = vld [vmem:[%s619 + $0x480] sm:$0xff]
        %v3295 = vld [vmem:[%s619 + $0x488] sm:$0xff]
        %v3296 = vld [vmem:[%s619 + $0x490] sm:$0xff]
        %v3297 = vld [vmem:[%s619 + $0x498] sm:$0xff]
        %v3298 = vld [vmem:[%s619 + $0x4a0] sm:$0xff]
        %v3299 = vld [vmem:[%s619 + $0x4a8] sm:$0xff]
        %v3300 = vld [vmem:[%s619 + $0x4b0] sm:$0xff]
        %v3301 = vld [vmem:[%s619 + $0x4b8] sm:$0xff]
        %v3302 = vld [vmem:[%s619 + $0x4c0] sm:$0xff]
        %v3303 = vld [vmem:[%s619 + $0x4c8] sm:$0xff]
        %v3304 = vld [vmem:[%s619 + $0x4d0] sm:$0xff]
        %v3305 = vld [vmem:[%s619 + $0x4d8] sm:$0xff]
        %v3306 = vld [vmem:[%s619 + $0x4e0] sm:$0xff]
        %v3307 = vld [vmem:[%s619 + $0x4e8] sm:$0xff]
        %v3308 = vld [vmem:[%s619 + $0x4f0] sm:$0xff]
        %v3309 = vld [vmem:[%s619 + $0x4f8] sm:$0xff]
        %v3310 = vld [vmem:[%s619 + $0x500] sm:$0xff]
        %v3311 = vld [vmem:[%s619 + $0x508] sm:$0xff]
        %v3312 = vld [vmem:[%s619 + $0x510] sm:$0xff]
        %v3313 = vld [vmem:[%s619 + $0x518] sm:$0xff]
        %v3314 = vld [vmem:[%s619 + $0x520] sm:$0xff]
        %v3315 = vld [vmem:[%s619 + $0x528] sm:$0xff]
        %v3316 = vld [vmem:[%s619 + $0x530] sm:$0xff]
        %v3317 = vld [vmem:[%s619 + $0x538] sm:$0xff]
        %v3318 = vld [vmem:[%s619 + $0x540] sm:$0xff]
        %v3319 = vld [vmem:[%s619 + $0x548] sm:$0xff]
        %v3320 = vld [vmem:[%s619 + $0x550] sm:$0xff]
        %v3321 = vld [vmem:[%s619 + $0x558] sm:$0xff]
        %v3322 = vld [vmem:[%s619 + $0x560] sm:$0xff]
        %v3323 = vld [vmem:[%s619 + $0x568] sm:$0xff]
        %v3324 = vld [vmem:[%s619 + $0x570] sm:$0xff]
        %v3325 = vld [vmem:[%s619 + $0x578] sm:$0xff]
        %v3326 = vld [vmem:[%s619 + $0x580] sm:$0xff]
        %v3327 = vld [vmem:[%s619 + $0x588] sm:$0xff]
        %v3328 = vld [vmem:[%s619 + $0x590] sm:$0xff]
        %v3329 = vld [vmem:[%s619 + $0x598] sm:$0xff]
        %v3330 = vld [vmem:[%s619 + $0x5a0] sm:$0xff]
        %v3331 = vld [vmem:[%s619 + $0x5a8] sm:$0xff]
        %v3332 = vld [vmem:[%s619 + $0x5b0] sm:$0xff]
        %v3333 = vld [vmem:[%s619 + $0x5b8] sm:$0xff]
        %v3334 = vld [vmem:[%s619 + $0x5c0] sm:$0xff]
        %v3335 = vld [vmem:[%s619 + $0x5c8] sm:$0xff]
        %v3336 = vld [vmem:[%s619 + $0x5d0] sm:$0xff]
        %v3337 = vld [vmem:[%s619 + $0x5d8] sm:$0xff]
        %v3338 = vld [vmem:[%s619 + $0x5e0] sm:$0xff]
        %v3339 = vld [vmem:[%s619 + $0x5e8] sm:$0xff]
        %v3340 = vld [vmem:[%s619 + $0x5f0] sm:$0xff]
        %v3341 = vld [vmem:[%s619 + $0x5f8] sm:$0xff]
        %v3342 = vld [vmem:[%s619 + $0x600] sm:$0xff]
        %v3343 = vld [vmem:[%s619 + $0x608] sm:$0xff]
        %v3344 = vld [vmem:[%s619 + $0x610] sm:$0xff]
        %v3345 = vld [vmem:[%s619 + $0x618] sm:$0xff]
        %v3346 = vld [vmem:[%s619 + $0x620] sm:$0xff]
        %v3347 = vld [vmem:[%s619 + $0x628] sm:$0xff]
        %v3348 = vld [vmem:[%s619 + $0x630] sm:$0xff]
        %v3349 = vld [vmem:[%s619 + $0x638] sm:$0xff]
        %v3350 = vld [vmem:[%s619 + $0x640] sm:$0xff]
        %v3351 = vld [vmem:[%s619 + $0x648] sm:$0xff]
        %v3352 = vld [vmem:[%s619 + $0x650] sm:$0xff]
        %v3353 = vld [vmem:[%s619 + $0x658] sm:$0xff]
        %v3354 = vld [vmem:[%s619 + $0x660] sm:$0xff]
        %v3355 = vld [vmem:[%s619 + $0x668] sm:$0xff]
        %v3356 = vld [vmem:[%s619 + $0x670] sm:$0xff]
        %v3357 = vld [vmem:[%s619 + $0x678] sm:$0xff]
        %v3358 = vld [vmem:[%s619 + $0x680] sm:$0xff]
        %v3359 = vld [vmem:[%s619 + $0x688] sm:$0xff]
        %v3360 = vld [vmem:[%s619 + $0x690] sm:$0xff]
        %v3361 = vld [vmem:[%s619 + $0x698] sm:$0xff]
        %v3362 = vld [vmem:[%s619 + $0x6a0] sm:$0xff]
        %v3363 = vld [vmem:[%s619 + $0x6a8] sm:$0xff]
        %v3364 = vld [vmem:[%s619 + $0x6b0] sm:$0xff]
        %v3365 = vld [vmem:[%s619 + $0x6b8] sm:$0xff]
        %v3366 = vld [vmem:[%s619 + $0x6c0] sm:$0xff]
        %v3367 = vld [vmem:[%s619 + $0x6c8] sm:$0xff]
        %v3368 = vld [vmem:[%s619 + $0x6d0] sm:$0xff]
        %v3369 = vld [vmem:[%s619 + $0x6d8] sm:$0xff]
        %v3370 = vld [vmem:[%s619 + $0x6e0] sm:$0xff]
        %v3371 = vld [vmem:[%s619 + $0x6e8] sm:$0xff]
        %v3372 = vld [vmem:[%s619 + $0x6f0] sm:$0xff]
        %v3373 = vld [vmem:[%s619 + $0x6f8] sm:$0xff]
        %v3374 = vld [vmem:[%s619 + $0x700] sm:$0xff]
        %v3375 = vld [vmem:[%s619 + $0x708] sm:$0xff]
        %v3376 = vld [vmem:[%s619 + $0x710] sm:$0xff]
        %v3377 = vld [vmem:[%s619 + $0x718] sm:$0xff]
        %v3378 = vld [vmem:[%s619 + $0x720] sm:$0xff]
        %v3379 = vld [vmem:[%s619 + $0x728] sm:$0xff]
        %v3380 = vld [vmem:[%s619 + $0x730] sm:$0xff]
        %v3381 = vld [vmem:[%s619 + $0x738] sm:$0xff]
        %v3382 = vld [vmem:[%s619 + $0x740] sm:$0xff]
        %v3383 = vld [vmem:[%s619 + $0x748] sm:$0xff]
        %v3384 = vld [vmem:[%s619 + $0x750] sm:$0xff]
        %v3385 = vld [vmem:[%s619 + $0x758] sm:$0xff]
        %v3386 = vld [vmem:[%s619 + $0x760] sm:$0xff]
        %v3387 = vld [vmem:[%s619 + $0x768] sm:$0xff]
        %v3388 = vld [vmem:[%s619 + $0x770] sm:$0xff]
        %v3389 = vld [vmem:[%s619 + $0x778] sm:$0xff]
        %v3390 = vld [vmem:[%s619 + $0x780] sm:$0xff]
        %v3391 = vld [vmem:[%s619 + $0x788] sm:$0xff]
        %v3392 = vld [vmem:[%s619 + $0x790] sm:$0xff]
        %v3393 = vld [vmem:[%s619 + $0x798] sm:$0xff]
        %v3394 = vld [vmem:[%s619 + $0x7a0] sm:$0xff]
        %v3395 = vld [vmem:[%s619 + $0x7a8] sm:$0xff]
        %v3396 = vld [vmem:[%s619 + $0x7b0] sm:$0xff]
        %v3397 = vld [vmem:[%s619 + $0x7b8] sm:$0xff]
        %v3398 = vld [vmem:[%s619 + $0x7c0] sm:$0xff]
        %v3399 = vld [vmem:[%s619 + $0x7c8] sm:$0xff]
        %v3400 = vld [vmem:[%s619 + $0x7d0] sm:$0xff]
        %v3401 = vld [vmem:[%s619 + $0x7d8] sm:$0xff]
        %v3402 = vld [vmem:[%s619 + $0x7e0] sm:$0xff]
        %v3403 = vld [vmem:[%s619 + $0x7e8] sm:$0xff]
        %v3404 = vld [vmem:[%s619 + $0x7f0] sm:$0xff]
        %v3405 = vld [vmem:[%s619 + $0x7f8] sm:$0xff]
        %v3406 = vld [vmem:[%s619 + $0x800] sm:$0xff]
        %v3407 = vld [vmem:[%s619 + $0x808] sm:$0xff]
        %v3408 = vld [vmem:[%s619 + $0x810] sm:$0xff]
        %v3409 = vld [vmem:[%s619 + $0x818] sm:$0xff]
        %v3410 = vld [vmem:[%s619 + $0x820] sm:$0xff]
        %v3411 = vld [vmem:[%s619 + $0x828] sm:$0xff]
        %v3412 = vld [vmem:[%s619 + $0x830] sm:$0xff]
        %v3413 = vld [vmem:[%s619 + $0x838] sm:$0xff]
        %v3414 = vld [vmem:[%s619 + $0x840] sm:$0xff]
        %v3415 = vld [vmem:[%s619 + $0x848] sm:$0xff]
        %v3416 = vld [vmem:[%s619 + $0x850] sm:$0xff]
        %v3417 = vld [vmem:[%s619 + $0x858] sm:$0xff]
        %v3418 = vld [vmem:[%s619 + $0x860] sm:$0xff]
        %v3419 = vld [vmem:[%s619 + $0x868] sm:$0xff]
        %v3420 = vld [vmem:[%s619 + $0x870] sm:$0xff]
        %v3421 = vld [vmem:[%s619 + $0x878] sm:$0xff]
        %v3422 = vld [vmem:[%s619 + $0x880] sm:$0xff]
        %v3423 = vld [vmem:[%s619 + $0x888] sm:$0xff]
        %v3424 = vld [vmem:[%s619 + $0x890] sm:$0xff]
        %v3425 = vld [vmem:[%s619 + $0x898] sm:$0xff]
        %v3426 = vld [vmem:[%s619 + $0x8a0] sm:$0xff]
        %v3427 = vld [vmem:[%s619 + $0x8a8] sm:$0xff]
        %v3428 = vld [vmem:[%s619 + $0x8b0] sm:$0xff]
        %v3429 = vld [vmem:[%s619 + $0x8b8] sm:$0xff]
        %v3430 = vld [vmem:[%s619 + $0x8c0] sm:$0xff]
        %v3431 = vld [vmem:[%s619 + $0x8c8] sm:$0xff]
        %v3432 = vld [vmem:[%s619 + $0x8d0] sm:$0xff]
        %v3433 = vld [vmem:[%s619 + $0x8d8] sm:$0xff]
        %v3434 = vld [vmem:[%s619 + $0x8e0] sm:$0xff]
        %v3435 = vld [vmem:[%s619 + $0x8e8] sm:$0xff]
        %v3436 = vld [vmem:[%s619 + $0x8f0] sm:$0xff]
        %v3437 = vld [vmem:[%s619 + $0x8f8] sm:$0xff]
        %v3438 = vld [vmem:[%s619 + $0x900] sm:$0xff]
        %v3439 = vld [vmem:[%s619 + $0x908] sm:$0xff]
        %v3440 = vld [vmem:[%s619 + $0x910] sm:$0xff]
        %v3441 = vld [vmem:[%s619 + $0x918] sm:$0xff]
        %v3442 = vld [vmem:[%s619 + $0x920] sm:$0xff]
        %v3443 = vld [vmem:[%s619 + $0x928] sm:$0xff]
        %v3444 = vld [vmem:[%s619 + $0x930] sm:$0xff]
        %v3445 = vld [vmem:[%s619 + $0x938] sm:$0xff]
        %v3446 = vld [vmem:[%s619 + $0x940] sm:$0xff]
        %v3447 = vld [vmem:[%s619 + $0x948] sm:$0xff]
        %v3448 = vld [vmem:[%s619 + $0x950] sm:$0xff]
        %v3449 = vld [vmem:[%s619 + $0x958] sm:$0xff]
        %v3450 = vld [vmem:[%s619 + $0x960] sm:$0xff]
        %v3451 = vld [vmem:[%s619 + $0x968] sm:$0xff]
        %v3452 = vld [vmem:[%s619 + $0x970] sm:$0xff]
        %v3453 = vld [vmem:[%s619 + $0x978] sm:$0xff]
        %v3454 = vld [vmem:[%s619 + $0x980] sm:$0xff]
        %v3455 = vld [vmem:[%s619 + $0x988] sm:$0xff]
        %v3456 = vld [vmem:[%s619 + $0x990] sm:$0xff]
        %v3457 = vld [vmem:[%s619 + $0x998] sm:$0xff]
        %v3458 = vld [vmem:[%s619 + $0x9a0] sm:$0xff]
        %v3459 = vld [vmem:[%s619 + $0x9a8] sm:$0xff]
        %v3460 = vld [vmem:[%s619 + $0x9b0] sm:$0xff]
        %v3461 = vld [vmem:[%s619 + $0x9b8] sm:$0xff]
        %v3462 = vld [vmem:[%s619 + $0x9c0] sm:$0xff]
        %v3463 = vld [vmem:[%s619 + $0x9c8] sm:$0xff]
        %v3464 = vld [vmem:[%s619 + $0x9d0] sm:$0xff]
        %v3465 = vld [vmem:[%s619 + $0x9d8] sm:$0xff]
        %v3466 = vld [vmem:[%s619 + $0x9e0] sm:$0xff]
        %v3467 = vld [vmem:[%s619 + $0x9e8] sm:$0xff]
        %v3468 = vld [vmem:[%s619 + $0x9f0] sm:$0xff]
        %v3469 = vld [vmem:[%s619 + $0x9f8] sm:$0xff]
        %v3470 = vld [vmem:[%s619 + $0xa00] sm:$0xff]
        %v3471 = vld [vmem:[%s619 + $0xa08] sm:$0xff]
        %v3472 = vld [vmem:[%s619 + $0xa10] sm:$0xff]
        %v3473 = vld [vmem:[%s619 + $0xa18] sm:$0xff]
        %v3474 = vld [vmem:[%s619 + $0xa20] sm:$0xff]
        %v3475 = vld [vmem:[%s619 + $0xa28] sm:$0xff]
        %v3476 = vld [vmem:[%s619 + $0xa30] sm:$0xff]
        %v3477 = vld [vmem:[%s619 + $0xa38] sm:$0xff]
        %v3478 = vld [vmem:[%s619 + $0xa40] sm:$0xff]
        %v3479 = vld [vmem:[%s619 + $0xa48] sm:$0xff]
        %v3480 = vld [vmem:[%s619 + $0xa50] sm:$0xff]
        %v3481 = vld [vmem:[%s619 + $0xa58] sm:$0xff]
        %v3482 = vld [vmem:[%s619 + $0xa60] sm:$0xff]
        %v3483 = vld [vmem:[%s619 + $0xa68] sm:$0xff]
        %v3484 = vld [vmem:[%s619 + $0xa70] sm:$0xff]
        %v3485 = vld [vmem:[%s619 + $0xa78] sm:$0xff]
        %v3486 = vld [vmem:[%s619 + $0xa80] sm:$0xff]
        %v3487 = vld [vmem:[%s619 + $0xa88] sm:$0xff]
        %v3488 = vld [vmem:[%s619 + $0xa90] sm:$0xff]
        %v3489 = vld [vmem:[%s619 + $0xa98] sm:$0xff]
        %v3490 = vld [vmem:[%s619 + $0xaa0] sm:$0xff]
        %v3491 = vld [vmem:[%s619 + $0xaa8] sm:$0xff]
        %v3492 = vld [vmem:[%s619 + $0xab0] sm:$0xff]
        %v3493 = vld [vmem:[%s619 + $0xab8] sm:$0xff]
        %v3494 = vld [vmem:[%s619 + $0xac0] sm:$0xff]
        %v3495 = vld [vmem:[%s619 + $0xac8] sm:$0xff]
        %v3496 = vld [vmem:[%s619 + $0xad0] sm:$0xff]
        %v3497 = vld [vmem:[%s619 + $0xad8] sm:$0xff]
        %v3498 = vld [vmem:[%s619 + $0xae0] sm:$0xff]
        %v3499 = vld [vmem:[%s619 + $0xae8] sm:$0xff]
        %v3500 = vld [vmem:[%s619 + $0xaf0] sm:$0xff]
        %v3501 = vld [vmem:[%s619 + $0xaf8] sm:$0xff]
        %v3502 = vld [vmem:[%s619 + $0xb00] sm:$0xff]
        %v3503 = vld [vmem:[%s619 + $0xb08] sm:$0xff]
        %v3504 = vld [vmem:[%s619 + $0xb10] sm:$0xff]
        %v3505 = vld [vmem:[%s619 + $0xb18] sm:$0xff]
        %v3506 = vld [vmem:[%s619 + $0xb20] sm:$0xff]
        %v3507 = vld [vmem:[%s619 + $0xb28] sm:$0xff]
        %v3508 = vld [vmem:[%s619 + $0xb30] sm:$0xff]
        %v3509 = vld [vmem:[%s619 + $0xb38] sm:$0xff]
        %v3510 = vld [vmem:[%s619 + $0xb40] sm:$0xff]
        %v3511 = vld [vmem:[%s619 + $0xb48] sm:$0xff]
        %v3512 = vld [vmem:[%s619 + $0xb50] sm:$0xff]
        %v3513 = vld [vmem:[%s619 + $0xb58] sm:$0xff]
        %v3514 = vld [vmem:[%s619 + $0xb60] sm:$0xff]
        %v3515 = vld [vmem:[%s619 + $0xb68] sm:$0xff]
        %v3516 = vld [vmem:[%s619 + $0xb70] sm:$0xff]
        %v3517 = vld [vmem:[%s619 + $0xb78] sm:$0xff]
        %v3518 = vld [vmem:[%s619 + $0xb80] sm:$0xff]
        %v3519 = vld [vmem:[%s619 + $0xb88] sm:$0xff]
        %v3520 = vld [vmem:[%s619 + $0xb90] sm:$0xff]
        %v3521 = vld [vmem:[%s619 + $0xb98] sm:$0xff]
        %v3522 = vld [vmem:[%s619 + $0xba0] sm:$0xff]
        %v3523 = vld [vmem:[%s619 + $0xba8] sm:$0xff]
        %v3524 = vld [vmem:[%s619 + $0xbb0] sm:$0xff]
        %v3525 = vld [vmem:[%s619 + $0xbb8] sm:$0xff]
        %v3526 = vld [vmem:[%s619 + $0xbc0] sm:$0xff]
        %v3527 = vld [vmem:[%s619 + $0xbc8] sm:$0xff]
        %v3528 = vld [vmem:[%s619 + $0xbd0] sm:$0xff]
        %v3529 = vld [vmem:[%s619 + $0xbd8] sm:$0xff]
        %v3530 = vld [vmem:[%s619 + $0xbe0] sm:$0xff]
        %v3531 = vld [vmem:[%s619 + $0xbe8] sm:$0xff]
        %v3532 = vld [vmem:[%s619 + $0xbf0] sm:$0xff]
        %v3533 = vld [vmem:[%s619 + $0xbf8] sm:$0xff]
        %v3534 = vld [vmem:[%s619 + $0xc00] sm:$0xff]
        %v3535 = vld [vmem:[%s619 + $0xc08] sm:$0xff]
        %v3536 = vld [vmem:[%s619 + $0xc10] sm:$0xff]
        %v3537 = vld [vmem:[%s619 + $0xc18] sm:$0xff]
        %v3538 = vld [vmem:[%s619 + $0xc20] sm:$0xff]
        %v3539 = vld [vmem:[%s619 + $0xc28] sm:$0xff]
        %v3540 = vld [vmem:[%s619 + $0xc30] sm:$0xff]
        %v3541 = vld [vmem:[%s619 + $0xc38] sm:$0xff]
        %v3542 = vld [vmem:[%s619 + $0xc40] sm:$0xff]
        %v3543 = vld [vmem:[%s619 + $0xc48] sm:$0xff]
        %v3544 = vld [vmem:[%s619 + $0xc50] sm:$0xff]
        %v3545 = vld [vmem:[%s619 + $0xc58] sm:$0xff]
        %v3546 = vld [vmem:[%s619 + $0xc60] sm:$0xff]
        %v3547 = vld [vmem:[%s619 + $0xc68] sm:$0xff]
        %v3548 = vld [vmem:[%s619 + $0xc70] sm:$0xff]
        %v3549 = vld [vmem:[%s619 + $0xc78] sm:$0xff]
        %v3550 = vld [vmem:[%s619 + $0xc80] sm:$0xff]
        %v3551 = vld [vmem:[%s619 + $0xc88] sm:$0xff]
        %v3552 = vld [vmem:[%s619 + $0xc90] sm:$0xff]
        %v3553 = vld [vmem:[%s619 + $0xc98] sm:$0xff]
        %v3554 = vld [vmem:[%s619 + $0xca0] sm:$0xff]
        %v3555 = vld [vmem:[%s619 + $0xca8] sm:$0xff]
        %v3556 = vld [vmem:[%s619 + $0xcb0] sm:$0xff]
        %v3557 = vld [vmem:[%s619 + $0xcb8] sm:$0xff]
        %v3558 = vld [vmem:[%s619 + $0xcc0] sm:$0xff]
        %v3559 = vld [vmem:[%s619 + $0xcc8] sm:$0xff]
        %v3560 = vld [vmem:[%s619 + $0xcd0] sm:$0xff]
        %v3561 = vld [vmem:[%s619 + $0xcd8] sm:$0xff]
        %v3562 = vld [vmem:[%s619 + $0xce0] sm:$0xff]
        %v3563 = vld [vmem:[%s619 + $0xce8] sm:$0xff]
        %v3564 = vld [vmem:[%s619 + $0xcf0] sm:$0xff]
        %v3565 = vld [vmem:[%s619 + $0xcf8] sm:$0xff]
        %v3566 = vld [vmem:[%s619 + $0xd00] sm:$0xff]
        %v3567 = vld [vmem:[%s619 + $0xd08] sm:$0xff]
        %v3568 = vld [vmem:[%s619 + $0xd10] sm:$0xff]
        %v3569 = vld [vmem:[%s619 + $0xd18] sm:$0xff]
        %v3570 = vld [vmem:[%s619 + $0xd20] sm:$0xff]
        %v3571 = vld [vmem:[%s619 + $0xd28] sm:$0xff]
        %v3572 = vld [vmem:[%s619 + $0xd30] sm:$0xff]
        %v3573 = vld [vmem:[%s619 + $0xd38] sm:$0xff]
        %v3574 = vld [vmem:[%s619 + $0xd40] sm:$0xff]
        %v3575 = vld [vmem:[%s619 + $0xd48] sm:$0xff]
        %v3576 = vld [vmem:[%s619 + $0xd50] sm:$0xff]
        %v3577 = vld [vmem:[%s619 + $0xd58] sm:$0xff]
        %v3578 = vld [vmem:[%s619 + $0xd60] sm:$0xff]
        %v3579 = vld [vmem:[%s619 + $0xd68] sm:$0xff]
        %v3580 = vld [vmem:[%s619 + $0xd70] sm:$0xff]
        %v3581 = vld [vmem:[%s619 + $0xd78] sm:$0xff]
        %v3582 = vld [vmem:[%s619 + $0xd80] sm:$0xff]
        %v3583 = vld [vmem:[%s619 + $0xd88] sm:$0xff]
        %v3584 = vld [vmem:[%s619 + $0xd90] sm:$0xff]
        %v3585 = vld [vmem:[%s619 + $0xd98] sm:$0xff]
        %v3586 = vld [vmem:[%s619 + $0xda0] sm:$0xff]
        %v3587 = vld [vmem:[%s619 + $0xda8] sm:$0xff]
        %v3588 = vld [vmem:[%s619 + $0xdb0] sm:$0xff]
        %v3589 = vld [vmem:[%s619 + $0xdb8] sm:$0xff]
        %v3590 = vld [vmem:[%s619 + $0xdc0] sm:$0xff]
        %v3591 = vld [vmem:[%s619 + $0xdc8] sm:$0xff]
        %v3592 = vld [vmem:[%s619 + $0xdd0] sm:$0xff]
        %v3593 = vld [vmem:[%s619 + $0xdd8] sm:$0xff]
        %v3594 = vld [vmem:[%s619 + $0xde0] sm:$0xff]
        %v3595 = vld [vmem:[%s619 + $0xde8] sm:$0xff]
        %v3596 = vld [vmem:[%s619 + $0xdf0] sm:$0xff]
        %v3597 = vld [vmem:[%s619 + $0xdf8] sm:$0xff]
        %v3598 = vld [vmem:[%s619 + $0xe00] sm:$0xff]
        %v3599 = vld [vmem:[%s619 + $0xe08] sm:$0xff]
        %v3600 = vld [vmem:[%s619 + $0xe10] sm:$0xff]
        %v3601 = vld [vmem:[%s619 + $0xe18] sm:$0xff]
        %v3602 = vld [vmem:[%s619 + $0xe20] sm:$0xff]
        %v3603 = vld [vmem:[%s619 + $0xe28] sm:$0xff]
        %v3604 = vld [vmem:[%s619 + $0xe30] sm:$0xff]
        %v3605 = vld [vmem:[%s619 + $0xe38] sm:$0xff]
        %v3606 = vld [vmem:[%s619 + $0xe40] sm:$0xff]
        %v3607 = vld [vmem:[%s619 + $0xe48] sm:$0xff]
        %v3608 = vld [vmem:[%s619 + $0xe50] sm:$0xff]
        %v3609 = vld [vmem:[%s619 + $0xe58] sm:$0xff]
        %v3610 = vld [vmem:[%s619 + $0xe60] sm:$0xff]
        %v3611 = vld [vmem:[%s619 + $0xe68] sm:$0xff]
        %v3612 = vld [vmem:[%s619 + $0xe70] sm:$0xff]
        %v3613 = vld [vmem:[%s619 + $0xe78] sm:$0xff]
        %v3614 = vld [vmem:[%s619 + $0xe80] sm:$0xff]
        %v3615 = vld [vmem:[%s619 + $0xe88] sm:$0xff]
        %v3616 = vld [vmem:[%s619 + $0xe90] sm:$0xff]
        %v3617 = vld [vmem:[%s619 + $0xe98] sm:$0xff]
        %v3618 = vld [vmem:[%s619 + $0xea0] sm:$0xff]
        %v3619 = vld [vmem:[%s619 + $0xea8] sm:$0xff]
        %v3620 = vld [vmem:[%s619 + $0xeb0] sm:$0xff]
        %v3621 = vld [vmem:[%s619 + $0xeb8] sm:$0xff]
        %v3622 = vld [vmem:[%s619 + $0xec0] sm:$0xff]
        %v3623 = vld [vmem:[%s619 + $0xec8] sm:$0xff]
        %v3624 = vld [vmem:[%s619 + $0xed0] sm:$0xff]
        %v3625 = vld [vmem:[%s619 + $0xed8] sm:$0xff]
        %v3626 = vld [vmem:[%s619 + $0xee0] sm:$0xff]
        %v3627 = vld [vmem:[%s619 + $0xee8] sm:$0xff]
        %v3628 = vld [vmem:[%s619 + $0xef0] sm:$0xff]
        %v3629 = vld [vmem:[%s619 + $0xef8] sm:$0xff]
        %v3630 = vld [vmem:[%s619 + $0xf00] sm:$0xff]
        %v3631 = vld [vmem:[%s619 + $0xf08] sm:$0xff]
        %v3632 = vld [vmem:[%s619 + $0xf10] sm:$0xff]
        %v3633 = vld [vmem:[%s619 + $0xf18] sm:$0xff]
        %v3634 = vld [vmem:[%s619 + $0xf20] sm:$0xff]
        %v3635 = vld [vmem:[%s619 + $0xf28] sm:$0xff]
        %v3636 = vld [vmem:[%s619 + $0xf30] sm:$0xff]
        %v3637 = vld [vmem:[%s619 + $0xf38] sm:$0xff]
        %v3638 = vld [vmem:[%s619 + $0xf40] sm:$0xff]
        %v3639 = vld [vmem:[%s619 + $0xf48] sm:$0xff]
        %v3640 = vld [vmem:[%s619 + $0xf50] sm:$0xff]
        %v3641 = vld [vmem:[%s619 + $0xf58] sm:$0xff]
        %v3642 = vld [vmem:[%s619 + $0xf60] sm:$0xff]
        %v3643 = vld [vmem:[%s619 + $0xf68] sm:$0xff]
        %v3644 = vld [vmem:[%s619 + $0xf70] sm:$0xff]
        %v3645 = vld [vmem:[%s619 + $0xf78] sm:$0xff]
        %v3646 = vld [vmem:[%s619 + $0xf80] sm:$0xff]
        %v3647 = vld [vmem:[%s619 + $0xf88] sm:$0xff]
        %v3648 = vld [vmem:[%s619 + $0xf90] sm:$0xff]
        %v3649 = vld [vmem:[%s619 + $0xf98] sm:$0xff]
        %v3650 = vld [vmem:[%s619 + $0xfa0] sm:$0xff]
        %v3651 = vld [vmem:[%s619 + $0xfa8] sm:$0xff]
        %v3652 = vld [vmem:[%s619 + $0xfb0] sm:$0xff]
        %v3653 = vld [vmem:[%s619 + $0xfb8] sm:$0xff]
        %v3654 = vld [vmem:[%s619 + $0xfc0] sm:$0xff]
        %v3655 = vld [vmem:[%s619 + $0xfc8] sm:$0xff]
        %v3656 = vld [vmem:[%s619 + $0xfd0] sm:$0xff]
        %v3657 = vld [vmem:[%s619 + $0xfd8] sm:$0xff]
        %v3658 = vld [vmem:[%s619 + $0xfe0] sm:$0xff]
        %v3659 = vld [vmem:[%s619 + $0xfe8] sm:$0xff]
        %v3660 = vld [vmem:[%s619 + $0xff0] sm:$0xff]
        %v3661 = vld [vmem:[%s619 + $0xff8] sm:$0xff]
        %v3662 = vld [vmem:[%s628] sm:$0xf]
        %v3664 = vlaneseq
        %v3665 = vshrl.u32 %v3664, 7
        %v3666 = vsub.s32 0, %v3665
        %v3667 = vrot.slane %v3662, %v3666
        %v3668 = vlaneseq
        %v3669 = vshrl.u32 %v3668, 7
        %v3670 = vsub.s32 1, %v3669
        %v3671 = vrot.slane %v3662, %v3670
        %v3672 = vlaneseq
        %v3673 = vshrl.u32 %v3672, 7
        %v3674 = vsub.s32 2, %v3673
        %v3675 = vrot.slane %v3662, %v3674
        %v3676 = vlaneseq
        %v3677 = vshrl.u32 %v3676, 7
        %v3678 = vsub.s32 3, %v3677
        %v3679 = vrot.slane %v3662, %v3678
        %v4196 = vunpack.c.l.b16 %v3150
        %v4197 = vunpack.c.h.b16 %v3150
        %v4198 = vunpack.c.l.b16 %v3151
        %v4199 = vunpack.c.h.b16 %v3151
        %v4200 = vunpack.c.l.b16 %v3152
        %v4201 = vunpack.c.h.b16 %v3152
        %v4202 = vunpack.c.l.b16 %v3153
        %v4203 = vunpack.c.h.b16 %v3153
        %v4204 = vunpack.c.l.b16 %v3154
        %v4205 = vunpack.c.h.b16 %v3154
        %v4206 = vunpack.c.l.b16 %v3155
        %v4207 = vunpack.c.h.b16 %v3155
        %v4208 = vunpack.c.l.b16 %v3156
        %v4209 = vunpack.c.h.b16 %v3156
        %v4210 = vunpack.c.l.b16 %v3157
        %v4211 = vunpack.c.h.b16 %v3157
        %v4212 = vunpack.c.l.b16 %v3158
        %v4213 = vunpack.c.h.b16 %v3158
        %v4214 = vunpack.c.l.b16 %v3159
        %v4215 = vunpack.c.h.b16 %v3159
        %v4216 = vunpack.c.l.b16 %v3160
        %v4217 = vunpack.c.h.b16 %v3160
        %v4218 = vunpack.c.l.b16 %v3161
        %v4219 = vunpack.c.h.b16 %v3161
        %v4220 = vunpack.c.l.b16 %v3162
        %v4221 = vunpack.c.h.b16 %v3162
        %v4222 = vunpack.c.l.b16 %v3163
        %v4223 = vunpack.c.h.b16 %v3163
        %v4224 = vunpack.c.l.b16 %v3164
        %v4225 = vunpack.c.h.b16 %v3164
        %v4226 = vunpack.c.l.b16 %v3165
        %v4227 = vunpack.c.h.b16 %v3165
        %v4228 = vunpack.c.l.b16 %v3166
        %v4229 = vunpack.c.h.b16 %v3166
        %v4230 = vunpack.c.l.b16 %v3167
        %v4231 = vunpack.c.h.b16 %v3167
        %v4232 = vunpack.c.l.b16 %v3168
        %v4233 = vunpack.c.h.b16 %v3168
        %v4234 = vunpack.c.l.b16 %v3169
        %v4235 = vunpack.c.h.b16 %v3169
        %v4236 = vunpack.c.l.b16 %v3170
        %v4237 = vunpack.c.h.b16 %v3170
        %v4238 = vunpack.c.l.b16 %v3171
        %v4239 = vunpack.c.h.b16 %v3171
        %v4240 = vunpack.c.l.b16 %v3172
        %v4241 = vunpack.c.h.b16 %v3172
        %v4242 = vunpack.c.l.b16 %v3173
        %v4243 = vunpack.c.h.b16 %v3173
        %v4244 = vunpack.c.l.b16 %v3174
        %v4245 = vunpack.c.h.b16 %v3174
        %v4246 = vunpack.c.l.b16 %v3175
        %v4247 = vunpack.c.h.b16 %v3175
        %v4248 = vunpack.c.l.b16 %v3176
        %v4249 = vunpack.c.h.b16 %v3176
        %v4250 = vunpack.c.l.b16 %v3177
        %v4251 = vunpack.c.h.b16 %v3177
        %v4252 = vunpack.c.l.b16 %v3178
        %v4253 = vunpack.c.h.b16 %v3178
        %v4254 = vunpack.c.l.b16 %v3179
        %v4255 = vunpack.c.h.b16 %v3179
        %v4256 = vunpack.c.l.b16 %v3180
        %v4257 = vunpack.c.h.b16 %v3180
        %v4258 = vunpack.c.l.b16 %v3181
        %v4259 = vunpack.c.h.b16 %v3181
        %v4260 = vunpack.c.l.b16 %v3182
        %v4261 = vunpack.c.h.b16 %v3182
        %v4262 = vunpack.c.l.b16 %v3183
        %v4263 = vunpack.c.h.b16 %v3183
        %v4264 = vunpack.c.l.b16 %v3184
        %v4265 = vunpack.c.h.b16 %v3184
        %v4266 = vunpack.c.l.b16 %v3185
        %v4267 = vunpack.c.h.b16 %v3185
        %v4268 = vunpack.c.l.b16 %v3186
        %v4269 = vunpack.c.h.b16 %v3186
        %v4270 = vunpack.c.l.b16 %v3187
        %v4271 = vunpack.c.h.b16 %v3187
        %v4272 = vunpack.c.l.b16 %v3188
        %v4273 = vunpack.c.h.b16 %v3188
        %v4274 = vunpack.c.l.b16 %v3189
        %v4275 = vunpack.c.h.b16 %v3189
        %v4276 = vunpack.c.l.b16 %v3190
        %v4277 = vunpack.c.h.b16 %v3190
        %v4278 = vunpack.c.l.b16 %v3191
        %v4279 = vunpack.c.h.b16 %v3191
        %v4280 = vunpack.c.l.b16 %v3192
        %v4281 = vunpack.c.h.b16 %v3192
        %v4282 = vunpack.c.l.b16 %v3193
        %v4283 = vunpack.c.h.b16 %v3193
        %v4284 = vunpack.c.l.b16 %v3194
        %v4285 = vunpack.c.h.b16 %v3194
        %v4286 = vunpack.c.l.b16 %v3195
        %v4287 = vunpack.c.h.b16 %v3195
        %v4288 = vunpack.c.l.b16 %v3196
        %v4289 = vunpack.c.h.b16 %v3196
        %v4290 = vunpack.c.l.b16 %v3197
        %v4291 = vunpack.c.h.b16 %v3197
        %v4292 = vunpack.c.l.b16 %v3198
        %v4293 = vunpack.c.h.b16 %v3198
        %v4294 = vunpack.c.l.b16 %v3199
        %v4295 = vunpack.c.h.b16 %v3199
        %v4296 = vunpack.c.l.b16 %v3200
        %v4297 = vunpack.c.h.b16 %v3200
        %v4298 = vunpack.c.l.b16 %v3201
        %v4299 = vunpack.c.h.b16 %v3201
        %v4300 = vunpack.c.l.b16 %v3202
        %v4301 = vunpack.c.h.b16 %v3202
        %v4302 = vunpack.c.l.b16 %v3203
        %v4303 = vunpack.c.h.b16 %v3203
        %v4304 = vunpack.c.l.b16 %v3204
        %v4305 = vunpack.c.h.b16 %v3204
        %v4306 = vunpack.c.l.b16 %v3205
        %v4307 = vunpack.c.h.b16 %v3205
        %v4308 = vunpack.c.l.b16 %v3206
        %v4309 = vunpack.c.h.b16 %v3206
        %v4310 = vunpack.c.l.b16 %v3207
        %v4311 = vunpack.c.h.b16 %v3207
        %v4312 = vunpack.c.l.b16 %v3208
        %v4313 = vunpack.c.h.b16 %v3208
        %v4314 = vunpack.c.l.b16 %v3209
        %v4315 = vunpack.c.h.b16 %v3209
        %v4316 = vunpack.c.l.b16 %v3210
        %v4317 = vunpack.c.h.b16 %v3210
        %v4318 = vunpack.c.l.b16 %v3211
        %v4319 = vunpack.c.h.b16 %v3211
        %v4320 = vunpack.c.l.b16 %v3212
        %v4321 = vunpack.c.h.b16 %v3212
        %v4322 = vunpack.c.l.b16 %v3213
        %v4323 = vunpack.c.h.b16 %v3213
        %v4324 = vunpack.c.l.b16 %v3214
        %v4325 = vunpack.c.h.b16 %v3214
        %v4326 = vunpack.c.l.b16 %v3215
        %v4327 = vunpack.c.h.b16 %v3215
        %v4328 = vunpack.c.l.b16 %v3216
        %v4329 = vunpack.c.h.b16 %v3216
        %v4330 = vunpack.c.l.b16 %v3217
        %v4331 = vunpack.c.h.b16 %v3217
        %v4332 = vunpack.c.l.b16 %v3218
        %v4333 = vunpack.c.h.b16 %v3218
        %v4334 = vunpack.c.l.b16 %v3219
        %v4335 = vunpack.c.h.b16 %v3219
        %v4336 = vunpack.c.l.b16 %v3220
        %v4337 = vunpack.c.h.b16 %v3220
        %v4338 = vunpack.c.l.b16 %v3221
        %v4339 = vunpack.c.h.b16 %v3221
        %v4340 = vunpack.c.l.b16 %v3222
        %v4341 = vunpack.c.h.b16 %v3222
        %v4342 = vunpack.c.l.b16 %v3223
        %v4343 = vunpack.c.h.b16 %v3223
        %v4344 = vunpack.c.l.b16 %v3224
        %v4345 = vunpack.c.h.b16 %v3224
        %v4346 = vunpack.c.l.b16 %v3225
        %v4347 = vunpack.c.h.b16 %v3225
        %v4348 = vunpack.c.l.b16 %v3226
        %v4349 = vunpack.c.h.b16 %v3226
        %v4350 = vunpack.c.l.b16 %v3227
        %v4351 = vunpack.c.h.b16 %v3227
        %v4352 = vunpack.c.l.b16 %v3228
        %v4353 = vunpack.c.h.b16 %v3228
        %v4354 = vunpack.c.l.b16 %v3229
        %v4355 = vunpack.c.h.b16 %v3229
        %v4356 = vunpack.c.l.b16 %v3230
        %v4357 = vunpack.c.h.b16 %v3230
        %v4358 = vunpack.c.l.b16 %v3231
        %v4359 = vunpack.c.h.b16 %v3231
        %v4360 = vunpack.c.l.b16 %v3232
        %v4361 = vunpack.c.h.b16 %v3232
        %v4362 = vunpack.c.l.b16 %v3233
        %v4363 = vunpack.c.h.b16 %v3233
        %v4364 = vunpack.c.l.b16 %v3234
        %v4365 = vunpack.c.h.b16 %v3234
        %v4366 = vunpack.c.l.b16 %v3235
        %v4367 = vunpack.c.h.b16 %v3235
        %v4368 = vunpack.c.l.b16 %v3236
        %v4369 = vunpack.c.h.b16 %v3236
        %v4370 = vunpack.c.l.b16 %v3237
        %v4371 = vunpack.c.h.b16 %v3237
        %v4372 = vunpack.c.l.b16 %v3238
        %v4373 = vunpack.c.h.b16 %v3238
        %v4374 = vunpack.c.l.b16 %v3239
        %v4375 = vunpack.c.h.b16 %v3239
        %v4376 = vunpack.c.l.b16 %v3240
        %v4377 = vunpack.c.h.b16 %v3240
        %v4378 = vunpack.c.l.b16 %v3241
        %v4379 = vunpack.c.h.b16 %v3241
        %v4380 = vunpack.c.l.b16 %v3242
        %v4381 = vunpack.c.h.b16 %v3242
        %v4382 = vunpack.c.l.b16 %v3243
        %v4383 = vunpack.c.h.b16 %v3243
        %v4384 = vunpack.c.l.b16 %v3244
        %v4385 = vunpack.c.h.b16 %v3244
        %v4386 = vunpack.c.l.b16 %v3245
        %v4387 = vunpack.c.h.b16 %v3245
        %v4388 = vunpack.c.l.b16 %v3246
        %v4389 = vunpack.c.h.b16 %v3246
        %v4390 = vunpack.c.l.b16 %v3247
        %v4391 = vunpack.c.h.b16 %v3247
        %v4392 = vunpack.c.l.b16 %v3248
        %v4393 = vunpack.c.h.b16 %v3248
        %v4394 = vunpack.c.l.b16 %v3249
        %v4395 = vunpack.c.h.b16 %v3249
        %v4396 = vunpack.c.l.b16 %v3250
        %v4397 = vunpack.c.h.b16 %v3250
        %v4398 = vunpack.c.l.b16 %v3251
        %v4399 = vunpack.c.h.b16 %v3251
        %v4400 = vunpack.c.l.b16 %v3252
        %v4401 = vunpack.c.h.b16 %v3252
        %v4402 = vunpack.c.l.b16 %v3253
        %v4403 = vunpack.c.h.b16 %v3253
        %v4404 = vunpack.c.l.b16 %v3254
        %v4405 = vunpack.c.h.b16 %v3254
        %v4406 = vunpack.c.l.b16 %v3255
        %v4407 = vunpack.c.h.b16 %v3255
        %v4408 = vunpack.c.l.b16 %v3256
        %v4409 = vunpack.c.h.b16 %v3256
        %v4410 = vunpack.c.l.b16 %v3257
        %v4411 = vunpack.c.h.b16 %v3257
        %v4412 = vunpack.c.l.b16 %v3258
        %v4413 = vunpack.c.h.b16 %v3258
        %v4414 = vunpack.c.l.b16 %v3259
        %v4415 = vunpack.c.h.b16 %v3259
        %v4416 = vunpack.c.l.b16 %v3260
        %v4417 = vunpack.c.h.b16 %v3260
        %v4418 = vunpack.c.l.b16 %v3261
        %v4419 = vunpack.c.h.b16 %v3261
        %v4420 = vunpack.c.l.b16 %v3262
        %v4421 = vunpack.c.h.b16 %v3262
        %v4422 = vunpack.c.l.b16 %v3263
        %v4423 = vunpack.c.h.b16 %v3263
        %v4424 = vunpack.c.l.b16 %v3264
        %v4425 = vunpack.c.h.b16 %v3264
        %v4426 = vunpack.c.l.b16 %v3265
        %v4427 = vunpack.c.h.b16 %v3265
        %v4428 = vunpack.c.l.b16 %v3266
        %v4429 = vunpack.c.h.b16 %v3266
        %v4430 = vunpack.c.l.b16 %v3267
        %v4431 = vunpack.c.h.b16 %v3267
        %v4432 = vunpack.c.l.b16 %v3268
        %v4433 = vunpack.c.h.b16 %v3268
        %v4434 = vunpack.c.l.b16 %v3269
        %v4435 = vunpack.c.h.b16 %v3269
        %v4436 = vunpack.c.l.b16 %v3270
        %v4437 = vunpack.c.h.b16 %v3270
        %v4438 = vunpack.c.l.b16 %v3271
        %v4439 = vunpack.c.h.b16 %v3271
        %v4440 = vunpack.c.l.b16 %v3272
        %v4441 = vunpack.c.h.b16 %v3272
        %v4442 = vunpack.c.l.b16 %v3273
        %v4443 = vunpack.c.h.b16 %v3273
        %v4444 = vunpack.c.l.b16 %v3274
        %v4445 = vunpack.c.h.b16 %v3274
        %v4446 = vunpack.c.l.b16 %v3275
        %v4447 = vunpack.c.h.b16 %v3275
        %v4448 = vunpack.c.l.b16 %v3276
        %v4449 = vunpack.c.h.b16 %v3276
        %v4450 = vunpack.c.l.b16 %v3277
        %v4451 = vunpack.c.h.b16 %v3277
        %v4452 = vunpack.c.l.b16 %v3278
        %v4453 = vunpack.c.h.b16 %v3278
        %v4454 = vunpack.c.l.b16 %v3279
        %v4455 = vunpack.c.h.b16 %v3279
        %v4456 = vunpack.c.l.b16 %v3280
        %v4457 = vunpack.c.h.b16 %v3280
        %v4458 = vunpack.c.l.b16 %v3281
        %v4459 = vunpack.c.h.b16 %v3281
        %v4460 = vunpack.c.l.b16 %v3282
        %v4461 = vunpack.c.h.b16 %v3282
        %v4462 = vunpack.c.l.b16 %v3283
        %v4463 = vunpack.c.h.b16 %v3283
        %v4464 = vunpack.c.l.b16 %v3284
        %v4465 = vunpack.c.h.b16 %v3284
        %v4466 = vunpack.c.l.b16 %v3285
        %v4467 = vunpack.c.h.b16 %v3285
        %v4468 = vunpack.c.l.b16 %v3286
        %v4469 = vunpack.c.h.b16 %v3286
        %v4470 = vunpack.c.l.b16 %v3287
        %v4471 = vunpack.c.h.b16 %v3287
        %v4472 = vunpack.c.l.b16 %v3288
        %v4473 = vunpack.c.h.b16 %v3288
        %v4474 = vunpack.c.l.b16 %v3289
        %v4475 = vunpack.c.h.b16 %v3289
        %v4476 = vunpack.c.l.b16 %v3290
        %v4477 = vunpack.c.h.b16 %v3290
        %v4478 = vunpack.c.l.b16 %v3291
        %v4479 = vunpack.c.h.b16 %v3291
        %v4480 = vunpack.c.l.b16 %v3292
        %v4481 = vunpack.c.h.b16 %v3292
        %v4482 = vunpack.c.l.b16 %v3293
        %v4483 = vunpack.c.h.b16 %v3293
        %v4484 = vunpack.c.l.b16 %v3294
        %v4485 = vunpack.c.h.b16 %v3294
        %v4486 = vunpack.c.l.b16 %v3295
        %v4487 = vunpack.c.h.b16 %v3295
        %v4488 = vunpack.c.l.b16 %v3296
        %v4489 = vunpack.c.h.b16 %v3296
        %v4490 = vunpack.c.l.b16 %v3297
        %v4491 = vunpack.c.h.b16 %v3297
        %v4492 = vunpack.c.l.b16 %v3298
        %v4493 = vunpack.c.h.b16 %v3298
        %v4494 = vunpack.c.l.b16 %v3299
        %v4495 = vunpack.c.h.b16 %v3299
        %v4496 = vunpack.c.l.b16 %v3300
        %v4497 = vunpack.c.h.b16 %v3300
        %v4498 = vunpack.c.l.b16 %v3301
        %v4499 = vunpack.c.h.b16 %v3301
        %v4500 = vunpack.c.l.b16 %v3302
        %v4501 = vunpack.c.h.b16 %v3302
        %v4502 = vunpack.c.l.b16 %v3303
        %v4503 = vunpack.c.h.b16 %v3303
        %v4504 = vunpack.c.l.b16 %v3304
        %v4505 = vunpack.c.h.b16 %v3304
        %v4506 = vunpack.c.l.b16 %v3305
        %v4507 = vunpack.c.h.b16 %v3305
        %v4508 = vunpack.c.l.b16 %v3306
        %v4509 = vunpack.c.h.b16 %v3306
        %v4510 = vunpack.c.l.b16 %v3307
        %v4511 = vunpack.c.h.b16 %v3307
        %v4512 = vunpack.c.l.b16 %v3308
        %v4513 = vunpack.c.h.b16 %v3308
        %v4514 = vunpack.c.l.b16 %v3309
        %v4515 = vunpack.c.h.b16 %v3309
        %v4516 = vunpack.c.l.b16 %v3310
        %v4517 = vunpack.c.h.b16 %v3310
        %v4518 = vunpack.c.l.b16 %v3311
        %v4519 = vunpack.c.h.b16 %v3311
        %v4520 = vunpack.c.l.b16 %v3312
        %v4521 = vunpack.c.h.b16 %v3312
        %v4522 = vunpack.c.l.b16 %v3313
        %v4523 = vunpack.c.h.b16 %v3313
        %v4524 = vunpack.c.l.b16 %v3314
        %v4525 = vunpack.c.h.b16 %v3314
        %v4526 = vunpack.c.l.b16 %v3315
        %v4527 = vunpack.c.h.b16 %v3315
        %v4528 = vunpack.c.l.b16 %v3316
        %v4529 = vunpack.c.h.b16 %v3316
        %v4530 = vunpack.c.l.b16 %v3317
        %v4531 = vunpack.c.h.b16 %v3317
        %v4532 = vunpack.c.l.b16 %v3318
        %v4533 = vunpack.c.h.b16 %v3318
        %v4534 = vunpack.c.l.b16 %v3319
        %v4535 = vunpack.c.h.b16 %v3319
        %v4536 = vunpack.c.l.b16 %v3320
        %v4537 = vunpack.c.h.b16 %v3320
        %v4538 = vunpack.c.l.b16 %v3321
        %v4539 = vunpack.c.h.b16 %v3321
        %v4540 = vunpack.c.l.b16 %v3322
        %v4541 = vunpack.c.h.b16 %v3322
        %v4542 = vunpack.c.l.b16 %v3323
        %v4543 = vunpack.c.h.b16 %v3323
        %v4544 = vunpack.c.l.b16 %v3324
        %v4545 = vunpack.c.h.b16 %v3324
        %v4546 = vunpack.c.l.b16 %v3325
        %v4547 = vunpack.c.h.b16 %v3325
        %v4548 = vunpack.c.l.b16 %v3326
        %v4549 = vunpack.c.h.b16 %v3326
        %v4550 = vunpack.c.l.b16 %v3327
        %v4551 = vunpack.c.h.b16 %v3327
        %v4552 = vunpack.c.l.b16 %v3328
        %v4553 = vunpack.c.h.b16 %v3328
        %v4554 = vunpack.c.l.b16 %v3329
        %v4555 = vunpack.c.h.b16 %v3329
        %v4556 = vunpack.c.l.b16 %v3330
        %v4557 = vunpack.c.h.b16 %v3330
        %v4558 = vunpack.c.l.b16 %v3331
        %v4559 = vunpack.c.h.b16 %v3331
        %v4560 = vunpack.c.l.b16 %v3332
        %v4561 = vunpack.c.h.b16 %v3332
        %v4562 = vunpack.c.l.b16 %v3333
        %v4563 = vunpack.c.h.b16 %v3333
        %v4564 = vunpack.c.l.b16 %v3334
        %v4565 = vunpack.c.h.b16 %v3334
        %v4566 = vunpack.c.l.b16 %v3335
        %v4567 = vunpack.c.h.b16 %v3335
        %v4568 = vunpack.c.l.b16 %v3336
        %v4569 = vunpack.c.h.b16 %v3336
        %v4570 = vunpack.c.l.b16 %v3337
        %v4571 = vunpack.c.h.b16 %v3337
        %v4572 = vunpack.c.l.b16 %v3338
        %v4573 = vunpack.c.h.b16 %v3338
        %v4574 = vunpack.c.l.b16 %v3339
        %v4575 = vunpack.c.h.b16 %v3339
        %v4576 = vunpack.c.l.b16 %v3340
        %v4577 = vunpack.c.h.b16 %v3340
        %v4578 = vunpack.c.l.b16 %v3341
        %v4579 = vunpack.c.h.b16 %v3341
        %v4580 = vunpack.c.l.b16 %v3342
        %v4581 = vunpack.c.h.b16 %v3342
        %v4582 = vunpack.c.l.b16 %v3343
        %v4583 = vunpack.c.h.b16 %v3343
        %v4584 = vunpack.c.l.b16 %v3344
        %v4585 = vunpack.c.h.b16 %v3344
        %v4586 = vunpack.c.l.b16 %v3345
        %v4587 = vunpack.c.h.b16 %v3345
        %v4588 = vunpack.c.l.b16 %v3346
        %v4589 = vunpack.c.h.b16 %v3346
        %v4590 = vunpack.c.l.b16 %v3347
        %v4591 = vunpack.c.h.b16 %v3347
        %v4592 = vunpack.c.l.b16 %v3348
        %v4593 = vunpack.c.h.b16 %v3348
        %v4594 = vunpack.c.l.b16 %v3349
        %v4595 = vunpack.c.h.b16 %v3349
        %v4596 = vunpack.c.l.b16 %v3350
        %v4597 = vunpack.c.h.b16 %v3350
        %v4598 = vunpack.c.l.b16 %v3351
        %v4599 = vunpack.c.h.b16 %v3351
        %v4600 = vunpack.c.l.b16 %v3352
        %v4601 = vunpack.c.h.b16 %v3352
        %v4602 = vunpack.c.l.b16 %v3353
        %v4603 = vunpack.c.h.b16 %v3353
        %v4604 = vunpack.c.l.b16 %v3354
        %v4605 = vunpack.c.h.b16 %v3354
        %v4606 = vunpack.c.l.b16 %v3355
        %v4607 = vunpack.c.h.b16 %v3355
        %v4608 = vunpack.c.l.b16 %v3356
        %v4609 = vunpack.c.h.b16 %v3356
        %v4610 = vunpack.c.l.b16 %v3357
        %v4611 = vunpack.c.h.b16 %v3357
        %v4612 = vunpack.c.l.b16 %v3358
        %v4613 = vunpack.c.h.b16 %v3358
        %v4614 = vunpack.c.l.b16 %v3359
        %v4615 = vunpack.c.h.b16 %v3359
        %v4616 = vunpack.c.l.b16 %v3360
        %v4617 = vunpack.c.h.b16 %v3360
        %v4618 = vunpack.c.l.b16 %v3361
        %v4619 = vunpack.c.h.b16 %v3361
        %v4620 = vunpack.c.l.b16 %v3362
        %v4621 = vunpack.c.h.b16 %v3362
        %v4622 = vunpack.c.l.b16 %v3363
        %v4623 = vunpack.c.h.b16 %v3363
        %v4624 = vunpack.c.l.b16 %v3364
        %v4625 = vunpack.c.h.b16 %v3364
        %v4626 = vunpack.c.l.b16 %v3365
        %v4627 = vunpack.c.h.b16 %v3365
        %v4628 = vunpack.c.l.b16 %v3366
        %v4629 = vunpack.c.h.b16 %v3366
        %v4630 = vunpack.c.l.b16 %v3367
        %v4631 = vunpack.c.h.b16 %v3367
        %v4632 = vunpack.c.l.b16 %v3368
        %v4633 = vunpack.c.h.b16 %v3368
        %v4634 = vunpack.c.l.b16 %v3369
        %v4635 = vunpack.c.h.b16 %v3369
        %v4636 = vunpack.c.l.b16 %v3370
        %v4637 = vunpack.c.h.b16 %v3370
        %v4638 = vunpack.c.l.b16 %v3371
        %v4639 = vunpack.c.h.b16 %v3371
        %v4640 = vunpack.c.l.b16 %v3372
        %v4641 = vunpack.c.h.b16 %v3372
        %v4642 = vunpack.c.l.b16 %v3373
        %v4643 = vunpack.c.h.b16 %v3373
        %v4644 = vunpack.c.l.b16 %v3374
        %v4645 = vunpack.c.h.b16 %v3374
        %v4646 = vunpack.c.l.b16 %v3375
        %v4647 = vunpack.c.h.b16 %v3375
        %v4648 = vunpack.c.l.b16 %v3376
        %v4649 = vunpack.c.h.b16 %v3376
        %v4650 = vunpack.c.l.b16 %v3377
        %v4651 = vunpack.c.h.b16 %v3377
        %v4652 = vunpack.c.l.b16 %v3378
        %v4653 = vunpack.c.h.b16 %v3378
        %v4654 = vunpack.c.l.b16 %v3379
        %v4655 = vunpack.c.h.b16 %v3379
        %v4656 = vunpack.c.l.b16 %v3380
        %v4657 = vunpack.c.h.b16 %v3380
        %v4658 = vunpack.c.l.b16 %v3381
        %v4659 = vunpack.c.h.b16 %v3381
        %v4660 = vunpack.c.l.b16 %v3382
        %v4661 = vunpack.c.h.b16 %v3382
        %v4662 = vunpack.c.l.b16 %v3383
        %v4663 = vunpack.c.h.b16 %v3383
        %v4664 = vunpack.c.l.b16 %v3384
        %v4665 = vunpack.c.h.b16 %v3384
        %v4666 = vunpack.c.l.b16 %v3385
        %v4667 = vunpack.c.h.b16 %v3385
        %v4668 = vunpack.c.l.b16 %v3386
        %v4669 = vunpack.c.h.b16 %v3386
        %v4670 = vunpack.c.l.b16 %v3387
        %v4671 = vunpack.c.h.b16 %v3387
        %v4672 = vunpack.c.l.b16 %v3388
        %v4673 = vunpack.c.h.b16 %v3388
        %v4674 = vunpack.c.l.b16 %v3389
        %v4675 = vunpack.c.h.b16 %v3389
        %v4676 = vunpack.c.l.b16 %v3390
        %v4677 = vunpack.c.h.b16 %v3390
        %v4678 = vunpack.c.l.b16 %v3391
        %v4679 = vunpack.c.h.b16 %v3391
        %v4680 = vunpack.c.l.b16 %v3392
        %v4681 = vunpack.c.h.b16 %v3392
        %v4682 = vunpack.c.l.b16 %v3393
        %v4683 = vunpack.c.h.b16 %v3393
        %v4684 = vunpack.c.l.b16 %v3394
        %v4685 = vunpack.c.h.b16 %v3394
        %v4686 = vunpack.c.l.b16 %v3395
        %v4687 = vunpack.c.h.b16 %v3395
        %v4688 = vunpack.c.l.b16 %v3396
        %v4689 = vunpack.c.h.b16 %v3396
        %v4690 = vunpack.c.l.b16 %v3397
        %v4691 = vunpack.c.h.b16 %v3397
        %v4692 = vunpack.c.l.b16 %v3398
        %v4693 = vunpack.c.h.b16 %v3398
        %v4694 = vunpack.c.l.b16 %v3399
        %v4695 = vunpack.c.h.b16 %v3399
        %v4696 = vunpack.c.l.b16 %v3400
        %v4697 = vunpack.c.h.b16 %v3400
        %v4698 = vunpack.c.l.b16 %v3401
        %v4699 = vunpack.c.h.b16 %v3401
        %v4700 = vunpack.c.l.b16 %v3402
        %v4701 = vunpack.c.h.b16 %v3402
        %v4702 = vunpack.c.l.b16 %v3403
        %v4703 = vunpack.c.h.b16 %v3403
        %v4704 = vunpack.c.l.b16 %v3404
        %v4705 = vunpack.c.h.b16 %v3404
        %v4706 = vunpack.c.l.b16 %v3405
        %v4707 = vunpack.c.h.b16 %v3405
        %v4708 = vunpack.c.l.b16 %v3406
        %v4709 = vunpack.c.h.b16 %v3406
        %v4710 = vunpack.c.l.b16 %v3407
        %v4711 = vunpack.c.h.b16 %v3407
        %v4712 = vunpack.c.l.b16 %v3408
        %v4713 = vunpack.c.h.b16 %v3408
        %v4714 = vunpack.c.l.b16 %v3409
        %v4715 = vunpack.c.h.b16 %v3409
        %v4716 = vunpack.c.l.b16 %v3410
        %v4717 = vunpack.c.h.b16 %v3410
        %v4718 = vunpack.c.l.b16 %v3411
        %v4719 = vunpack.c.h.b16 %v3411
        %v4720 = vunpack.c.l.b16 %v3412
        %v4721 = vunpack.c.h.b16 %v3412
        %v4722 = vunpack.c.l.b16 %v3413
        %v4723 = vunpack.c.h.b16 %v3413
        %v4724 = vunpack.c.l.b16 %v3414
        %v4725 = vunpack.c.h.b16 %v3414
        %v4726 = vunpack.c.l.b16 %v3415
        %v4727 = vunpack.c.h.b16 %v3415
        %v4728 = vunpack.c.l.b16 %v3416
        %v4729 = vunpack.c.h.b16 %v3416
        %v4730 = vunpack.c.l.b16 %v3417
        %v4731 = vunpack.c.h.b16 %v3417
        %v4732 = vunpack.c.l.b16 %v3418
        %v4733 = vunpack.c.h.b16 %v3418
        %v4734 = vunpack.c.l.b16 %v3419
        %v4735 = vunpack.c.h.b16 %v3419
        %v4736 = vunpack.c.l.b16 %v3420
        %v4737 = vunpack.c.h.b16 %v3420
        %v4738 = vunpack.c.l.b16 %v3421
        %v4739 = vunpack.c.h.b16 %v3421
        %v4740 = vunpack.c.l.b16 %v3422
        %v4741 = vunpack.c.h.b16 %v3422
        %v4742 = vunpack.c.l.b16 %v3423
        %v4743 = vunpack.c.h.b16 %v3423
        %v4744 = vunpack.c.l.b16 %v3424
        %v4745 = vunpack.c.h.b16 %v3424
        %v4746 = vunpack.c.l.b16 %v3425
        %v4747 = vunpack.c.h.b16 %v3425
        %v4748 = vunpack.c.l.b16 %v3426
        %v4749 = vunpack.c.h.b16 %v3426
        %v4750 = vunpack.c.l.b16 %v3427
        %v4751 = vunpack.c.h.b16 %v3427
        %v4752 = vunpack.c.l.b16 %v3428
        %v4753 = vunpack.c.h.b16 %v3428
        %v4754 = vunpack.c.l.b16 %v3429
        %v4755 = vunpack.c.h.b16 %v3429
        %v4756 = vunpack.c.l.b16 %v3430
        %v4757 = vunpack.c.h.b16 %v3430
        %v4758 = vunpack.c.l.b16 %v3431
        %v4759 = vunpack.c.h.b16 %v3431
        %v4760 = vunpack.c.l.b16 %v3432
        %v4761 = vunpack.c.h.b16 %v3432
        %v4762 = vunpack.c.l.b16 %v3433
        %v4763 = vunpack.c.h.b16 %v3433
        %v4764 = vunpack.c.l.b16 %v3434
        %v4765 = vunpack.c.h.b16 %v3434
        %v4766 = vunpack.c.l.b16 %v3435
        %v4767 = vunpack.c.h.b16 %v3435
        %v4768 = vunpack.c.l.b16 %v3436
        %v4769 = vunpack.c.h.b16 %v3436
        %v4770 = vunpack.c.l.b16 %v3437
        %v4771 = vunpack.c.h.b16 %v3437
        %v4772 = vunpack.c.l.b16 %v3438
        %v4773 = vunpack.c.h.b16 %v3438
        %v4774 = vunpack.c.l.b16 %v3439
        %v4775 = vunpack.c.h.b16 %v3439
        %v4776 = vunpack.c.l.b16 %v3440
        %v4777 = vunpack.c.h.b16 %v3440
        %v4778 = vunpack.c.l.b16 %v3441
        %v4779 = vunpack.c.h.b16 %v3441
        %v4780 = vunpack.c.l.b16 %v3442
        %v4781 = vunpack.c.h.b16 %v3442
        %v4782 = vunpack.c.l.b16 %v3443
        %v4783 = vunpack.c.h.b16 %v3443
        %v4784 = vunpack.c.l.b16 %v3444
        %v4785 = vunpack.c.h.b16 %v3444
        %v4786 = vunpack.c.l.b16 %v3445
        %v4787 = vunpack.c.h.b16 %v3445
        %v4788 = vunpack.c.l.b16 %v3446
        %v4789 = vunpack.c.h.b16 %v3446
        %v4790 = vunpack.c.l.b16 %v3447
        %v4791 = vunpack.c.h.b16 %v3447
        %v4792 = vunpack.c.l.b16 %v3448
        %v4793 = vunpack.c.h.b16 %v3448
        %v4794 = vunpack.c.l.b16 %v3449
        %v4795 = vunpack.c.h.b16 %v3449
        %v4796 = vunpack.c.l.b16 %v3450
        %v4797 = vunpack.c.h.b16 %v3450
        %v4798 = vunpack.c.l.b16 %v3451
        %v4799 = vunpack.c.h.b16 %v3451
        %v4800 = vunpack.c.l.b16 %v3452
        %v4801 = vunpack.c.h.b16 %v3452
        %v4802 = vunpack.c.l.b16 %v3453
        %v4803 = vunpack.c.h.b16 %v3453
        %v4804 = vunpack.c.l.b16 %v3454
        %v4805 = vunpack.c.h.b16 %v3454
        %v4806 = vunpack.c.l.b16 %v3455
        %v4807 = vunpack.c.h.b16 %v3455
        %v4808 = vunpack.c.l.b16 %v3456
        %v4809 = vunpack.c.h.b16 %v3456
        %v4810 = vunpack.c.l.b16 %v3457
        %v4811 = vunpack.c.h.b16 %v3457
        %v4812 = vunpack.c.l.b16 %v3458
        %v4813 = vunpack.c.h.b16 %v3458
        %v4814 = vunpack.c.l.b16 %v3459
        %v4815 = vunpack.c.h.b16 %v3459
        %v4816 = vunpack.c.l.b16 %v3460
        %v4817 = vunpack.c.h.b16 %v3460
        %v4818 = vunpack.c.l.b16 %v3461
        %v4819 = vunpack.c.h.b16 %v3461
        %v4820 = vunpack.c.l.b16 %v3462
        %v4821 = vunpack.c.h.b16 %v3462
        %v4822 = vunpack.c.l.b16 %v3463
        %v4823 = vunpack.c.h.b16 %v3463
        %v4824 = vunpack.c.l.b16 %v3464
        %v4825 = vunpack.c.h.b16 %v3464
        %v4826 = vunpack.c.l.b16 %v3465
        %v4827 = vunpack.c.h.b16 %v3465
        %v4828 = vunpack.c.l.b16 %v3466
        %v4829 = vunpack.c.h.b16 %v3466
        %v4830 = vunpack.c.l.b16 %v3467
        %v4831 = vunpack.c.h.b16 %v3467
        %v4832 = vunpack.c.l.b16 %v3468
        %v4833 = vunpack.c.h.b16 %v3468
        %v4834 = vunpack.c.l.b16 %v3469
        %v4835 = vunpack.c.h.b16 %v3469
        %v4836 = vunpack.c.l.b16 %v3470
        %v4837 = vunpack.c.h.b16 %v3470
        %v4838 = vunpack.c.l.b16 %v3471
        %v4839 = vunpack.c.h.b16 %v3471
        %v4840 = vunpack.c.l.b16 %v3472
        %v4841 = vunpack.c.h.b16 %v3472
        %v4842 = vunpack.c.l.b16 %v3473
        %v4843 = vunpack.c.h.b16 %v3473
        %v4844 = vunpack.c.l.b16 %v3474
        %v4845 = vunpack.c.h.b16 %v3474
        %v4846 = vunpack.c.l.b16 %v3475
        %v4847 = vunpack.c.h.b16 %v3475
        %v4848 = vunpack.c.l.b16 %v3476
        %v4849 = vunpack.c.h.b16 %v3476
        %v4850 = vunpack.c.l.b16 %v3477
        %v4851 = vunpack.c.h.b16 %v3477
        %v4852 = vunpack.c.l.b16 %v3478
        %v4853 = vunpack.c.h.b16 %v3478
        %v4854 = vunpack.c.l.b16 %v3479
        %v4855 = vunpack.c.h.b16 %v3479
        %v4856 = vunpack.c.l.b16 %v3480
        %v4857 = vunpack.c.h.b16 %v3480
        %v4858 = vunpack.c.l.b16 %v3481
        %v4859 = vunpack.c.h.b16 %v3481
        %v4860 = vunpack.c.l.b16 %v3482
        %v4861 = vunpack.c.h.b16 %v3482
        %v4862 = vunpack.c.l.b16 %v3483
        %v4863 = vunpack.c.h.b16 %v3483
        %v4864 = vunpack.c.l.b16 %v3484
        %v4865 = vunpack.c.h.b16 %v3484
        %v4866 = vunpack.c.l.b16 %v3485
        %v4867 = vunpack.c.h.b16 %v3485
        %v4868 = vunpack.c.l.b16 %v3486
        %v4869 = vunpack.c.h.b16 %v3486
        %v4870 = vunpack.c.l.b16 %v3487
        %v4871 = vunpack.c.h.b16 %v3487
        %v4872 = vunpack.c.l.b16 %v3488
        %v4873 = vunpack.c.h.b16 %v3488
        %v4874 = vunpack.c.l.b16 %v3489
        %v4875 = vunpack.c.h.b16 %v3489
        %v4876 = vunpack.c.l.b16 %v3490
        %v4877 = vunpack.c.h.b16 %v3490
        %v4878 = vunpack.c.l.b16 %v3491
        %v4879 = vunpack.c.h.b16 %v3491
        %v4880 = vunpack.c.l.b16 %v3492
        %v4881 = vunpack.c.h.b16 %v3492
        %v4882 = vunpack.c.l.b16 %v3493
        %v4883 = vunpack.c.h.b16 %v3493
        %v4884 = vunpack.c.l.b16 %v3494
        %v4885 = vunpack.c.h.b16 %v3494
        %v4886 = vunpack.c.l.b16 %v3495
        %v4887 = vunpack.c.h.b16 %v3495
        %v4888 = vunpack.c.l.b16 %v3496
        %v4889 = vunpack.c.h.b16 %v3496
        %v4890 = vunpack.c.l.b16 %v3497
        %v4891 = vunpack.c.h.b16 %v3497
        %v4892 = vunpack.c.l.b16 %v3498
        %v4893 = vunpack.c.h.b16 %v3498
        %v4894 = vunpack.c.l.b16 %v3499
        %v4895 = vunpack.c.h.b16 %v3499
        %v4896 = vunpack.c.l.b16 %v3500
        %v4897 = vunpack.c.h.b16 %v3500
        %v4898 = vunpack.c.l.b16 %v3501
        %v4899 = vunpack.c.h.b16 %v3501
        %v4900 = vunpack.c.l.b16 %v3502
        %v4901 = vunpack.c.h.b16 %v3502
        %v4902 = vunpack.c.l.b16 %v3503
        %v4903 = vunpack.c.h.b16 %v3503
        %v4904 = vunpack.c.l.b16 %v3504
        %v4905 = vunpack.c.h.b16 %v3504
        %v4906 = vunpack.c.l.b16 %v3505
        %v4907 = vunpack.c.h.b16 %v3505
        %v4908 = vunpack.c.l.b16 %v3506
        %v4909 = vunpack.c.h.b16 %v3506
        %v4910 = vunpack.c.l.b16 %v3507
        %v4911 = vunpack.c.h.b16 %v3507
        %v4912 = vunpack.c.l.b16 %v3508
        %v4913 = vunpack.c.h.b16 %v3508
        %v4914 = vunpack.c.l.b16 %v3509
        %v4915 = vunpack.c.h.b16 %v3509
        %v4916 = vunpack.c.l.b16 %v3510
        %v4917 = vunpack.c.h.b16 %v3510
        %v4918 = vunpack.c.l.b16 %v3511
        %v4919 = vunpack.c.h.b16 %v3511
        %v4920 = vunpack.c.l.b16 %v3512
        %v4921 = vunpack.c.h.b16 %v3512
        %v4922 = vunpack.c.l.b16 %v3513
        %v4923 = vunpack.c.h.b16 %v3513
        %v4924 = vunpack.c.l.b16 %v3514
        %v4925 = vunpack.c.h.b16 %v3514
        %v4926 = vunpack.c.l.b16 %v3515
        %v4927 = vunpack.c.h.b16 %v3515
        %v4928 = vunpack.c.l.b16 %v3516
        %v4929 = vunpack.c.h.b16 %v3516
        %v4930 = vunpack.c.l.b16 %v3517
        %v4931 = vunpack.c.h.b16 %v3517
        %v4932 = vunpack.c.l.b16 %v3518
        %v4933 = vunpack.c.h.b16 %v3518
        %v4934 = vunpack.c.l.b16 %v3519
        %v4935 = vunpack.c.h.b16 %v3519
        %v4936 = vunpack.c.l.b16 %v3520
        %v4937 = vunpack.c.h.b16 %v3520
        %v4938 = vunpack.c.l.b16 %v3521
        %v4939 = vunpack.c.h.b16 %v3521
        %v4940 = vunpack.c.l.b16 %v3522
        %v4941 = vunpack.c.h.b16 %v3522
        %v4942 = vunpack.c.l.b16 %v3523
        %v4943 = vunpack.c.h.b16 %v3523
        %v4944 = vunpack.c.l.b16 %v3524
        %v4945 = vunpack.c.h.b16 %v3524
        %v4946 = vunpack.c.l.b16 %v3525
        %v4947 = vunpack.c.h.b16 %v3525
        %v4948 = vunpack.c.l.b16 %v3526
        %v4949 = vunpack.c.h.b16 %v3526
        %v4950 = vunpack.c.l.b16 %v3527
        %v4951 = vunpack.c.h.b16 %v3527
        %v4952 = vunpack.c.l.b16 %v3528
        %v4953 = vunpack.c.h.b16 %v3528
        %v4954 = vunpack.c.l.b16 %v3529
        %v4955 = vunpack.c.h.b16 %v3529
        %v4956 = vunpack.c.l.b16 %v3530
        %v4957 = vunpack.c.h.b16 %v3530
        %v4958 = vunpack.c.l.b16 %v3531
        %v4959 = vunpack.c.h.b16 %v3531
        %v4960 = vunpack.c.l.b16 %v3532
        %v4961 = vunpack.c.h.b16 %v3532
        %v4962 = vunpack.c.l.b16 %v3533
        %v4963 = vunpack.c.h.b16 %v3533
        %v4964 = vunpack.c.l.b16 %v3534
        %v4965 = vunpack.c.h.b16 %v3534
        %v4966 = vunpack.c.l.b16 %v3535
        %v4967 = vunpack.c.h.b16 %v3535
        %v4968 = vunpack.c.l.b16 %v3536
        %v4969 = vunpack.c.h.b16 %v3536
        %v4970 = vunpack.c.l.b16 %v3537
        %v4971 = vunpack.c.h.b16 %v3537
        %v4972 = vunpack.c.l.b16 %v3538
        %v4973 = vunpack.c.h.b16 %v3538
        %v4974 = vunpack.c.l.b16 %v3539
        %v4975 = vunpack.c.h.b16 %v3539
        %v4976 = vunpack.c.l.b16 %v3540
        %v4977 = vunpack.c.h.b16 %v3540
        %v4978 = vunpack.c.l.b16 %v3541
        %v4979 = vunpack.c.h.b16 %v3541
        %v4980 = vunpack.c.l.b16 %v3542
        %v4981 = vunpack.c.h.b16 %v3542
        %v4982 = vunpack.c.l.b16 %v3543
        %v4983 = vunpack.c.h.b16 %v3543
        %v4984 = vunpack.c.l.b16 %v3544
        %v4985 = vunpack.c.h.b16 %v3544
        %v4986 = vunpack.c.l.b16 %v3545
        %v4987 = vunpack.c.h.b16 %v3545
        %v4988 = vunpack.c.l.b16 %v3546
        %v4989 = vunpack.c.h.b16 %v3546
        %v4990 = vunpack.c.l.b16 %v3547
        %v4991 = vunpack.c.h.b16 %v3547
        %v4992 = vunpack.c.l.b16 %v3548
        %v4993 = vunpack.c.h.b16 %v3548
        %v4994 = vunpack.c.l.b16 %v3549
        %v4995 = vunpack.c.h.b16 %v3549
        %v4996 = vunpack.c.l.b16 %v3550
        %v4997 = vunpack.c.h.b16 %v3550
        %v4998 = vunpack.c.l.b16 %v3551
        %v4999 = vunpack.c.h.b16 %v3551
        %v5000 = vunpack.c.l.b16 %v3552
        %v5001 = vunpack.c.h.b16 %v3552
        %v5002 = vunpack.c.l.b16 %v3553
        %v5003 = vunpack.c.h.b16 %v3553
        %v5004 = vunpack.c.l.b16 %v3554
        %v5005 = vunpack.c.h.b16 %v3554
        %v5006 = vunpack.c.l.b16 %v3555
        %v5007 = vunpack.c.h.b16 %v3555
        %v5008 = vunpack.c.l.b16 %v3556
        %v5009 = vunpack.c.h.b16 %v3556
        %v5010 = vunpack.c.l.b16 %v3557
        %v5011 = vunpack.c.h.b16 %v3557
        %v5012 = vunpack.c.l.b16 %v3558
        %v5013 = vunpack.c.h.b16 %v3558
        %v5014 = vunpack.c.l.b16 %v3559
        %v5015 = vunpack.c.h.b16 %v3559
        %v5016 = vunpack.c.l.b16 %v3560
        %v5017 = vunpack.c.h.b16 %v3560
        %v5018 = vunpack.c.l.b16 %v3561
        %v5019 = vunpack.c.h.b16 %v3561
        %v5020 = vunpack.c.l.b16 %v3562
        %v5021 = vunpack.c.h.b16 %v3562
        %v5022 = vunpack.c.l.b16 %v3563
        %v5023 = vunpack.c.h.b16 %v3563
        %v5024 = vunpack.c.l.b16 %v3564
        %v5025 = vunpack.c.h.b16 %v3564
        %v5026 = vunpack.c.l.b16 %v3565
        %v5027 = vunpack.c.h.b16 %v3565
        %v5028 = vunpack.c.l.b16 %v3566
        %v5029 = vunpack.c.h.b16 %v3566
        %v5030 = vunpack.c.l.b16 %v3567
        %v5031 = vunpack.c.h.b16 %v3567
        %v5032 = vunpack.c.l.b16 %v3568
        %v5033 = vunpack.c.h.b16 %v3568
        %v5034 = vunpack.c.l.b16 %v3569
        %v5035 = vunpack.c.h.b16 %v3569
        %v5036 = vunpack.c.l.b16 %v3570
        %v5037 = vunpack.c.h.b16 %v3570
        %v5038 = vunpack.c.l.b16 %v3571
        %v5039 = vunpack.c.h.b16 %v3571
        %v5040 = vunpack.c.l.b16 %v3572
        %v5041 = vunpack.c.h.b16 %v3572
        %v5042 = vunpack.c.l.b16 %v3573
        %v5043 = vunpack.c.h.b16 %v3573
        %v5044 = vunpack.c.l.b16 %v3574
        %v5045 = vunpack.c.h.b16 %v3574
        %v5046 = vunpack.c.l.b16 %v3575
        %v5047 = vunpack.c.h.b16 %v3575
        %v5048 = vunpack.c.l.b16 %v3576
        %v5049 = vunpack.c.h.b16 %v3576
        %v5050 = vunpack.c.l.b16 %v3577
        %v5051 = vunpack.c.h.b16 %v3577
        %v5052 = vunpack.c.l.b16 %v3578
        %v5053 = vunpack.c.h.b16 %v3578
        %v5054 = vunpack.c.l.b16 %v3579
        %v5055 = vunpack.c.h.b16 %v3579
        %v5056 = vunpack.c.l.b16 %v3580
        %v5057 = vunpack.c.h.b16 %v3580
        %v5058 = vunpack.c.l.b16 %v3581
        %v5059 = vunpack.c.h.b16 %v3581
        %v5060 = vunpack.c.l.b16 %v3582
        %v5061 = vunpack.c.h.b16 %v3582
        %v5062 = vunpack.c.l.b16 %v3583
        %v5063 = vunpack.c.h.b16 %v3583
        %v5064 = vunpack.c.l.b16 %v3584
        %v5065 = vunpack.c.h.b16 %v3584
        %v5066 = vunpack.c.l.b16 %v3585
        %v5067 = vunpack.c.h.b16 %v3585
        %v5068 = vunpack.c.l.b16 %v3586
        %v5069 = vunpack.c.h.b16 %v3586
        %v5070 = vunpack.c.l.b16 %v3587
        %v5071 = vunpack.c.h.b16 %v3587
        %v5072 = vunpack.c.l.b16 %v3588
        %v5073 = vunpack.c.h.b16 %v3588
        %v5074 = vunpack.c.l.b16 %v3589
        %v5075 = vunpack.c.h.b16 %v3589
        %v5076 = vunpack.c.l.b16 %v3590
        %v5077 = vunpack.c.h.b16 %v3590
        %v5078 = vunpack.c.l.b16 %v3591
        %v5079 = vunpack.c.h.b16 %v3591
        %v5080 = vunpack.c.l.b16 %v3592
        %v5081 = vunpack.c.h.b16 %v3592
        %v5082 = vunpack.c.l.b16 %v3593
        %v5083 = vunpack.c.h.b16 %v3593
        %v5084 = vunpack.c.l.b16 %v3594
        %v5085 = vunpack.c.h.b16 %v3594
        %v5086 = vunpack.c.l.b16 %v3595
        %v5087 = vunpack.c.h.b16 %v3595
        %v5088 = vunpack.c.l.b16 %v3596
        %v5089 = vunpack.c.h.b16 %v3596
        %v5090 = vunpack.c.l.b16 %v3597
        %v5091 = vunpack.c.h.b16 %v3597
        %v5092 = vunpack.c.l.b16 %v3598
        %v5093 = vunpack.c.h.b16 %v3598
        %v5094 = vunpack.c.l.b16 %v3599
        %v5095 = vunpack.c.h.b16 %v3599
        %v5096 = vunpack.c.l.b16 %v3600
        %v5097 = vunpack.c.h.b16 %v3600
        %v5098 = vunpack.c.l.b16 %v3601
        %v5099 = vunpack.c.h.b16 %v3601
        %v5100 = vunpack.c.l.b16 %v3602
        %v5101 = vunpack.c.h.b16 %v3602
        %v5102 = vunpack.c.l.b16 %v3603
        %v5103 = vunpack.c.h.b16 %v3603
        %v5104 = vunpack.c.l.b16 %v3604
        %v5105 = vunpack.c.h.b16 %v3604
        %v5106 = vunpack.c.l.b16 %v3605
        %v5107 = vunpack.c.h.b16 %v3605
        %v5108 = vunpack.c.l.b16 %v3606
        %v5109 = vunpack.c.h.b16 %v3606
        %v5110 = vunpack.c.l.b16 %v3607
        %v5111 = vunpack.c.h.b16 %v3607
        %v5112 = vunpack.c.l.b16 %v3608
        %v5113 = vunpack.c.h.b16 %v3608
        %v5114 = vunpack.c.l.b16 %v3609
        %v5115 = vunpack.c.h.b16 %v3609
        %v5116 = vunpack.c.l.b16 %v3610
        %v5117 = vunpack.c.h.b16 %v3610
        %v5118 = vunpack.c.l.b16 %v3611
        %v5119 = vunpack.c.h.b16 %v3611
        %v5120 = vunpack.c.l.b16 %v3612
        %v5121 = vunpack.c.h.b16 %v3612
        %v5122 = vunpack.c.l.b16 %v3613
        %v5123 = vunpack.c.h.b16 %v3613
        %v5124 = vunpack.c.l.b16 %v3614
        %v5125 = vunpack.c.h.b16 %v3614
        %v5126 = vunpack.c.l.b16 %v3615
        %v5127 = vunpack.c.h.b16 %v3615
        %v5128 = vunpack.c.l.b16 %v3616
        %v5129 = vunpack.c.h.b16 %v3616
        %v5130 = vunpack.c.l.b16 %v3617
        %v5131 = vunpack.c.h.b16 %v3617
        %v5132 = vunpack.c.l.b16 %v3618
        %v5133 = vunpack.c.h.b16 %v3618
        %v5134 = vunpack.c.l.b16 %v3619
        %v5135 = vunpack.c.h.b16 %v3619
        %v5136 = vunpack.c.l.b16 %v3620
        %v5137 = vunpack.c.h.b16 %v3620
        %v5138 = vunpack.c.l.b16 %v3621
        %v5139 = vunpack.c.h.b16 %v3621
        %v5140 = vunpack.c.l.b16 %v3622
        %v5141 = vunpack.c.h.b16 %v3622
        %v5142 = vunpack.c.l.b16 %v3623
        %v5143 = vunpack.c.h.b16 %v3623
        %v5144 = vunpack.c.l.b16 %v3624
        %v5145 = vunpack.c.h.b16 %v3624
        %v5146 = vunpack.c.l.b16 %v3625
        %v5147 = vunpack.c.h.b16 %v3625
        %v5148 = vunpack.c.l.b16 %v3626
        %v5149 = vunpack.c.h.b16 %v3626
        %v5150 = vunpack.c.l.b16 %v3627
        %v5151 = vunpack.c.h.b16 %v3627
        %v5152 = vunpack.c.l.b16 %v3628
        %v5153 = vunpack.c.h.b16 %v3628
        %v5154 = vunpack.c.l.b16 %v3629
        %v5155 = vunpack.c.h.b16 %v3629
        %v5156 = vunpack.c.l.b16 %v3630
        %v5157 = vunpack.c.h.b16 %v3630
        %v5158 = vunpack.c.l.b16 %v3631
        %v5159 = vunpack.c.h.b16 %v3631
        %v5160 = vunpack.c.l.b16 %v3632
        %v5161 = vunpack.c.h.b16 %v3632
        %v5162 = vunpack.c.l.b16 %v3633
        %v5163 = vunpack.c.h.b16 %v3633
        %v5164 = vunpack.c.l.b16 %v3634
        %v5165 = vunpack.c.h.b16 %v3634
        %v5166 = vunpack.c.l.b16 %v3635
        %v5167 = vunpack.c.h.b16 %v3635
        %v5168 = vunpack.c.l.b16 %v3636
        %v5169 = vunpack.c.h.b16 %v3636
        %v5170 = vunpack.c.l.b16 %v3637
        %v5171 = vunpack.c.h.b16 %v3637
        %v5172 = vunpack.c.l.b16 %v3638
        %v5173 = vunpack.c.h.b16 %v3638
        %v5174 = vunpack.c.l.b16 %v3639
        %v5175 = vunpack.c.h.b16 %v3639
        %v5176 = vunpack.c.l.b16 %v3640
        %v5177 = vunpack.c.h.b16 %v3640
        %v5178 = vunpack.c.l.b16 %v3641
        %v5179 = vunpack.c.h.b16 %v3641
        %v5180 = vunpack.c.l.b16 %v3642
        %v5181 = vunpack.c.h.b16 %v3642
        %v5182 = vunpack.c.l.b16 %v3643
        %v5183 = vunpack.c.h.b16 %v3643
        %v5184 = vunpack.c.l.b16 %v3644
        %v5185 = vunpack.c.h.b16 %v3644
        %v5186 = vunpack.c.l.b16 %v3645
        %v5187 = vunpack.c.h.b16 %v3645
        %v5188 = vunpack.c.l.b16 %v3646
        %v5189 = vunpack.c.h.b16 %v3646
        %v5190 = vunpack.c.l.b16 %v3647
        %v5191 = vunpack.c.h.b16 %v3647
        %v5192 = vunpack.c.l.b16 %v3648
        %v5193 = vunpack.c.h.b16 %v3648
        %v5194 = vunpack.c.l.b16 %v3649
        %v5195 = vunpack.c.h.b16 %v3649
        %v5196 = vunpack.c.l.b16 %v3650
        %v5197 = vunpack.c.h.b16 %v3650
        %v5198 = vunpack.c.l.b16 %v3651
        %v5199 = vunpack.c.h.b16 %v3651
        %v5200 = vunpack.c.l.b16 %v3652
        %v5201 = vunpack.c.h.b16 %v3652
        %v5202 = vunpack.c.l.b16 %v3653
        %v5203 = vunpack.c.h.b16 %v3653
        %v5204 = vunpack.c.l.b16 %v3654
        %v5205 = vunpack.c.h.b16 %v3654
        %v5206 = vunpack.c.l.b16 %v3655
        %v5207 = vunpack.c.h.b16 %v3655
        %v5208 = vunpack.c.l.b16 %v3656
        %v5209 = vunpack.c.h.b16 %v3656
        %v5210 = vunpack.c.l.b16 %v3657
        %v5211 = vunpack.c.h.b16 %v3657
        %v5212 = vunpack.c.l.b16 %v3658
        %v5213 = vunpack.c.h.b16 %v3658
        %v5214 = vunpack.c.l.b16 %v3659
        %v5215 = vunpack.c.h.b16 %v3659
        %v5216 = vunpack.c.l.b16 %v3660
        %v5217 = vunpack.c.h.b16 %v3660
        %v5218 = vunpack.c.l.b16 %v3661
        %v5219 = vunpack.c.h.b16 %v3661
        %v5220 = vpack.c.b16 %v4200, %v4196
        %v5221 = vpack.c.b16 %v4201, %v4197
        %v5222 = vpack.c.b16 %v4202, %v4198
        %v5223 = vpack.c.b16 %v4203, %v4199
        %v5224 = vpack.c.b16 %v4208, %v4204
        %v5225 = vpack.c.b16 %v4209, %v4205
        %v5226 = vpack.c.b16 %v4210, %v4206
        %v5227 = vpack.c.b16 %v4211, %v4207
        %v5228 = vpack.c.b16 %v4216, %v4212
        %v5229 = vpack.c.b16 %v4217, %v4213
        %v5230 = vpack.c.b16 %v4218, %v4214
        %v5231 = vpack.c.b16 %v4219, %v4215
        %v5232 = vpack.c.b16 %v4224, %v4220
        %v5233 = vpack.c.b16 %v4225, %v4221
        %v5234 = vpack.c.b16 %v4226, %v4222
        %v5235 = vpack.c.b16 %v4227, %v4223
        %v5236 = vpack.c.b16 %v4232, %v4228
        %v5237 = vpack.c.b16 %v4233, %v4229
        %v5238 = vpack.c.b16 %v4234, %v4230
        %v5239 = vpack.c.b16 %v4235, %v4231
        %v5240 = vpack.c.b16 %v4240, %v4236
        %v5241 = vpack.c.b16 %v4241, %v4237
        %v5242 = vpack.c.b16 %v4242, %v4238
        %v5243 = vpack.c.b16 %v4243, %v4239
        %v5244 = vpack.c.b16 %v4248, %v4244
        %v5245 = vpack.c.b16 %v4249, %v4245
        %v5246 = vpack.c.b16 %v4250, %v4246
        %v5247 = vpack.c.b16 %v4251, %v4247
        %v5248 = vpack.c.b16 %v4256, %v4252
        %v5249 = vpack.c.b16 %v4257, %v4253
        %v5250 = vpack.c.b16 %v4258, %v4254
        %v5251 = vpack.c.b16 %v4259, %v4255
        %v5252 = vpack.c.b16 %v4264, %v4260
        %v5253 = vpack.c.b16 %v4265, %v4261
        %v5254 = vpack.c.b16 %v4266, %v4262
        %v5255 = vpack.c.b16 %v4267, %v4263
        %v5256 = vpack.c.b16 %v4272, %v4268
        %v5257 = vpack.c.b16 %v4273, %v4269
        %v5258 = vpack.c.b16 %v4274, %v4270
        %v5259 = vpack.c.b16 %v4275, %v4271
        %v5260 = vpack.c.b16 %v4280, %v4276
        %v5261 = vpack.c.b16 %v4281, %v4277
        %v5262 = vpack.c.b16 %v4282, %v4278
        %v5263 = vpack.c.b16 %v4283, %v4279
        %v5264 = vpack.c.b16 %v4288, %v4284
        %v5265 = vpack.c.b16 %v4289, %v4285
        %v5266 = vpack.c.b16 %v4290, %v4286
        %v5267 = vpack.c.b16 %v4291, %v4287
        %v5268 = vpack.c.b16 %v4296, %v4292
        %v5269 = vpack.c.b16 %v4297, %v4293
        %v5270 = vpack.c.b16 %v4298, %v4294
        %v5271 = vpack.c.b16 %v4299, %v4295
        %v5272 = vpack.c.b16 %v4304, %v4300
        %v5273 = vpack.c.b16 %v4305, %v4301
        %v5274 = vpack.c.b16 %v4306, %v4302
        %v5275 = vpack.c.b16 %v4307, %v4303
        %v5276 = vpack.c.b16 %v4312, %v4308
        %v5277 = vpack.c.b16 %v4313, %v4309
        %v5278 = vpack.c.b16 %v4314, %v4310
        %v5279 = vpack.c.b16 %v4315, %v4311
        %v5280 = vpack.c.b16 %v4320, %v4316
        %v5281 = vpack.c.b16 %v4321, %v4317
        %v5282 = vpack.c.b16 %v4322, %v4318
        %v5283 = vpack.c.b16 %v4323, %v4319
        %v5284 = vpack.c.b16 %v4328, %v4324
        %v5285 = vpack.c.b16 %v4329, %v4325
        %v5286 = vpack.c.b16 %v4330, %v4326
        %v5287 = vpack.c.b16 %v4331, %v4327
        %v5288 = vpack.c.b16 %v4336, %v4332
        %v5289 = vpack.c.b16 %v4337, %v4333
        %v5290 = vpack.c.b16 %v4338, %v4334
        %v5291 = vpack.c.b16 %v4339, %v4335
        %v5292 = vpack.c.b16 %v4344, %v4340
        %v5293 = vpack.c.b16 %v4345, %v4341
        %v5294 = vpack.c.b16 %v4346, %v4342
        %v5295 = vpack.c.b16 %v4347, %v4343
        %v5296 = vpack.c.b16 %v4352, %v4348
        %v5297 = vpack.c.b16 %v4353, %v4349
        %v5298 = vpack.c.b16 %v4354, %v4350
        %v5299 = vpack.c.b16 %v4355, %v4351
        %v5300 = vpack.c.b16 %v4360, %v4356
        %v5301 = vpack.c.b16 %v4361, %v4357
        %v5302 = vpack.c.b16 %v4362, %v4358
        %v5303 = vpack.c.b16 %v4363, %v4359
        %v5304 = vpack.c.b16 %v4368, %v4364
        %v5305 = vpack.c.b16 %v4369, %v4365
        %v5306 = vpack.c.b16 %v4370, %v4366
        %v5307 = vpack.c.b16 %v4371, %v4367
        %v5308 = vpack.c.b16 %v4376, %v4372
        %v5309 = vpack.c.b16 %v4377, %v4373
        %v5310 = vpack.c.b16 %v4378, %v4374
        %v5311 = vpack.c.b16 %v4379, %v4375
        %v5312 = vpack.c.b16 %v4384, %v4380
        %v5313 = vpack.c.b16 %v4385, %v4381
        %v5314 = vpack.c.b16 %v4386, %v4382
        %v5315 = vpack.c.b16 %v4387, %v4383
        %v5316 = vpack.c.b16 %v4392, %v4388
        %v5317 = vpack.c.b16 %v4393, %v4389
        %v5318 = vpack.c.b16 %v4394, %v4390
        %v5319 = vpack.c.b16 %v4395, %v4391
        %v5320 = vpack.c.b16 %v4400, %v4396
        %v5321 = vpack.c.b16 %v4401, %v4397
        %v5322 = vpack.c.b16 %v4402, %v4398
        %v5323 = vpack.c.b16 %v4403, %v4399
        %v5324 = vpack.c.b16 %v4408, %v4404
        %v5325 = vpack.c.b16 %v4409, %v4405
        %v5326 = vpack.c.b16 %v4410, %v4406
        %v5327 = vpack.c.b16 %v4411, %v4407
        %v5328 = vpack.c.b16 %v4416, %v4412
        %v5329 = vpack.c.b16 %v4417, %v4413
        %v5330 = vpack.c.b16 %v4418, %v4414
        %v5331 = vpack.c.b16 %v4419, %v4415
        %v5332 = vpack.c.b16 %v4424, %v4420
        %v5333 = vpack.c.b16 %v4425, %v4421
        %v5334 = vpack.c.b16 %v4426, %v4422
        %v5335 = vpack.c.b16 %v4427, %v4423
        %v5336 = vpack.c.b16 %v4432, %v4428
        %v5337 = vpack.c.b16 %v4433, %v4429
        %v5338 = vpack.c.b16 %v4434, %v4430
        %v5339 = vpack.c.b16 %v4435, %v4431
        %v5340 = vpack.c.b16 %v4440, %v4436
        %v5341 = vpack.c.b16 %v4441, %v4437
        %v5342 = vpack.c.b16 %v4442, %v4438
        %v5343 = vpack.c.b16 %v4443, %v4439
        %v5344 = vpack.c.b16 %v4448, %v4444
        %v5345 = vpack.c.b16 %v4449, %v4445
        %v5346 = vpack.c.b16 %v4450, %v4446
        %v5347 = vpack.c.b16 %v4451, %v4447
        %v5348 = vpack.c.b16 %v4456, %v4452
        %v5349 = vpack.c.b16 %v4457, %v4453
        %v5350 = vpack.c.b16 %v4458, %v4454
        %v5351 = vpack.c.b16 %v4459, %v4455
        %v5352 = vpack.c.b16 %v4464, %v4460
        %v5353 = vpack.c.b16 %v4465, %v4461
        %v5354 = vpack.c.b16 %v4466, %v4462
        %v5355 = vpack.c.b16 %v4467, %v4463
        %v5356 = vpack.c.b16 %v4472, %v4468
        %v5357 = vpack.c.b16 %v4473, %v4469
        %v5358 = vpack.c.b16 %v4474, %v4470
        %v5359 = vpack.c.b16 %v4475, %v4471
        %v5360 = vpack.c.b16 %v4480, %v4476
        %v5361 = vpack.c.b16 %v4481, %v4477
        %v5362 = vpack.c.b16 %v4482, %v4478
        %v5363 = vpack.c.b16 %v4483, %v4479
        %v5364 = vpack.c.b16 %v4488, %v4484
        %v5365 = vpack.c.b16 %v4489, %v4485
        %v5366 = vpack.c.b16 %v4490, %v4486
        %v5367 = vpack.c.b16 %v4491, %v4487
        %v5368 = vpack.c.b16 %v4496, %v4492
        %v5369 = vpack.c.b16 %v4497, %v4493
        %v5370 = vpack.c.b16 %v4498, %v4494
        %v5371 = vpack.c.b16 %v4499, %v4495
        %v5372 = vpack.c.b16 %v4504, %v4500
        %v5373 = vpack.c.b16 %v4505, %v4501
        %v5374 = vpack.c.b16 %v4506, %v4502
        %v5375 = vpack.c.b16 %v4507, %v4503
        %v5376 = vpack.c.b16 %v4512, %v4508
        %v5377 = vpack.c.b16 %v4513, %v4509
        %v5378 = vpack.c.b16 %v4514, %v4510
        %v5379 = vpack.c.b16 %v4515, %v4511
        %v5380 = vpack.c.b16 %v4520, %v4516
        %v5381 = vpack.c.b16 %v4521, %v4517
        %v5382 = vpack.c.b16 %v4522, %v4518
        %v5383 = vpack.c.b16 %v4523, %v4519
        %v5384 = vpack.c.b16 %v4528, %v4524
        %v5385 = vpack.c.b16 %v4529, %v4525
        %v5386 = vpack.c.b16 %v4530, %v4526
        %v5387 = vpack.c.b16 %v4531, %v4527
        %v5388 = vpack.c.b16 %v4536, %v4532
        %v5389 = vpack.c.b16 %v4537, %v4533
        %v5390 = vpack.c.b16 %v4538, %v4534
        %v5391 = vpack.c.b16 %v4539, %v4535
        %v5392 = vpack.c.b16 %v4544, %v4540
        %v5393 = vpack.c.b16 %v4545, %v4541
        %v5394 = vpack.c.b16 %v4546, %v4542
        %v5395 = vpack.c.b16 %v4547, %v4543
        %v5396 = vpack.c.b16 %v4552, %v4548
        %v5397 = vpack.c.b16 %v4553, %v4549
        %v5398 = vpack.c.b16 %v4554, %v4550
        %v5399 = vpack.c.b16 %v4555, %v4551
        %v5400 = vpack.c.b16 %v4560, %v4556
        %v5401 = vpack.c.b16 %v4561, %v4557
        %v5402 = vpack.c.b16 %v4562, %v4558
        %v5403 = vpack.c.b16 %v4563, %v4559
        %v5404 = vpack.c.b16 %v4568, %v4564
        %v5405 = vpack.c.b16 %v4569, %v4565
        %v5406 = vpack.c.b16 %v4570, %v4566
        %v5407 = vpack.c.b16 %v4571, %v4567
        %v5408 = vpack.c.b16 %v4576, %v4572
        %v5409 = vpack.c.b16 %v4577, %v4573
        %v5410 = vpack.c.b16 %v4578, %v4574
        %v5411 = vpack.c.b16 %v4579, %v4575
        %v5412 = vpack.c.b16 %v4584, %v4580
        %v5413 = vpack.c.b16 %v4585, %v4581
        %v5414 = vpack.c.b16 %v4586, %v4582
        %v5415 = vpack.c.b16 %v4587, %v4583
        %v5416 = vpack.c.b16 %v4592, %v4588
        %v5417 = vpack.c.b16 %v4593, %v4589
        %v5418 = vpack.c.b16 %v4594, %v4590
        %v5419 = vpack.c.b16 %v4595, %v4591
        %v5420 = vpack.c.b16 %v4600, %v4596
        %v5421 = vpack.c.b16 %v4601, %v4597
        %v5422 = vpack.c.b16 %v4602, %v4598
        %v5423 = vpack.c.b16 %v4603, %v4599
        %v5424 = vpack.c.b16 %v4608, %v4604
        %v5425 = vpack.c.b16 %v4609, %v4605
        %v5426 = vpack.c.b16 %v4610, %v4606
        %v5427 = vpack.c.b16 %v4611, %v4607
        %v5428 = vpack.c.b16 %v4616, %v4612
        %v5429 = vpack.c.b16 %v4617, %v4613
        %v5430 = vpack.c.b16 %v4618, %v4614
        %v5431 = vpack.c.b16 %v4619, %v4615
        %v5432 = vpack.c.b16 %v4624, %v4620
        %v5433 = vpack.c.b16 %v4625, %v4621
        %v5434 = vpack.c.b16 %v4626, %v4622
        %v5435 = vpack.c.b16 %v4627, %v4623
        %v5436 = vpack.c.b16 %v4632, %v4628
        %v5437 = vpack.c.b16 %v4633, %v4629
        %v5438 = vpack.c.b16 %v4634, %v4630
        %v5439 = vpack.c.b16 %v4635, %v4631
        %v5440 = vpack.c.b16 %v4640, %v4636
        %v5441 = vpack.c.b16 %v4641, %v4637
        %v5442 = vpack.c.b16 %v4642, %v4638
        %v5443 = vpack.c.b16 %v4643, %v4639
        %v5444 = vpack.c.b16 %v4648, %v4644
        %v5445 = vpack.c.b16 %v4649, %v4645
        %v5446 = vpack.c.b16 %v4650, %v4646
        %v5447 = vpack.c.b16 %v4651, %v4647
        %v5448 = vpack.c.b16 %v4656, %v4652
        %v5449 = vpack.c.b16 %v4657, %v4653
        %v5450 = vpack.c.b16 %v4658, %v4654
        %v5451 = vpack.c.b16 %v4659, %v4655
        %v5452 = vpack.c.b16 %v4664, %v4660
        %v5453 = vpack.c.b16 %v4665, %v4661
        %v5454 = vpack.c.b16 %v4666, %v4662
        %v5455 = vpack.c.b16 %v4667, %v4663
        %v5456 = vpack.c.b16 %v4672, %v4668
        %v5457 = vpack.c.b16 %v4673, %v4669
        %v5458 = vpack.c.b16 %v4674, %v4670
        %v5459 = vpack.c.b16 %v4675, %v4671
        %v5460 = vpack.c.b16 %v4680, %v4676
        %v5461 = vpack.c.b16 %v4681, %v4677
        %v5462 = vpack.c.b16 %v4682, %v4678
        %v5463 = vpack.c.b16 %v4683, %v4679
        %v5464 = vpack.c.b16 %v4688, %v4684
        %v5465 = vpack.c.b16 %v4689, %v4685
        %v5466 = vpack.c.b16 %v4690, %v4686
        %v5467 = vpack.c.b16 %v4691, %v4687
        %v5468 = vpack.c.b16 %v4696, %v4692
        %v5469 = vpack.c.b16 %v4697, %v4693
        %v5470 = vpack.c.b16 %v4698, %v4694
        %v5471 = vpack.c.b16 %v4699, %v4695
        %v5472 = vpack.c.b16 %v4704, %v4700
        %v5473 = vpack.c.b16 %v4705, %v4701
        %v5474 = vpack.c.b16 %v4706, %v4702
        %v5475 = vpack.c.b16 %v4707, %v4703
        %v5476 = vpack.c.b16 %v4712, %v4708
        %v5477 = vpack.c.b16 %v4713, %v4709
        %v5478 = vpack.c.b16 %v4714, %v4710
        %v5479 = vpack.c.b16 %v4715, %v4711
        %v5480 = vpack.c.b16 %v4720, %v4716
        %v5481 = vpack.c.b16 %v4721, %v4717
        %v5482 = vpack.c.b16 %v4722, %v4718
        %v5483 = vpack.c.b16 %v4723, %v4719
        %v5484 = vpack.c.b16 %v4728, %v4724
        %v5485 = vpack.c.b16 %v4729, %v4725
        %v5486 = vpack.c.b16 %v4730, %v4726
        %v5487 = vpack.c.b16 %v4731, %v4727
        %v5488 = vpack.c.b16 %v4736, %v4732
        %v5489 = vpack.c.b16 %v4737, %v4733
        %v5490 = vpack.c.b16 %v4738, %v4734
        %v5491 = vpack.c.b16 %v4739, %v4735
        %v5492 = vpack.c.b16 %v4744, %v4740
        %v5493 = vpack.c.b16 %v4745, %v4741
        %v5494 = vpack.c.b16 %v4746, %v4742
        %v5495 = vpack.c.b16 %v4747, %v4743
        %v5496 = vpack.c.b16 %v4752, %v4748
        %v5497 = vpack.c.b16 %v4753, %v4749
        %v5498 = vpack.c.b16 %v4754, %v4750
        %v5499 = vpack.c.b16 %v4755, %v4751
        %v5500 = vpack.c.b16 %v4760, %v4756
        %v5501 = vpack.c.b16 %v4761, %v4757
        %v5502 = vpack.c.b16 %v4762, %v4758
        %v5503 = vpack.c.b16 %v4763, %v4759
        %v5504 = vpack.c.b16 %v4768, %v4764
        %v5505 = vpack.c.b16 %v4769, %v4765
        %v5506 = vpack.c.b16 %v4770, %v4766
        %v5507 = vpack.c.b16 %v4771, %v4767
        %v5508 = vpack.c.b16 %v4776, %v4772
        %v5509 = vpack.c.b16 %v4777, %v4773
        %v5510 = vpack.c.b16 %v4778, %v4774
        %v5511 = vpack.c.b16 %v4779, %v4775
        %v5512 = vpack.c.b16 %v4784, %v4780
        %v5513 = vpack.c.b16 %v4785, %v4781
        %v5514 = vpack.c.b16 %v4786, %v4782
        %v5515 = vpack.c.b16 %v4787, %v4783
        %v5516 = vpack.c.b16 %v4792, %v4788
        %v5517 = vpack.c.b16 %v4793, %v4789
        %v5518 = vpack.c.b16 %v4794, %v4790
        %v5519 = vpack.c.b16 %v4795, %v4791
        %v5520 = vpack.c.b16 %v4800, %v4796
        %v5521 = vpack.c.b16 %v4801, %v4797
        %v5522 = vpack.c.b16 %v4802, %v4798
        %v5523 = vpack.c.b16 %v4803, %v4799
        %v5524 = vpack.c.b16 %v4808, %v4804
        %v5525 = vpack.c.b16 %v4809, %v4805
        %v5526 = vpack.c.b16 %v4810, %v4806
        %v5527 = vpack.c.b16 %v4811, %v4807
        %v5528 = vpack.c.b16 %v4816, %v4812
        %v5529 = vpack.c.b16 %v4817, %v4813
        %v5530 = vpack.c.b16 %v4818, %v4814
        %v5531 = vpack.c.b16 %v4819, %v4815
        %v5532 = vpack.c.b16 %v4824, %v4820
        %v5533 = vpack.c.b16 %v4825, %v4821
        %v5534 = vpack.c.b16 %v4826, %v4822
        %v5535 = vpack.c.b16 %v4827, %v4823
        %v5536 = vpack.c.b16 %v4832, %v4828
        %v5537 = vpack.c.b16 %v4833, %v4829
        %v5538 = vpack.c.b16 %v4834, %v4830
        %v5539 = vpack.c.b16 %v4835, %v4831
        %v5540 = vpack.c.b16 %v4840, %v4836
        %v5541 = vpack.c.b16 %v4841, %v4837
        %v5542 = vpack.c.b16 %v4842, %v4838
        %v5543 = vpack.c.b16 %v4843, %v4839
        %v5544 = vpack.c.b16 %v4848, %v4844
        %v5545 = vpack.c.b16 %v4849, %v4845
        %v5546 = vpack.c.b16 %v4850, %v4846
        %v5547 = vpack.c.b16 %v4851, %v4847
        %v5548 = vpack.c.b16 %v4856, %v4852
        %v5549 = vpack.c.b16 %v4857, %v4853
        %v5550 = vpack.c.b16 %v4858, %v4854
        %v5551 = vpack.c.b16 %v4859, %v4855
        %v5552 = vpack.c.b16 %v4864, %v4860
        %v5553 = vpack.c.b16 %v4865, %v4861
        %v5554 = vpack.c.b16 %v4866, %v4862
        %v5555 = vpack.c.b16 %v4867, %v4863
        %v5556 = vpack.c.b16 %v4872, %v4868
        %v5557 = vpack.c.b16 %v4873, %v4869
        %v5558 = vpack.c.b16 %v4874, %v4870
        %v5559 = vpack.c.b16 %v4875, %v4871
        %v5560 = vpack.c.b16 %v4880, %v4876
        %v5561 = vpack.c.b16 %v4881, %v4877
        %v5562 = vpack.c.b16 %v4882, %v4878
        %v5563 = vpack.c.b16 %v4883, %v4879
        %v5564 = vpack.c.b16 %v4888, %v4884
        %v5565 = vpack.c.b16 %v4889, %v4885
        %v5566 = vpack.c.b16 %v4890, %v4886
        %v5567 = vpack.c.b16 %v4891, %v4887
        %v5568 = vpack.c.b16 %v4896, %v4892
        %v5569 = vpack.c.b16 %v4897, %v4893
        %v5570 = vpack.c.b16 %v4898, %v4894
        %v5571 = vpack.c.b16 %v4899, %v4895
        %v5572 = vpack.c.b16 %v4904, %v4900
        %v5573 = vpack.c.b16 %v4905, %v4901
        %v5574 = vpack.c.b16 %v4906, %v4902
        %v5575 = vpack.c.b16 %v4907, %v4903
        %v5576 = vpack.c.b16 %v4912, %v4908
        %v5577 = vpack.c.b16 %v4913, %v4909
        %v5578 = vpack.c.b16 %v4914, %v4910
        %v5579 = vpack.c.b16 %v4915, %v4911
        %v5580 = vpack.c.b16 %v4920, %v4916
        %v5581 = vpack.c.b16 %v4921, %v4917
        %v5582 = vpack.c.b16 %v4922, %v4918
        %v5583 = vpack.c.b16 %v4923, %v4919
        %v5584 = vpack.c.b16 %v4928, %v4924
        %v5585 = vpack.c.b16 %v4929, %v4925
        %v5586 = vpack.c.b16 %v4930, %v4926
        %v5587 = vpack.c.b16 %v4931, %v4927
        %v5588 = vpack.c.b16 %v4936, %v4932
        %v5589 = vpack.c.b16 %v4937, %v4933
        %v5590 = vpack.c.b16 %v4938, %v4934
        %v5591 = vpack.c.b16 %v4939, %v4935
        %v5592 = vpack.c.b16 %v4944, %v4940
        %v5593 = vpack.c.b16 %v4945, %v4941
        %v5594 = vpack.c.b16 %v4946, %v4942
        %v5595 = vpack.c.b16 %v4947, %v4943
        %v5596 = vpack.c.b16 %v4952, %v4948
        %v5597 = vpack.c.b16 %v4953, %v4949
        %v5598 = vpack.c.b16 %v4954, %v4950
        %v5599 = vpack.c.b16 %v4955, %v4951
        %v5600 = vpack.c.b16 %v4960, %v4956
        %v5601 = vpack.c.b16 %v4961, %v4957
        %v5602 = vpack.c.b16 %v4962, %v4958
        %v5603 = vpack.c.b16 %v4963, %v4959
        %v5604 = vpack.c.b16 %v4968, %v4964
        %v5605 = vpack.c.b16 %v4969, %v4965
        %v5606 = vpack.c.b16 %v4970, %v4966
        %v5607 = vpack.c.b16 %v4971, %v4967
        %v5608 = vpack.c.b16 %v4976, %v4972
        %v5609 = vpack.c.b16 %v4977, %v4973
        %v5610 = vpack.c.b16 %v4978, %v4974
        %v5611 = vpack.c.b16 %v4979, %v4975
        %v5612 = vpack.c.b16 %v4984, %v4980
        %v5613 = vpack.c.b16 %v4985, %v4981
        %v5614 = vpack.c.b16 %v4986, %v4982
        %v5615 = vpack.c.b16 %v4987, %v4983
        %v5616 = vpack.c.b16 %v4992, %v4988
        %v5617 = vpack.c.b16 %v4993, %v4989
        %v5618 = vpack.c.b16 %v4994, %v4990
        %v5619 = vpack.c.b16 %v4995, %v4991
        %v5620 = vpack.c.b16 %v5000, %v4996
        %v5621 = vpack.c.b16 %v5001, %v4997
        %v5622 = vpack.c.b16 %v5002, %v4998
        %v5623 = vpack.c.b16 %v5003, %v4999
        %v5624 = vpack.c.b16 %v5008, %v5004
        %v5625 = vpack.c.b16 %v5009, %v5005
        %v5626 = vpack.c.b16 %v5010, %v5006
        %v5627 = vpack.c.b16 %v5011, %v5007
        %v5628 = vpack.c.b16 %v5016, %v5012
        %v5629 = vpack.c.b16 %v5017, %v5013
        %v5630 = vpack.c.b16 %v5018, %v5014
        %v5631 = vpack.c.b16 %v5019, %v5015
        %v5632 = vpack.c.b16 %v5024, %v5020
        %v5633 = vpack.c.b16 %v5025, %v5021
        %v5634 = vpack.c.b16 %v5026, %v5022
        %v5635 = vpack.c.b16 %v5027, %v5023
        %v5636 = vpack.c.b16 %v5032, %v5028
        %v5637 = vpack.c.b16 %v5033, %v5029
        %v5638 = vpack.c.b16 %v5034, %v5030
        %v5639 = vpack.c.b16 %v5035, %v5031
        %v5640 = vpack.c.b16 %v5040, %v5036
        %v5641 = vpack.c.b16 %v5041, %v5037
        %v5642 = vpack.c.b16 %v5042, %v5038
        %v5643 = vpack.c.b16 %v5043, %v5039
        %v5644 = vpack.c.b16 %v5048, %v5044
        %v5645 = vpack.c.b16 %v5049, %v5045
        %v5646 = vpack.c.b16 %v5050, %v5046
        %v5647 = vpack.c.b16 %v5051, %v5047
        %v5648 = vpack.c.b16 %v5056, %v5052
        %v5649 = vpack.c.b16 %v5057, %v5053
        %v5650 = vpack.c.b16 %v5058, %v5054
        %v5651 = vpack.c.b16 %v5059, %v5055
        %v5652 = vpack.c.b16 %v5064, %v5060
        %v5653 = vpack.c.b16 %v5065, %v5061
        %v5654 = vpack.c.b16 %v5066, %v5062
        %v5655 = vpack.c.b16 %v5067, %v5063
        %v5656 = vpack.c.b16 %v5072, %v5068
        %v5657 = vpack.c.b16 %v5073, %v5069
        %v5658 = vpack.c.b16 %v5074, %v5070
        %v5659 = vpack.c.b16 %v5075, %v5071
        %v5660 = vpack.c.b16 %v5080, %v5076
        %v5661 = vpack.c.b16 %v5081, %v5077
        %v5662 = vpack.c.b16 %v5082, %v5078
        %v5663 = vpack.c.b16 %v5083, %v5079
        %v5664 = vpack.c.b16 %v5088, %v5084
        %v5665 = vpack.c.b16 %v5089, %v5085
        %v5666 = vpack.c.b16 %v5090, %v5086
        %v5667 = vpack.c.b16 %v5091, %v5087
        %v5668 = vpack.c.b16 %v5096, %v5092
        %v5669 = vpack.c.b16 %v5097, %v5093
        %v5670 = vpack.c.b16 %v5098, %v5094
        %v5671 = vpack.c.b16 %v5099, %v5095
        %v5672 = vpack.c.b16 %v5104, %v5100
        %v5673 = vpack.c.b16 %v5105, %v5101
        %v5674 = vpack.c.b16 %v5106, %v5102
        %v5675 = vpack.c.b16 %v5107, %v5103
        %v5676 = vpack.c.b16 %v5112, %v5108
        %v5677 = vpack.c.b16 %v5113, %v5109
        %v5678 = vpack.c.b16 %v5114, %v5110
        %v5679 = vpack.c.b16 %v5115, %v5111
        %v5680 = vpack.c.b16 %v5120, %v5116
        %v5681 = vpack.c.b16 %v5121, %v5117
        %v5682 = vpack.c.b16 %v5122, %v5118
        %v5683 = vpack.c.b16 %v5123, %v5119
        %v5684 = vpack.c.b16 %v5128, %v5124
        %v5685 = vpack.c.b16 %v5129, %v5125
        %v5686 = vpack.c.b16 %v5130, %v5126
        %v5687 = vpack.c.b16 %v5131, %v5127
        %v5688 = vpack.c.b16 %v5136, %v5132
        %v5689 = vpack.c.b16 %v5137, %v5133
        %v5690 = vpack.c.b16 %v5138, %v5134
        %v5691 = vpack.c.b16 %v5139, %v5135
        %v5692 = vpack.c.b16 %v5144, %v5140
        %v5693 = vpack.c.b16 %v5145, %v5141
        %v5694 = vpack.c.b16 %v5146, %v5142
        %v5695 = vpack.c.b16 %v5147, %v5143
        %v5696 = vpack.c.b16 %v5152, %v5148
        %v5697 = vpack.c.b16 %v5153, %v5149
        %v5698 = vpack.c.b16 %v5154, %v5150
        %v5699 = vpack.c.b16 %v5155, %v5151
        %v5700 = vpack.c.b16 %v5160, %v5156
        %v5701 = vpack.c.b16 %v5161, %v5157
        %v5702 = vpack.c.b16 %v5162, %v5158
        %v5703 = vpack.c.b16 %v5163, %v5159
        %v5704 = vpack.c.b16 %v5168, %v5164
        %v5705 = vpack.c.b16 %v5169, %v5165
        %v5706 = vpack.c.b16 %v5170, %v5166
        %v5707 = vpack.c.b16 %v5171, %v5167
        %v5708 = vpack.c.b16 %v5176, %v5172
        %v5709 = vpack.c.b16 %v5177, %v5173
        %v5710 = vpack.c.b16 %v5178, %v5174
        %v5711 = vpack.c.b16 %v5179, %v5175
        %v5712 = vpack.c.b16 %v5184, %v5180
        %v5713 = vpack.c.b16 %v5185, %v5181
        %v5714 = vpack.c.b16 %v5186, %v5182
        %v5715 = vpack.c.b16 %v5187, %v5183
        %v5716 = vpack.c.b16 %v5192, %v5188
        %v5717 = vpack.c.b16 %v5193, %v5189
        %v5718 = vpack.c.b16 %v5194, %v5190
        %v5719 = vpack.c.b16 %v5195, %v5191
        %v5720 = vpack.c.b16 %v5200, %v5196
        %v5721 = vpack.c.b16 %v5201, %v5197
        %v5722 = vpack.c.b16 %v5202, %v5198
        %v5723 = vpack.c.b16 %v5203, %v5199
        %v5724 = vpack.c.b16 %v5208, %v5204
        %v5725 = vpack.c.b16 %v5209, %v5205
        %v5726 = vpack.c.b16 %v5210, %v5206
        %v5727 = vpack.c.b16 %v5211, %v5207
        %v5728 = vpack.c.b16 %v5216, %v5212
        %v5729 = vpack.c.b16 %v5217, %v5213
        %v5730 = vpack.c.b16 %v5218, %v5214
        %v5731 = vpack.c.b16 %v5219, %v5215
        %6244 = vmatprep.subr.bf16.mxu0 %v5221
        %6245 = vmatpush1.bf16.msra.mxu0 %v5220
        %6246 = vmatprep.subr.bf16.mxu0 %v5225
        %6247 = vmatpush1.bf16.msra.mxu0 %v5224
        %6248 = vmatprep.subr.bf16.mxu0 %v5229
        %6249 = vmatpush1.bf16.msra.mxu0 %v5228
        %6250 = vmatprep.subr.bf16.mxu0 %v5233
        %6251 = vmatpush1.bf16.msra.mxu0 %v5232
        %6252 = vmatprep.subr.bf16.mxu0 %v5237
        %6253 = vmatpush1.bf16.msra.mxu0 %v5236
        %6254 = vmatprep.subr.bf16.mxu0 %v5241
        %6255 = vmatpush1.bf16.msra.mxu0 %v5240
        %6256 = vmatprep.subr.bf16.mxu0 %v5245
        %6257 = vmatpush1.bf16.msra.mxu0 %v5244
        %6258 = vmatprep.subr.bf16.mxu0 %v5249
        %6259 = vmatpush1.bf16.msra.mxu0 %v5248
        %6260 = vmatprep.subr.bf16.mxu0 %v5253
        %6261 = vmatpush1.bf16.msra.mxu0 %v5252
        %6262 = vmatprep.subr.bf16.mxu0 %v5257
        %6263 = vmatpush1.bf16.msra.mxu0 %v5256
        %6264 = vmatprep.subr.bf16.mxu0 %v5261
        %6265 = vmatpush1.bf16.msra.mxu0 %v5260
        %6266 = vmatprep.subr.bf16.mxu0 %v5265
        %6267 = vmatpush1.bf16.msra.mxu0 %v5264
        %6268 = vmatprep.subr.bf16.mxu0 %v5269
        %6269 = vmatpush1.bf16.msra.mxu0 %v5268
        %6270 = vmatprep.subr.bf16.mxu0 %v5273
        %6271 = vmatpush1.bf16.msra.mxu0 %v5272
        %6272 = vmatprep.subr.bf16.mxu0 %v5277
        %6273 = vmatpush1.bf16.msra.mxu0 %v5276
        %6274 = vmatprep.subr.bf16.mxu0 %v5281
        %6275 = vmatpush1.bf16.msra.mxu0 %v5280
        %6276 = vmatprep.mubr.bf16.mxu0 %v3135
        %6277 = vmatmul.mubr.bf16.gmra.mrb[0].mxu0 %v3134
        %v6278 = vpop.f32.mrb[0].mxu0
        %v6279 = vadd.f32 %v3667, %v6278
        %v6280 = vpop.f32.mrb[0].mxu0
        %v6281 = vadd.f32 %v3671, %v6280
        %v6282 = vpop.f32.mrb[0].mxu0
        %v6283 = vpop.f32.mrb[0].mxu0
        %6284 = vdwg.mxu0
        %6285 = vmatprep.subr.bf16.mxu0 %v5285
        %6286 = vmatpush1.bf16.msra.mxu0 %v5284
        %6287 = vmatprep.subr.bf16.mxu0 %v5289
        %6288 = vmatpush1.bf16.msra.mxu0 %v5288
        %6289 = vmatprep.subr.bf16.mxu0 %v5293
        %6290 = vmatpush1.bf16.msra.mxu0 %v5292
        %6291 = vmatprep.subr.bf16.mxu0 %v5297
        %6292 = vmatpush1.bf16.msra.mxu0 %v5296
        %6293 = vmatprep.subr.bf16.mxu0 %v5301
        %6294 = vmatpush1.bf16.msra.mxu0 %v5300
        %6295 = vmatprep.subr.bf16.mxu0 %v5305
        %6296 = vmatpush1.bf16.msra.mxu0 %v5304
        %6297 = vmatprep.subr.bf16.mxu0 %v5309
        %6298 = vmatpush1.bf16.msra.mxu0 %v5308
        %6299 = vmatprep.subr.bf16.mxu0 %v5313
        %6300 = vmatpush1.bf16.msra.mxu0 %v5312
        %6301 = vmatprep.subr.bf16.mxu0 %v5317
        %6302 = vmatpush1.bf16.msra.mxu0 %v5316
        %6303 = vmatprep.subr.bf16.mxu0 %v5321
        %6304 = vmatpush1.bf16.msra.mxu0 %v5320
        %6305 = vmatprep.subr.bf16.mxu0 %v5325
        %6306 = vmatpush1.bf16.msra.mxu0 %v5324
        %6307 = vmatprep.subr.bf16.mxu0 %v5329
        %6308 = vmatpush1.bf16.msra.mxu0 %v5328
        %6309 = vmatprep.subr.bf16.mxu0 %v5333
        %6310 = vmatpush1.bf16.msra.mxu0 %v5332
        %6311 = vmatprep.subr.bf16.mxu0 %v5337
        %6312 = vmatpush1.bf16.msra.mxu0 %v5336
        %6313 = vmatprep.subr.bf16.mxu0 %v5341
        %6314 = vmatpush1.bf16.msra.mxu0 %v5340
        %6315 = vmatprep.subr.bf16.mxu0 %v5345
        %6316 = vmatpush1.bf16.msra.mxu0 %v5344
        %6317 = vmatprep.mubr.bf16.mxu0 %v3137
        %6318 = vmatmul.mubr.bf16.gmra.mrb[0].mxu0 %v3136
        %v6319 = vpop.f32.mrb[0].mxu0
        %v6320 = vadd.f32 %v6279, %v6319
        %v6321 = vpop.f32.mrb[0].mxu0
        %v6322 = vadd.f32 %v6281, %v6321
        %v6323 = vpop.f32.mrb[0].mxu0
        %v6324 = vpop.f32.mrb[0].mxu0
        %6325 = vdwg.mxu0
        %6326 = vmatprep.subr.bf16.mxu0 %v5349
        %6327 = vmatpush1.bf16.msra.mxu0 %v5348
        %6328 = vmatprep.subr.bf16.mxu0 %v5353
        %6329 = vmatpush1.bf16.msra.mxu0 %v5352
        %6330 = vmatprep.subr.bf16.mxu0 %v5357
        %6331 = vmatpush1.bf16.msra.mxu0 %v5356
        %6332 = vmatprep.subr.bf16.mxu0 %v5361
        %6333 = vmatpush1.bf16.msra.mxu0 %v5360
        %6334 = vmatprep.subr.bf16.mxu0 %v5365
        %6335 = vmatpush1.bf16.msra.mxu0 %v5364
        %6336 = vmatprep.subr.bf16.mxu0 %v5369
        %6337 = vmatpush1.bf16.msra.mxu0 %v5368
        %6338 = vmatprep.subr.bf16.mxu0 %v5373
        %6339 = vmatpush1.bf16.msra.mxu0 %v5372
        %6340 = vmatprep.subr.bf16.mxu0 %v5377
        %6341 = vmatpush1.bf16.msra.mxu0 %v5376
        %6342 = vmatprep.subr.bf16.mxu0 %v5381
        %6343 = vmatpush1.bf16.msra.mxu0 %v5380
        %6344 = vmatprep.subr.bf16.mxu0 %v5385
        %6345 = vmatpush1.bf16.msra.mxu0 %v5384
        %6346 = vmatprep.subr.bf16.mxu0 %v5389
        %6347 = vmatpush1.bf16.msra.mxu0 %v5388
        %6348 = vmatprep.subr.bf16.mxu0 %v5393
        %6349 = vmatpush1.bf16.msra.mxu0 %v5392
        %6350 = vmatprep.subr.bf16.mxu0 %v5397
        %6351 = vmatpush1.bf16.msra.mxu0 %v5396
        %6352 = vmatprep.subr.bf16.mxu0 %v5401
        %6353 = vmatpush1.bf16.msra.mxu0 %v5400
        %6354 = vmatprep.subr.bf16.mxu0 %v5405
        %6355 = vmatpush1.bf16.msra.mxu0 %v5404
        %6356 = vmatprep.subr.bf16.mxu0 %v5409
        %6357 = vmatpush1.bf16.msra.mxu0 %v5408
        %6358 = vmatprep.mubr.bf16.mxu0 %v3139
        %6359 = vmatmul.mubr.bf16.gmra.mrb[0].mxu0 %v3138
        %v6360 = vpop.f32.mrb[0].mxu0
        %v6361 = vadd.f32 %v6320, %v6360
        %v6362 = vpop.f32.mrb[0].mxu0
        %v6363 = vadd.f32 %v6322, %v6362
        %v6364 = vpop.f32.mrb[0].mxu0
        %v6365 = vpop.f32.mrb[0].mxu0
        %6366 = vdwg.mxu0
        %6367 = vmatprep.subr.bf16.mxu0 %v5413
        %6368 = vmatpush1.bf16.msra.mxu0 %v5412
        %6369 = vmatprep.subr.bf16.mxu0 %v5417
        %6370 = vmatpush1.bf16.msra.mxu0 %v5416
        %6371 = vmatprep.subr.bf16.mxu0 %v5421
        %6372 = vmatpush1.bf16.msra.mxu0 %v5420
        %6373 = vmatprep.subr.bf16.mxu0 %v5425
        %6374 = vmatpush1.bf16.msra.mxu0 %v5424
        %6375 = vmatprep.subr.bf16.mxu0 %v5429
        %6376 = vmatpush1.bf16.msra.mxu0 %v5428
        %6377 = vmatprep.subr.bf16.mxu0 %v5433
        %6378 = vmatpush1.bf16.msra.mxu0 %v5432
        %6379 = vmatprep.subr.bf16.mxu0 %v5437
        %6380 = vmatpush1.bf16.msra.mxu0 %v5436
        %6381 = vmatprep.subr.bf16.mxu0 %v5441
        %6382 = vmatpush1.bf16.msra.mxu0 %v5440
        %6383 = vmatprep.subr.bf16.mxu0 %v5445
        %6384 = vmatpush1.bf16.msra.mxu0 %v5444
        %6385 = vmatprep.subr.bf16.mxu0 %v5449
        %6386 = vmatpush1.bf16.msra.mxu0 %v5448
        %6387 = vmatprep.subr.bf16.mxu0 %v5453
        %6388 = vmatpush1.bf16.msra.mxu0 %v5452
        %6389 = vmatprep.subr.bf16.mxu0 %v5457
        %6390 = vmatpush1.bf16.msra.mxu0 %v5456
        %6391 = vmatprep.subr.bf16.mxu0 %v5461
        %6392 = vmatpush1.bf16.msra.mxu0 %v5460
        %6393 = vmatprep.subr.bf16.mxu0 %v5465
        %6394 = vmatpush1.bf16.msra.mxu0 %v5464
        %6395 = vmatprep.subr.bf16.mxu0 %v5469
        %6396 = vmatpush1.bf16.msra.mxu0 %v5468
        %6397 = vmatprep.subr.bf16.mxu0 %v5473
        %6398 = vmatpush1.bf16.msra.mxu0 %v5472
        %6399 = vmatprep.mubr.bf16.mxu0 %v3141
        %6400 = vmatmul.mubr.bf16.gmra.mrb[0].mxu0 %v3140
        %v6401 = vpop.f32.mrb[0].mxu0
        %v6402 = vadd.f32 %v6361, %v6401
        %v6403 = vpop.f32.mrb[0].mxu0
        %v6404 = vadd.f32 %v6363, %v6403
        %v6405 = vpop.f32.mrb[0].mxu0
        %v6406 = vpop.f32.mrb[0].mxu0
        %6407 = vdwg.mxu0
        %6408 = vmatprep.subr.bf16.mxu0 %v5477
        %6409 = vmatpush1.bf16.msra.mxu0 %v5476
        %6410 = vmatprep.subr.bf16.mxu0 %v5481
        %6411 = vmatpush1.bf16.msra.mxu0 %v5480
        %6412 = vmatprep.subr.bf16.mxu0 %v5485
        %6413 = vmatpush1.bf16.msra.mxu0 %v5484
        %6414 = vmatprep.subr.bf16.mxu0 %v5489
        %6415 = vmatpush1.bf16.msra.mxu0 %v5488
        %6416 = vmatprep.subr.bf16.mxu0 %v5493
        %6417 = vmatpush1.bf16.msra.mxu0 %v5492
        %6418 = vmatprep.subr.bf16.mxu0 %v5497
        %6419 = vmatpush1.bf16.msra.mxu0 %v5496
        %6420 = vmatprep.subr.bf16.mxu0 %v5501
        %6421 = vmatpush1.bf16.msra.mxu0 %v5500
        %6422 = vmatprep.subr.bf16.mxu0 %v5505
        %6423 = vmatpush1.bf16.msra.mxu0 %v5504
        %6424 = vmatprep.subr.bf16.mxu0 %v5509
        %6425 = vmatpush1.bf16.msra.mxu0 %v5508
        %6426 = vmatprep.subr.bf16.mxu0 %v5513
        %6427 = vmatpush1.bf16.msra.mxu0 %v5512
        %6428 = vmatprep.subr.bf16.mxu0 %v5517
        %6429 = vmatpush1.bf16.msra.mxu0 %v5516
        %6430 = vmatprep.subr.bf16.mxu0 %v5521
        %6431 = vmatpush1.bf16.msra.mxu0 %v5520
        %6432 = vmatprep.subr.bf16.mxu0 %v5525
        %6433 = vmatpush1.bf16.msra.mxu0 %v5524
        %6434 = vmatprep.subr.bf16.mxu0 %v5529
        %6435 = vmatpush1.bf16.msra.mxu0 %v5528
        %6436 = vmatprep.subr.bf16.mxu0 %v5533
        %6437 = vmatpush1.bf16.msra.mxu0 %v5532
        %6438 = vmatprep.subr.bf16.mxu0 %v5537
        %6439 = vmatpush1.bf16.msra.mxu0 %v5536
        %6440 = vmatprep.mubr.bf16.mxu0 %v3143
        %6441 = vmatmul.mubr.bf16.gmra.mrb[0].mxu0 %v3142
        %v6442 = vpop.f32.mrb[0].mxu0
        %v6443 = vadd.f32 %v6402, %v6442
        %v6444 = vpop.f32.mrb[0].mxu0
        %v6445 = vadd.f32 %v6404, %v6444
        %v6446 = vpop.f32.mrb[0].mxu0
        %v6447 = vpop.f32.mrb[0].mxu0
        %6448 = vdwg.mxu0
        %6449 = vmatprep.subr.bf16.mxu0 %v5541
        %6450 = vmatpush1.bf16.msra.mxu0 %v5540
        %6451 = vmatprep.subr.bf16.mxu0 %v5545
        %6452 = vmatpush1.bf16.msra.mxu0 %v5544
        %6453 = vmatprep.subr.bf16.mxu0 %v5549
        %6454 = vmatpush1.bf16.msra.mxu0 %v5548
        %6455 = vmatprep.subr.bf16.mxu0 %v5553
        %6456 = vmatpush1.bf16.msra.mxu0 %v5552
        %6457 = vmatprep.subr.bf16.mxu0 %v5557
        %6458 = vmatpush1.bf16.msra.mxu0 %v5556
        %6459 = vmatprep.subr.bf16.mxu0 %v5561
        %6460 = vmatpush1.bf16.msra.mxu0 %v5560
        %6461 = vmatprep.subr.bf16.mxu0 %v5565
        %6462 = vmatpush1.bf16.msra.mxu0 %v5564
        %6463 = vmatprep.subr.bf16.mxu0 %v5569
        %6464 = vmatpush1.bf16.msra.mxu0 %v5568
        %6465 = vmatprep.subr.bf16.mxu0 %v5573
        %6466 = vmatpush1.bf16.msra.mxu0 %v5572
        %6467 = vmatprep.subr.bf16.mxu0 %v5577
        %6468 = vmatpush1.bf16.msra.mxu0 %v5576
        %6469 = vmatprep.subr.bf16.mxu0 %v5581
        %6470 = vmatpush1.bf16.msra.mxu0 %v5580
        %6471 = vmatprep.subr.bf16.mxu0 %v5585
        %6472 = vmatpush1.bf16.msra.mxu0 %v5584
        %6473 = vmatprep.subr.bf16.mxu0 %v5589
        %6474 = vmatpush1.bf16.msra.mxu0 %v5588
        %6475 = vmatprep.subr.bf16.mxu0 %v5593
        %6476 = vmatpush1.bf16.msra.mxu0 %v5592
        %6477 = vmatprep.subr.bf16.mxu0 %v5597
        %6478 = vmatpush1.bf16.msra.mxu0 %v5596
        %6479 = vmatprep.subr.bf16.mxu0 %v5601
        %6480 = vmatpush1.bf16.msra.mxu0 %v5600
        %6481 = vmatprep.mubr.bf16.mxu0 %v3145
        %6482 = vmatmul.mubr.bf16.gmra.mrb[0].mxu0 %v3144
        %v6483 = vpop.f32.mrb[0].mxu0
        %v6484 = vadd.f32 %v6443, %v6483
        %v6485 = vpop.f32.mrb[0].mxu0
        %v6486 = vadd.f32 %v6445, %v6485
        %v6487 = vpop.f32.mrb[0].mxu0
        %v6488 = vpop.f32.mrb[0].mxu0
        %6489 = vdwg.mxu0
        %6490 = vmatprep.subr.bf16.mxu0 %v5605
        %6491 = vmatpush1.bf16.msra.mxu0 %v5604
        %6492 = vmatprep.subr.bf16.mxu0 %v5609
        %6493 = vmatpush1.bf16.msra.mxu0 %v5608
        %6494 = vmatprep.subr.bf16.mxu0 %v5613
        %6495 = vmatpush1.bf16.msra.mxu0 %v5612
        %6496 = vmatprep.subr.bf16.mxu0 %v5617
        %6497 = vmatpush1.bf16.msra.mxu0 %v5616
        %6498 = vmatprep.subr.bf16.mxu0 %v5621
        %6499 = vmatpush1.bf16.msra.mxu0 %v5620
        %6500 = vmatprep.subr.bf16.mxu0 %v5625
        %6501 = vmatpush1.bf16.msra.mxu0 %v5624
        %6502 = vmatprep.subr.bf16.mxu0 %v5629
        %6503 = vmatpush1.bf16.msra.mxu0 %v5628
        %6504 = vmatprep.subr.bf16.mxu0 %v5633
        %6505 = vmatpush1.bf16.msra.mxu0 %v5632
        %6506 = vmatprep.subr.bf16.mxu0 %v5637
        %6507 = vmatpush1.bf16.msra.mxu0 %v5636
        %6508 = vmatprep.subr.bf16.mxu0 %v5641
        %6509 = vmatpush1.bf16.msra.mxu0 %v5640
        %6510 = vmatprep.subr.bf16.mxu0 %v5645
        %6511 = vmatpush1.bf16.msra.mxu0 %v5644
        %6512 = vmatprep.subr.bf16.mxu0 %v5649
        %6513 = vmatpush1.bf16.msra.mxu0 %v5648
        %6514 = vmatprep.subr.bf16.mxu0 %v5653
        %6515 = vmatpush1.bf16.msra.mxu0 %v5652
        %6516 = vmatprep.subr.bf16.mxu0 %v5657
        %6517 = vmatpush1.bf16.msra.mxu0 %v5656
        %6518 = vmatprep.subr.bf16.mxu0 %v5661
        %6519 = vmatpush1.bf16.msra.mxu0 %v5660
        %6520 = vmatprep.subr.bf16.mxu0 %v5665
        %6521 = vmatpush1.bf16.msra.mxu0 %v5664
        %6522 = vmatprep.mubr.bf16.mxu0 %v3147
        %6523 = vmatmul.mubr.bf16.gmra.mrb[0].mxu0 %v3146
        %v6524 = vpop.f32.mrb[0].mxu0
        %v6525 = vadd.f32 %v6484, %v6524
        %v6526 = vpop.f32.mrb[0].mxu0
        %v6527 = vadd.f32 %v6486, %v6526
        %v6528 = vpop.f32.mrb[0].mxu0
        %v6529 = vpop.f32.mrb[0].mxu0
        %6530 = vdwg.mxu0
        %6531 = vmatprep.subr.bf16.mxu0 %v5669
        %6532 = vmatpush1.bf16.msra.mxu0 %v5668
        %6533 = vmatprep.subr.bf16.mxu0 %v5673
        %6534 = vmatpush1.bf16.msra.mxu0 %v5672
        %6535 = vmatprep.subr.bf16.mxu0 %v5677
        %6536 = vmatpush1.bf16.msra.mxu0 %v5676
        %6537 = vmatprep.subr.bf16.mxu0 %v5681
        %6538 = vmatpush1.bf16.msra.mxu0 %v5680
        %6539 = vmatprep.subr.bf16.mxu0 %v5685
        %6540 = vmatpush1.bf16.msra.mxu0 %v5684
        %6541 = vmatprep.subr.bf16.mxu0 %v5689
        %6542 = vmatpush1.bf16.msra.mxu0 %v5688
        %6543 = vmatprep.subr.bf16.mxu0 %v5693
        %6544 = vmatpush1.bf16.msra.mxu0 %v5692
        %6545 = vmatprep.subr.bf16.mxu0 %v5697
        %6546 = vmatpush1.bf16.msra.mxu0 %v5696
        %6547 = vmatprep.subr.bf16.mxu0 %v5701
        %6548 = vmatpush1.bf16.msra.mxu0 %v5700
        %6549 = vmatprep.subr.bf16.mxu0 %v5705
        %6550 = vmatpush1.bf16.msra.mxu0 %v5704
        %6551 = vmatprep.subr.bf16.mxu0 %v5709
        %6552 = vmatpush1.bf16.msra.mxu0 %v5708
        %6553 = vmatprep.subr.bf16.mxu0 %v5713
        %6554 = vmatpush1.bf16.msra.mxu0 %v5712
        %6555 = vmatprep.subr.bf16.mxu0 %v5717
        %6556 = vmatpush1.bf16.msra.mxu0 %v5716
        %6557 = vmatprep.subr.bf16.mxu0 %v5721
        %6558 = vmatpush1.bf16.msra.mxu0 %v5720
        %6559 = vmatprep.subr.bf16.mxu0 %v5725
        %6560 = vmatpush1.bf16.msra.mxu0 %v5724
        %6561 = vmatprep.subr.bf16.mxu0 %v5729
        %6562 = vmatpush1.bf16.msra.mxu0 %v5728
        %6563 = vmatprep.mubr.bf16.mxu0 %v3149
        %6564 = vmatmul.mubr.bf16.gmra.mrb[0].mxu0 %v3148
        %v6565 = vpop.f32.mrb[0].mxu0
        %v6566 = vadd.f32 %v6525, %v6565
        %v6567 = vpop.f32.mrb[0].mxu0
        %v6568 = vadd.f32 %v6527, %v6567
        %v6569 = vpop.f32.mrb[0].mxu0
        %v6570 = vpop.f32.mrb[0].mxu0
        %6571 = vdwg.mxu0
        %6572 = vmatprep.subr.bf16.mxu0 %v5223
        %6573 = vmatpush1.bf16.msra.mxu0 %v5222
        %6574 = vmatprep.subr.bf16.mxu0 %v5227
        %6575 = vmatpush1.bf16.msra.mxu0 %v5226
        %6576 = vmatprep.subr.bf16.mxu0 %v5231
        %6577 = vmatpush1.bf16.msra.mxu0 %v5230
        %6578 = vmatprep.subr.bf16.mxu0 %v5235
        %6579 = vmatpush1.bf16.msra.mxu0 %v5234
        %6580 = vmatprep.subr.bf16.mxu0 %v5239
        %6581 = vmatpush1.bf16.msra.mxu0 %v5238
        %6582 = vmatprep.subr.bf16.mxu0 %v5243
        %6583 = vmatpush1.bf16.msra.mxu0 %v5242
        %6584 = vmatprep.subr.bf16.mxu0 %v5247
        %6585 = vmatpush1.bf16.msra.mxu0 %v5246
        %6586 = vmatprep.subr.bf16.mxu0 %v5251
        %6587 = vmatpush1.bf16.msra.mxu0 %v5250
        %6588 = vmatprep.subr.bf16.mxu0 %v5255
        %6589 = vmatpush1.bf16.msra.mxu0 %v5254
        %6590 = vmatprep.subr.bf16.mxu0 %v5259
        %6591 = vmatpush1.bf16.msra.mxu0 %v5258
        %6592 = vmatprep.subr.bf16.mxu0 %v5263
        %6593 = vmatpush1.bf16.msra.mxu0 %v5262
        %6594 = vmatprep.subr.bf16.mxu0 %v5267
        %6595 = vmatpush1.bf16.msra.mxu0 %v5266
        %6596 = vmatprep.subr.bf16.mxu0 %v5271
        %6597 = vmatpush1.bf16.msra.mxu0 %v5270
        %6598 = vmatprep.subr.bf16.mxu0 %v5275
        %6599 = vmatpush1.bf16.msra.mxu0 %v5274
        %6600 = vmatprep.subr.bf16.mxu0 %v5279
        %6601 = vmatpush1.bf16.msra.mxu0 %v5278
        %6602 = vmatprep.subr.bf16.mxu0 %v5283
        %6603 = vmatpush1.bf16.msra.mxu0 %v5282
        %6604 = vmatprep.mubr.bf16.mxu0 %v3135
        %6605 = vmatmul.mubr.bf16.gmra.mrb[0].mxu0 %v3134
        %v6606 = vpop.f32.mrb[0].mxu0
        %v6607 = vadd.f32 %v3675, %v6606
        %v6608 = vpop.f32.mrb[0].mxu0
        %v6609 = vadd.f32 %v3679, %v6608
        %v6610 = vpop.f32.mrb[0].mxu0
        %v6611 = vpop.f32.mrb[0].mxu0
        %6612 = vdwg.mxu0
        %6613 = vmatprep.subr.bf16.mxu0 %v5287
        %6614 = vmatpush1.bf16.msra.mxu0 %v5286
        %6615 = vmatprep.subr.bf16.mxu0 %v5291
        %6616 = vmatpush1.bf16.msra.mxu0 %v5290
        %6617 = vmatprep.subr.bf16.mxu0 %v5295
        %6618 = vmatpush1.bf16.msra.mxu0 %v5294
        %6619 = vmatprep.subr.bf16.mxu0 %v5299
        %6620 = vmatpush1.bf16.msra.mxu0 %v5298
        %6621 = vmatprep.subr.bf16.mxu0 %v5303
        %6622 = vmatpush1.bf16.msra.mxu0 %v5302
        %6623 = vmatprep.subr.bf16.mxu0 %v5307
        %6624 = vmatpush1.bf16.msra.mxu0 %v5306
        %6625 = vmatprep.subr.bf16.mxu0 %v5311
        %6626 = vmatpush1.bf16.msra.mxu0 %v5310
        %6627 = vmatprep.subr.bf16.mxu0 %v5315
        %6628 = vmatpush1.bf16.msra.mxu0 %v5314
        %6629 = vmatprep.subr.bf16.mxu0 %v5319
        %6630 = vmatpush1.bf16.msra.mxu0 %v5318
        %6631 = vmatprep.subr.bf16.mxu0 %v5323
        %6632 = vmatpush1.bf16.msra.mxu0 %v5322
        %6633 = vmatprep.subr.bf16.mxu0 %v5327
        %6634 = vmatpush1.bf16.msra.mxu0 %v5326
        %6635 = vmatprep.subr.bf16.mxu0 %v5331
        %6636 = vmatpush1.bf16.msra.mxu0 %v5330
        %6637 = vmatprep.subr.bf16.mxu0 %v5335
        %6638 = vmatpush1.bf16.msra.mxu0 %v5334
        %6639 = vmatprep.subr.bf16.mxu0 %v5339
        %6640 = vmatpush1.bf16.msra.mxu0 %v5338
        %6641 = vmatprep.subr.bf16.mxu0 %v5343
        %6642 = vmatpush1.bf16.msra.mxu0 %v5342
        %6643 = vmatprep.subr.bf16.mxu0 %v5347
        %6644 = vmatpush1.bf16.msra.mxu0 %v5346
        %6645 = vmatprep.mubr.bf16.mxu0 %v3137
        %6646 = vmatmul.mubr.bf16.gmra.mrb[0].mxu0 %v3136
        %v6647 = vpop.f32.mrb[0].mxu0
        %v6648 = vadd.f32 %v6607, %v6647
        %v6649 = vpop.f32.mrb[0].mxu0
        %v6650 = vadd.f32 %v6609, %v6649
        %v6651 = vpop.f32.mrb[0].mxu0
        %v6652 = vpop.f32.mrb[0].mxu0
        %6653 = vdwg.mxu0
        %6654 = vmatprep.subr.bf16.mxu0 %v5351
        %6655 = vmatpush1.bf16.msra.mxu0 %v5350
        %6656 = vmatprep.subr.bf16.mxu0 %v5355
        %6657 = vmatpush1.bf16.msra.mxu0 %v5354
        %6658 = vmatprep.subr.bf16.mxu0 %v5359
        %6659 = vmatpush1.bf16.msra.mxu0 %v5358
        %6660 = vmatprep.subr.bf16.mxu0 %v5363
        %6661 = vmatpush1.bf16.msra.mxu0 %v5362
        %6662 = vmatprep.subr.bf16.mxu0 %v5367
        %6663 = vmatpush1.bf16.msra.mxu0 %v5366
        %6664 = vmatprep.subr.bf16.mxu0 %v5371
        %6665 = vmatpush1.bf16.msra.mxu0 %v5370
        %6666 = vmatprep.subr.bf16.mxu0 %v5375
        %6667 = vmatpush1.bf16.msra.mxu0 %v5374
        %6668 = vmatprep.subr.bf16.mxu0 %v5379
        %6669 = vmatpush1.bf16.msra.mxu0 %v5378
        %6670 = vmatprep.subr.bf16.mxu0 %v5383
        %6671 = vmatpush1.bf16.msra.mxu0 %v5382
        %6672 = vmatprep.subr.bf16.mxu0 %v5387
        %6673 = vmatpush1.bf16.msra.mxu0 %v5386
        %6674 = vmatprep.subr.bf16.mxu0 %v5391
        %6675 = vmatpush1.bf16.msra.mxu0 %v5390
        %6676 = vmatprep.subr.bf16.mxu0 %v5395
        %6677 = vmatpush1.bf16.msra.mxu0 %v5394
        %6678 = vmatprep.subr.bf16.mxu0 %v5399
        %6679 = vmatpush1.bf16.msra.mxu0 %v5398
        %6680 = vmatprep.subr.bf16.mxu0 %v5403
        %6681 = vmatpush1.bf16.msra.mxu0 %v5402
        %6682 = vmatprep.subr.bf16.mxu0 %v5407
        %6683 = vmatpush1.bf16.msra.mxu0 %v5406
        %6684 = vmatprep.subr.bf16.mxu0 %v5411
        %6685 = vmatpush1.bf16.msra.mxu0 %v5410
        %6686 = vmatprep.mubr.bf16.mxu0 %v3139
        %6687 = vmatmul.mubr.bf16.gmra.mrb[0].mxu0 %v3138
        %v6688 = vpop.f32.mrb[0].mxu0
        %v6689 = vadd.f32 %v6648, %v6688
        %v6690 = vpop.f32.mrb[0].mxu0
        %v6691 = vadd.f32 %v6650, %v6690
        %v6692 = vpop.f32.mrb[0].mxu0
        %v6693 = vpop.f32.mrb[0].mxu0
        %6694 = vdwg.mxu0
        %6695 = vmatprep.subr.bf16.mxu0 %v5415
        %6696 = vmatpush1.bf16.msra.mxu0 %v5414
        %6697 = vmatprep.subr.bf16.mxu0 %v5419
        %6698 = vmatpush1.bf16.msra.mxu0 %v5418
        %6699 = vmatprep.subr.bf16.mxu0 %v5423
        %6700 = vmatpush1.bf16.msra.mxu0 %v5422
        %6701 = vmatprep.subr.bf16.mxu0 %v5427
        %6702 = vmatpush1.bf16.msra.mxu0 %v5426
        %6703 = vmatprep.subr.bf16.mxu0 %v5431
        %6704 = vmatpush1.bf16.msra.mxu0 %v5430
        %6705 = vmatprep.subr.bf16.mxu0 %v5435
        %6706 = vmatpush1.bf16.msra.mxu0 %v5434
        %6707 = vmatprep.subr.bf16.mxu0 %v5439
        %6708 = vmatpush1.bf16.msra.mxu0 %v5438
        %6709 = vmatprep.subr.bf16.mxu0 %v5443
        %6710 = vmatpush1.bf16.msra.mxu0 %v5442
        %6711 = vmatprep.subr.bf16.mxu0 %v5447
        %6712 = vmatpush1.bf16.msra.mxu0 %v5446
        %6713 = vmatprep.subr.bf16.mxu0 %v5451
        %6714 = vmatpush1.bf16.msra.mxu0 %v5450
        %6715 = vmatprep.subr.bf16.mxu0 %v5455
        %6716 = vmatpush1.bf16.msra.mxu0 %v5454
        %6717 = vmatprep.subr.bf16.mxu0 %v5459
        %6718 = vmatpush1.bf16.msra.mxu0 %v5458
        %6719 = vmatprep.subr.bf16.mxu0 %v5463
        %6720 = vmatpush1.bf16.msra.mxu0 %v5462
        %6721 = vmatprep.subr.bf16.mxu0 %v5467
        %6722 = vmatpush1.bf16.msra.mxu0 %v5466
        %6723 = vmatprep.subr.bf16.mxu0 %v5471
        %6724 = vmatpush1.bf16.msra.mxu0 %v5470
        %6725 = vmatprep.subr.bf16.mxu0 %v5475
        %6726 = vmatpush1.bf16.msra.mxu0 %v5474
        %6727 = vmatprep.mubr.bf16.mxu0 %v3141
        %6728 = vmatmul.mubr.bf16.gmra.mrb[0].mxu0 %v3140
        %v6729 = vpop.f32.mrb[0].mxu0
        %v6730 = vadd.f32 %v6689, %v6729
        %v6731 = vpop.f32.mrb[0].mxu0
        %v6732 = vadd.f32 %v6691, %v6731
        %v6733 = vpop.f32.mrb[0].mxu0
        %v6734 = vpop.f32.mrb[0].mxu0
        %6735 = vdwg.mxu0
        %6736 = vmatprep.subr.bf16.mxu0 %v5479
        %6737 = vmatpush1.bf16.msra.mxu0 %v5478
        %6738 = vmatprep.subr.bf16.mxu0 %v5483
        %6739 = vmatpush1.bf16.msra.mxu0 %v5482
        %6740 = vmatprep.subr.bf16.mxu0 %v5487
        %6741 = vmatpush1.bf16.msra.mxu0 %v5486
        %6742 = vmatprep.subr.bf16.mxu0 %v5491
        %6743 = vmatpush1.bf16.msra.mxu0 %v5490
        %6744 = vmatprep.subr.bf16.mxu0 %v5495
        %6745 = vmatpush1.bf16.msra.mxu0 %v5494
        %6746 = vmatprep.subr.bf16.mxu0 %v5499
        %6747 = vmatpush1.bf16.msra.mxu0 %v5498
        %6748 = vmatprep.subr.bf16.mxu0 %v5503
        %6749 = vmatpush1.bf16.msra.mxu0 %v5502
        %6750 = vmatprep.subr.bf16.mxu0 %v5507
        %6751 = vmatpush1.bf16.msra.mxu0 %v5506
        %6752 = vmatprep.subr.bf16.mxu0 %v5511
        %6753 = vmatpush1.bf16.msra.mxu0 %v5510
        %6754 = vmatprep.subr.bf16.mxu0 %v5515
        %6755 = vmatpush1.bf16.msra.mxu0 %v5514
        %6756 = vmatprep.subr.bf16.mxu0 %v5519
        %6757 = vmatpush1.bf16.msra.mxu0 %v5518
        %6758 = vmatprep.subr.bf16.mxu0 %v5523
        %6759 = vmatpush1.bf16.msra.mxu0 %v5522
        %6760 = vmatprep.subr.bf16.mxu0 %v5527
        %6761 = vmatpush1.bf16.msra.mxu0 %v5526
        %6762 = vmatprep.subr.bf16.mxu0 %v5531
        %6763 = vmatpush1.bf16.msra.mxu0 %v5530
        %6764 = vmatprep.subr.bf16.mxu0 %v5535
        %6765 = vmatpush1.bf16.msra.mxu0 %v5534
        %6766 = vmatprep.subr.bf16.mxu0 %v5539
        %6767 = vmatpush1.bf16.msra.mxu0 %v5538
        %6768 = vmatprep.mubr.bf16.mxu0 %v3143
        %6769 = vmatmul.mubr.bf16.gmra.mrb[0].mxu0 %v3142
        %v6770 = vpop.f32.mrb[0].mxu0
        %v6771 = vadd.f32 %v6730, %v6770
        %v6772 = vpop.f32.mrb[0].mxu0
        %v6773 = vadd.f32 %v6732, %v6772
        %v6774 = vpop.f32.mrb[0].mxu0
        %v6775 = vpop.f32.mrb[0].mxu0
        %6776 = vdwg.mxu0
        %6777 = vmatprep.subr.bf16.mxu0 %v5543
        %6778 = vmatpush1.bf16.msra.mxu0 %v5542
        %6779 = vmatprep.subr.bf16.mxu0 %v5547
        %6780 = vmatpush1.bf16.msra.mxu0 %v5546
        %6781 = vmatprep.subr.bf16.mxu0 %v5551
        %6782 = vmatpush1.bf16.msra.mxu0 %v5550
        %6783 = vmatprep.subr.bf16.mxu0 %v5555
        %6784 = vmatpush1.bf16.msra.mxu0 %v5554
        %6785 = vmatprep.subr.bf16.mxu0 %v5559
        %6786 = vmatpush1.bf16.msra.mxu0 %v5558
        %6787 = vmatprep.subr.bf16.mxu0 %v5563
        %6788 = vmatpush1.bf16.msra.mxu0 %v5562
        %6789 = vmatprep.subr.bf16.mxu0 %v5567
        %6790 = vmatpush1.bf16.msra.mxu0 %v5566
        %6791 = vmatprep.subr.bf16.mxu0 %v5571
        %6792 = vmatpush1.bf16.msra.mxu0 %v5570
        %6793 = vmatprep.subr.bf16.mxu0 %v5575
        %6794 = vmatpush1.bf16.msra.mxu0 %v5574
        %6795 = vmatprep.subr.bf16.mxu0 %v5579
        %6796 = vmatpush1.bf16.msra.mxu0 %v5578
        %6797 = vmatprep.subr.bf16.mxu0 %v5583
        %6798 = vmatpush1.bf16.msra.mxu0 %v5582
        %6799 = vmatprep.subr.bf16.mxu0 %v5587
        %6800 = vmatpush1.bf16.msra.mxu0 %v5586
        %6801 = vmatprep.subr.bf16.mxu0 %v5591
        %6802 = vmatpush1.bf16.msra.mxu0 %v5590
        %6803 = vmatprep.subr.bf16.mxu0 %v5595
        %6804 = vmatpush1.bf16.msra.mxu0 %v5594
        %6805 = vmatprep.subr.bf16.mxu0 %v5599
        %6806 = vmatpush1.bf16.msra.mxu0 %v5598
        %6807 = vmatprep.subr.bf16.mxu0 %v5603
        %6808 = vmatpush1.bf16.msra.mxu0 %v5602
        %6809 = vmatprep.mubr.bf16.mxu0 %v3145
        %6810 = vmatmul.mubr.bf16.gmra.mrb[0].mxu0 %v3144
        %v6811 = vpop.f32.mrb[0].mxu0
        %v6812 = vadd.f32 %v6771, %v6811
        %v6813 = vpop.f32.mrb[0].mxu0
        %v6814 = vadd.f32 %v6773, %v6813
        %v6815 = vpop.f32.mrb[0].mxu0
        %v6816 = vpop.f32.mrb[0].mxu0
        %6817 = vdwg.mxu0
        %6818 = vmatprep.subr.bf16.mxu0 %v5607
        %6819 = vmatpush1.bf16.msra.mxu0 %v5606
        %6820 = vmatprep.subr.bf16.mxu0 %v5611
        %6821 = vmatpush1.bf16.msra.mxu0 %v5610
        %6822 = vmatprep.subr.bf16.mxu0 %v5615
        %6823 = vmatpush1.bf16.msra.mxu0 %v5614
        %6824 = vmatprep.subr.bf16.mxu0 %v5619
        %6825 = vmatpush1.bf16.msra.mxu0 %v5618
        %6826 = vmatprep.subr.bf16.mxu0 %v5623
        %6827 = vmatpush1.bf16.msra.mxu0 %v5622
        %6828 = vmatprep.subr.bf16.mxu0 %v5627
        %6829 = vmatpush1.bf16.msra.mxu0 %v5626
        %6830 = vmatprep.subr.bf16.mxu0 %v5631
        %6831 = vmatpush1.bf16.msra.mxu0 %v5630
        %6832 = vmatprep.subr.bf16.mxu0 %v5635
        %6833 = vmatpush1.bf16.msra.mxu0 %v5634
        %6834 = vmatprep.subr.bf16.mxu0 %v5639
        %6835 = vmatpush1.bf16.msra.mxu0 %v5638
        %6836 = vmatprep.subr.bf16.mxu0 %v5643
        %6837 = vmatpush1.bf16.msra.mxu0 %v5642
        %6838 = vmatprep.subr.bf16.mxu0 %v5647
        %6839 = vmatpush1.bf16.msra.mxu0 %v5646
        %6840 = vmatprep.subr.bf16.mxu0 %v5651
        %6841 = vmatpush1.bf16.msra.mxu0 %v5650
        %6842 = vmatprep.subr.bf16.mxu0 %v5655
        %6843 = vmatpush1.bf16.msra.mxu0 %v5654
        %6844 = vmatprep.subr.bf16.mxu0 %v5659
        %6845 = vmatpush1.bf16.msra.mxu0 %v5658
        %6846 = vmatprep.subr.bf16.mxu0 %v5663
        %6847 = vmatpush1.bf16.msra.mxu0 %v5662
        %6848 = vmatprep.subr.bf16.mxu0 %v5667
        %6849 = vmatpush1.bf16.msra.mxu0 %v5666
        %6850 = vmatprep.mubr.bf16.mxu0 %v3147
        %6851 = vmatmul.mubr.bf16.gmra.mrb[0].mxu0 %v3146
        %v6852 = vpop.f32.mrb[0].mxu0
        %v6853 = vadd.f32 %v6812, %v6852
        %v6854 = vpop.f32.mrb[0].mxu0
        %v6855 = vadd.f32 %v6814, %v6854
        %v6856 = vpop.f32.mrb[0].mxu0
        %v6857 = vpop.f32.mrb[0].mxu0
        %6858 = vdwg.mxu0
        %6859 = vmatprep.subr.bf16.mxu0 %v5671
        %6860 = vmatpush1.bf16.msra.mxu0 %v5670
        %6861 = vmatprep.subr.bf16.mxu0 %v5675
        %6862 = vmatpush1.bf16.msra.mxu0 %v5674
        %6863 = vmatprep.subr.bf16.mxu0 %v5679
        %6864 = vmatpush1.bf16.msra.mxu0 %v5678
        %6865 = vmatprep.subr.bf16.mxu0 %v5683
        %6866 = vmatpush1.bf16.msra.mxu0 %v5682
        %6867 = vmatprep.subr.bf16.mxu0 %v5687
        %6868 = vmatpush1.bf16.msra.mxu0 %v5686
        %6869 = vmatprep.subr.bf16.mxu0 %v5691
        %6870 = vmatpush1.bf16.msra.mxu0 %v5690
        %6871 = vmatprep.subr.bf16.mxu0 %v5695
        %6872 = vmatpush1.bf16.msra.mxu0 %v5694
        %6873 = vmatprep.subr.bf16.mxu0 %v5699
        %6874 = vmatpush1.bf16.msra.mxu0 %v5698
        %6875 = vmatprep.subr.bf16.mxu0 %v5703
        %6876 = vmatpush1.bf16.msra.mxu0 %v5702
        %6877 = vmatprep.subr.bf16.mxu0 %v5707
        %6878 = vmatpush1.bf16.msra.mxu0 %v5706
        %6879 = vmatprep.subr.bf16.mxu0 %v5711
        %6880 = vmatpush1.bf16.msra.mxu0 %v5710
        %6881 = vmatprep.subr.bf16.mxu0 %v5715
        %6882 = vmatpush1.bf16.msra.mxu0 %v5714
        %6883 = vmatprep.subr.bf16.mxu0 %v5719
        %6884 = vmatpush1.bf16.msra.mxu0 %v5718
        %6885 = vmatprep.subr.bf16.mxu0 %v5723
        %6886 = vmatpush1.bf16.msra.mxu0 %v5722
        %6887 = vmatprep.subr.bf16.mxu0 %v5727
        %6888 = vmatpush1.bf16.msra.mxu0 %v5726
        %6889 = vmatprep.subr.bf16.mxu0 %v5731
        %6890 = vmatpush1.bf16.msra.mxu0 %v5730
        %6891 = vmatprep.mubr.bf16.mxu0 %v3149
        %6892 = vmatmul.mubr.bf16.gmra.mrb[0].mxu0 %v3148
        %v6893 = vpop.f32.mrb[0].mxu0
        %v6894 = vadd.f32 %v6853, %v6893
        %v6895 = vpop.f32.mrb[0].mxu0
        %v6896 = vadd.f32 %v6855, %v6895
        %v6897 = vpop.f32.mrb[0].mxu0
        %v6898 = vpop.f32.mrb[0].mxu0
        %6899 = vdwg.mxu0
        %vm6900 = vcmp.gt.f32.partialorder %v6566, 0.0
        %vm6901 = vcmp.gt.f32.partialorder %v6568, 0.0
        %vm6902 = vcmp.gt.f32.partialorder %v6894, 0.0
        %vm6903 = vcmp.gt.f32.partialorder %v6896, 0.0
        %v6904 = vmul.f32 %v6566, 0.01
        %v6905 = vmul.f32 %v6568, 0.01
        %v6906 = vmul.f32 %v6894, 0.01
        %v6907 = vmul.f32 %v6896, 0.01
        %v6908 = vsel %vm6900, %v6566, %v6904
        %v6909 = vsel %vm6901, %v6568, %v6905
        %v6910 = vsel %vm6902, %v6894, %v6906
        %v6911 = vsel %vm6903, %v6896, %v6907
        %v6912 = vpack.c.bf16 %v6908, %v6908
        %v6913 = vpack.c.bf16 %v6909, %v6909
        %v6914 = vpack.c.bf16 %v6910, %v6910
        %v6915 = vpack.c.bf16 %v6911, %v6911
        %v6916 = vld [vmem:[%s637] sm:$0xf]
        %v6917 = vld [vmem:[%s637 + $0x4] sm:$0xf]
        %v6918 = vld [vmem:[%s637 + $0x8] sm:$0xf]
        %v6919 = vld [vmem:[%s637 + $0xc] sm:$0xf]
        %v6920 = vld [vmem:[%s637 + $0x10] sm:$0xf]
        %v6921 = vld [vmem:[%s637 + $0x14] sm:$0xf]
        %v6922 = vld [vmem:[%s637 + $0x18] sm:$0xf]
        %v6923 = vld [vmem:[%s637 + $0x1c] sm:$0xf]
        %v6924 = vld [vmem:[%s637 + $0x20] sm:$0xf]
        %v6925 = vld [vmem:[%s637 + $0x24] sm:$0xf]
        %v6926 = vld [vmem:[%s637 + $0x28] sm:$0xf]
        %v6927 = vld [vmem:[%s637 + $0x2c] sm:$0xf]
        %v6928 = vld [vmem:[%s637 + $0x30] sm:$0xf]
        %v6929 = vld [vmem:[%s637 + $0x34] sm:$0xf]
        %v6930 = vld [vmem:[%s637 + $0x38] sm:$0xf]
        %v6931 = vld [vmem:[%s637 + $0x3c] sm:$0xf]
        %v6932 = vld [vmem:[%s637 + $0x40] sm:$0xf]
        %v6933 = vld [vmem:[%s637 + $0x44] sm:$0xf]
        %v6934 = vld [vmem:[%s637 + $0x48] sm:$0xf]
        %v6935 = vld [vmem:[%s637 + $0x4c] sm:$0xf]
        %v6936 = vld [vmem:[%s637 + $0x50] sm:$0xf]
        %v6937 = vld [vmem:[%s637 + $0x54] sm:$0xf]
        %v6938 = vld [vmem:[%s637 + $0x58] sm:$0xf]
        %v6939 = vld [vmem:[%s637 + $0x5c] sm:$0xf]
        %v6940 = vld [vmem:[%s637 + $0x60] sm:$0xf]
        %v6941 = vld [vmem:[%s637 + $0x64] sm:$0xf]
        %v6942 = vld [vmem:[%s637 + $0x68] sm:$0xf]
        %v6943 = vld [vmem:[%s637 + $0x6c] sm:$0xf]
        %v6944 = vld [vmem:[%s637 + $0x70] sm:$0xf]
        %v6945 = vld [vmem:[%s637 + $0x74] sm:$0xf]
        %v6946 = vld [vmem:[%s637 + $0x78] sm:$0xf]
        %v6947 = vld [vmem:[%s637 + $0x7c] sm:$0xf]
        %v6948 = vld [vmem:[%s637 + $0x80] sm:$0xf]
        %v6949 = vld [vmem:[%s637 + $0x84] sm:$0xf]
        %v6950 = vld [vmem:[%s637 + $0x88] sm:$0xf]
        %v6951 = vld [vmem:[%s637 + $0x8c] sm:$0xf]
        %v6952 = vld [vmem:[%s637 + $0x90] sm:$0xf]
        %v6953 = vld [vmem:[%s637 + $0x94] sm:$0xf]
        %v6954 = vld [vmem:[%s637 + $0x98] sm:$0xf]
        %v6955 = vld [vmem:[%s637 + $0x9c] sm:$0xf]
        %v6956 = vld [vmem:[%s637 + $0xa0] sm:$0xf]
        %v6957 = vld [vmem:[%s637 + $0xa4] sm:$0xf]
        %v6958 = vld [vmem:[%s637 + $0xa8] sm:$0xf]
        %v6959 = vld [vmem:[%s637 + $0xac] sm:$0xf]
        %v6960 = vld [vmem:[%s637 + $0xb0] sm:$0xf]
        %v6961 = vld [vmem:[%s637 + $0xb4] sm:$0xf]
        %v6962 = vld [vmem:[%s637 + $0xb8] sm:$0xf]
        %v6963 = vld [vmem:[%s637 + $0xbc] sm:$0xf]
        %v6964 = vld [vmem:[%s637 + $0xc0] sm:$0xf]
        %v6965 = vld [vmem:[%s637 + $0xc4] sm:$0xf]
        %v6966 = vld [vmem:[%s637 + $0xc8] sm:$0xf]
        %v6967 = vld [vmem:[%s637 + $0xcc] sm:$0xf]
        %v6968 = vld [vmem:[%s637 + $0xd0] sm:$0xf]
        %v6969 = vld [vmem:[%s637 + $0xd4] sm:$0xf]
        %v6970 = vld [vmem:[%s637 + $0xd8] sm:$0xf]
        %v6971 = vld [vmem:[%s637 + $0xdc] sm:$0xf]
        %v6972 = vld [vmem:[%s637 + $0xe0] sm:$0xf]
        %v6973 = vld [vmem:[%s637 + $0xe4] sm:$0xf]
        %v6974 = vld [vmem:[%s637 + $0xe8] sm:$0xf]
        %v6975 = vld [vmem:[%s637 + $0xec] sm:$0xf]
        %v6976 = vld [vmem:[%s637 + $0xf0] sm:$0xf]
        %v6977 = vld [vmem:[%s637 + $0xf4] sm:$0xf]
        %v6978 = vld [vmem:[%s637 + $0xf8] sm:$0xf]
        %v6979 = vld [vmem:[%s637 + $0xfc] sm:$0xf]
        %v6980 = vld [vmem:[%s645] sm:$0x1]
        %v6982 = vlaneseq
        %v6983 = vshrl.u32 %v6982, 7
        %v6984 = vsub.s32 0, %v6983
        %v6985 = vrot.slane %v6980, %v6984
        %v7051 = vunpack.c.l.b16 %v6916
        %v7052 = vunpack.c.l.b16 %v6917
        %v7053 = vunpack.c.l.b16 %v6918
        %v7054 = vunpack.c.l.b16 %v6919
        %v7055 = vunpack.c.l.b16 %v6920
        %v7056 = vunpack.c.l.b16 %v6921
        %v7057 = vunpack.c.l.b16 %v6922
        %v7058 = vunpack.c.l.b16 %v6923
        %v7059 = vunpack.c.l.b16 %v6924
        %v7060 = vunpack.c.l.b16 %v6925
        %v7061 = vunpack.c.l.b16 %v6926
        %v7062 = vunpack.c.l.b16 %v6927
        %v7063 = vunpack.c.l.b16 %v6928
        %v7064 = vunpack.c.l.b16 %v6929
        %v7065 = vunpack.c.l.b16 %v6930
        %v7066 = vunpack.c.l.b16 %v6931
        %v7067 = vunpack.c.l.b16 %v6932
        %v7068 = vunpack.c.l.b16 %v6933
        %v7069 = vunpack.c.l.b16 %v6934
        %v7070 = vunpack.c.l.b16 %v6935
        %v7071 = vunpack.c.l.b16 %v6936
        %v7072 = vunpack.c.l.b16 %v6937
        %v7073 = vunpack.c.l.b16 %v6938
        %v7074 = vunpack.c.l.b16 %v6939
        %v7075 = vunpack.c.l.b16 %v6940
        %v7076 = vunpack.c.l.b16 %v6941
        %v7077 = vunpack.c.l.b16 %v6942
        %v7078 = vunpack.c.l.b16 %v6943
        %v7079 = vunpack.c.l.b16 %v6944
        %v7080 = vunpack.c.l.b16 %v6945
        %v7081 = vunpack.c.l.b16 %v6946
        %v7082 = vunpack.c.l.b16 %v6947
        %v7083 = vunpack.c.l.b16 %v6948
        %v7084 = vunpack.c.l.b16 %v6949
        %v7085 = vunpack.c.l.b16 %v6950
        %v7086 = vunpack.c.l.b16 %v6951
        %v7087 = vunpack.c.l.b16 %v6952
        %v7088 = vunpack.c.l.b16 %v6953
        %v7089 = vunpack.c.l.b16 %v6954
        %v7090 = vunpack.c.l.b16 %v6955
        %v7091 = vunpack.c.l.b16 %v6956
        %v7092 = vunpack.c.l.b16 %v6957
        %v7093 = vunpack.c.l.b16 %v6958
        %v7094 = vunpack.c.l.b16 %v6959
        %v7095 = vunpack.c.l.b16 %v6960
        %v7096 = vunpack.c.l.b16 %v6961
        %v7097 = vunpack.c.l.b16 %v6962
        %v7098 = vunpack.c.l.b16 %v6963
        %v7099 = vunpack.c.l.b16 %v6964
        %v7100 = vunpack.c.l.b16 %v6965
        %v7101 = vunpack.c.l.b16 %v6966
        %v7102 = vunpack.c.l.b16 %v6967
        %v7103 = vunpack.c.l.b16 %v6968
        %v7104 = vunpack.c.l.b16 %v6969
        %v7105 = vunpack.c.l.b16 %v6970
        %v7106 = vunpack.c.l.b16 %v6971
        %v7107 = vunpack.c.l.b16 %v6972
        %v7108 = vunpack.c.l.b16 %v6973
        %v7109 = vunpack.c.l.b16 %v6974
        %v7110 = vunpack.c.l.b16 %v6975
        %v7111 = vunpack.c.l.b16 %v6976
        %v7112 = vunpack.c.l.b16 %v6977
        %v7113 = vunpack.c.l.b16 %v6978
        %v7114 = vunpack.c.l.b16 %v6979
        %v7115 = vpack.c.b16 %v7052, %v7051
        %v7116 = vpack.c.b16 %v7054, %v7053
        %v7117 = vpack.c.b16 %v7056, %v7055
        %v7118 = vpack.c.b16 %v7058, %v7057
        %v7119 = vpack.c.b16 %v7060, %v7059
        %v7120 = vpack.c.b16 %v7062, %v7061
        %v7121 = vpack.c.b16 %v7064, %v7063
        %v7122 = vpack.c.b16 %v7066, %v7065
        %v7123 = vpack.c.b16 %v7068, %v7067
        %v7124 = vpack.c.b16 %v7070, %v7069
        %v7125 = vpack.c.b16 %v7072, %v7071
        %v7126 = vpack.c.b16 %v7074, %v7073
        %v7127 = vpack.c.b16 %v7076, %v7075
        %v7128 = vpack.c.b16 %v7078, %v7077
        %v7129 = vpack.c.b16 %v7080, %v7079
        %v7130 = vpack.c.b16 %v7082, %v7081
        %v7131 = vpack.c.b16 %v7084, %v7083
        %v7132 = vpack.c.b16 %v7086, %v7085
        %v7133 = vpack.c.b16 %v7088, %v7087
        %v7134 = vpack.c.b16 %v7090, %v7089
        %v7135 = vpack.c.b16 %v7092, %v7091
        %v7136 = vpack.c.b16 %v7094, %v7093
        %v7137 = vpack.c.b16 %v7096, %v7095
        %v7138 = vpack.c.b16 %v7098, %v7097
        %v7139 = vpack.c.b16 %v7100, %v7099
        %v7140 = vpack.c.b16 %v7102, %v7101
        %v7141 = vpack.c.b16 %v7104, %v7103
        %v7142 = vpack.c.b16 %v7106, %v7105
        %v7143 = vpack.c.b16 %v7108, %v7107
        %v7144 = vpack.c.b16 %v7110, %v7109
        %v7145 = vpack.c.b16 %v7112, %v7111
        %v7146 = vpack.c.b16 %v7114, %v7113
        %7179 = vmatprep.subr.bf16.mxu0 0
        %7180 = vmatpush1.bf16.msra.mxu0 %v7115
        %7181 = vmatprep.subr.bf16.mxu0 0
        %7182 = vmatpush1.bf16.msra.mxu0 %v7116
        %7183 = vmatprep.subr.bf16.mxu0 0
        %7184 = vmatpush1.bf16.msra.mxu0 %v7117
        %7185 = vmatprep.subr.bf16.mxu0 0
        %7186 = vmatpush1.bf16.msra.mxu0 %v7118
        %7187 = vmatprep.subr.bf16.mxu0 0
        %7188 = vmatpush1.bf16.msra.mxu0 %v7119
        %7189 = vmatprep.subr.bf16.mxu0 0
        %7190 = vmatpush1.bf16.msra.mxu0 %v7120
        %7191 = vmatprep.subr.bf16.mxu0 0
        %7192 = vmatpush1.bf16.msra.mxu0 %v7121
        %7193 = vmatprep.subr.bf16.mxu0 0
        %7194 = vmatpush1.bf16.msra.mxu0 %v7122
        %7195 = vmatprep.subr.bf16.mxu0 0
        %7196 = vmatpush1.bf16.msra.mxu0 %v7123
        %7197 = vmatprep.subr.bf16.mxu0 0
        %7198 = vmatpush1.bf16.msra.mxu0 %v7124
        %7199 = vmatprep.subr.bf16.mxu0 0
        %7200 = vmatpush1.bf16.msra.mxu0 %v7125
        %7201 = vmatprep.subr.bf16.mxu0 0
        %7202 = vmatpush1.bf16.msra.mxu0 %v7126
        %7203 = vmatprep.subr.bf16.mxu0 0
        %7204 = vmatpush1.bf16.msra.mxu0 %v7127
        %7205 = vmatprep.subr.bf16.mxu0 0
        %7206 = vmatpush1.bf16.msra.mxu0 %v7128
        %7207 = vmatprep.subr.bf16.mxu0 0
        %7208 = vmatpush1.bf16.msra.mxu0 %v7129
        %7209 = vmatprep.subr.bf16.mxu0 0
        %7210 = vmatpush1.bf16.msra.mxu0 %v7130
        %7211 = vmatprep.mubr.bf16.mxu0 %v6913
        %7212 = vmatmul.mubr.bf16.gmra.mrb[0].mxu0 %v6912
        %v7213 = vpop.f32.mrb[0].mxu0
        %v7214 = vadd.f32 %v6985, %v7213
        %v7215 = vpop.f32.mrb[0].mxu0
        %v7216 = vpop.f32.mrb[0].mxu0
        %v7217 = vpop.f32.mrb[0].mxu0
        %7218 = vdwg.mxu0
        %7219 = vmatprep.subr.bf16.mxu0 0
        %7220 = vmatpush1.bf16.msra.mxu0 %v7131
        %7221 = vmatprep.subr.bf16.mxu0 0
        %7222 = vmatpush1.bf16.msra.mxu0 %v7132
        %7223 = vmatprep.subr.bf16.mxu0 0
        %7224 = vmatpush1.bf16.msra.mxu0 %v7133
        %7225 = vmatprep.subr.bf16.mxu0 0
        %7226 = vmatpush1.bf16.msra.mxu0 %v7134
        %7227 = vmatprep.subr.bf16.mxu0 0
        %7228 = vmatpush1.bf16.msra.mxu0 %v7135
        %7229 = vmatprep.subr.bf16.mxu0 0
        %7230 = vmatpush1.bf16.msra.mxu0 %v7136
        %7231 = vmatprep.subr.bf16.mxu0 0
        %7232 = vmatpush1.bf16.msra.mxu0 %v7137
        %7233 = vmatprep.subr.bf16.mxu0 0
        %7234 = vmatpush1.bf16.msra.mxu0 %v7138
        %7235 = vmatprep.subr.bf16.mxu0 0
        %7236 = vmatpush1.bf16.msra.mxu0 %v7139
        %7237 = vmatprep.subr.bf16.mxu0 0
        %7238 = vmatpush1.bf16.msra.mxu0 %v7140
        %7239 = vmatprep.subr.bf16.mxu0 0
        %7240 = vmatpush1.bf16.msra.mxu0 %v7141
        %7241 = vmatprep.subr.bf16.mxu0 0
        %7242 = vmatpush1.bf16.msra.mxu0 %v7142
        %7243 = vmatprep.subr.bf16.mxu0 0
        %7244 = vmatpush1.bf16.msra.mxu0 %v7143
        %7245 = vmatprep.subr.bf16.mxu0 0
        %7246 = vmatpush1.bf16.msra.mxu0 %v7144
        %7247 = vmatprep.subr.bf16.mxu0 0
        %7248 = vmatpush1.bf16.msra.mxu0 %v7145
        %7249 = vmatprep.subr.bf16.mxu0 0
        %7250 = vmatpush1.bf16.msra.mxu0 %v7146
        %7251 = vmatprep.mubr.bf16.mxu0 %v6915
        %7252 = vmatmul.mubr.bf16.gmra.mrb[0].mxu0 %v6914
        %v7253 = vpop.f32.mrb[0].mxu0
        %v7254 = vadd.f32 %v7214, %v7253
        %v7255 = vpop.f32.mrb[0].mxu0
        %v7256 = vpop.f32.mrb[0].mxu0
        %v7257 = vpop.f32.mrb[0].mxu0
        %7258 = vdwg.mxu0
        %vm7259 = vcmp.gt.f32.partialorder %v7254, 0.0
        %v7260 = vmul.f32 %v7254, 0.01
        %v7261 = vsel %vm7259, %v7254, %v7260
        %v7262 = vld [vmem:[%s653] sm:$0x1]
        %v7264 = vlaneseq
        %v7265 = vshrl.u32 %v7264, 7
        %v7266 = vsub.s32 0, %v7265
        %v7267 = vrot.slane %v7262, %v7266
        %v7269 = vmul.f32 %v7261, %v7267
        %7270 = vadd.xlane.f32.xlu0 %v7269
        %v7271 = vpop.xlane.xlu0 %7270
        %v7272 = vld [vmem:[%s751] sm:$0x1]
        %v7274 = vlaneseq
        %v7275 = vshrl.u32 %v7274, 7
        %v7276 = vsub.s32 0, %v7275
        %v7277 = vrot.slane %v7272, %v7276
        %v7279 = vadd.f32 %v7271, %v7277
        %vm7280 = vcmask 7168
        %7281 = vst.msk [vmem:[%s758] sm:$0xff] %vm7280, %v7279
        %p7282 = scmp.lt.s32.totalorder %s41, 3
        %s7283 = scalar_select %p7282, %s41, 3
        %p7284 = scmp.lt.s32.totalorder %s42, 0
        %s7285 = scalar_select %p7284, %s42, 0
        %s7286 = sadd.s32 %s7285, %s7283
        %s7287 = smul.addr %s7286, 8
        %s7288 = scalar_lea.vmem %s11, %s7287
        // Predicated region
        $region101: #{cuttlefish_forward.1} parent=63 // pred_check
          %p7289 = pneg %p359
        $region102: #{cuttlefish_forward.1} parent=63 // pred_check_branch
          %7291 = sbr.rel (%p7289) target = $region104
        $region103: #{cuttlefish_forward.1} parent=63 // pred_region
          _
        $region104: #{cuttlefish_forward.1} parent=63 // pred_fallthru
          _
      $region64: #{cuttlefish_forward.1} parent=5 // pred_fallthru
        _
      %p7292 = scmp.le.s32.totalorder 2, %s32
      // Predicated region
      $region105: #{cuttlefish_forward.1} parent=5 // pred_check
        %p7293 = pneg %p7292
      $region106: #{cuttlefish_forward.1} parent=5 // pred_check_branch
        %7295 = sbr.rel (%p7293) target = $region108
      $region107: #{cuttlefish_forward.1} parent=5 // pred_region
        %s7296 = ssub.s32 %s32, 2
        // Predicated region
        $region109: #{cuttlefish_forward.1} parent=107 // pred_check
          %p7297 = pneg %p365
        $region110: #{cuttlefish_forward.1} parent=107 // pred_check_branch
          %7299 = sbr.rel (%p7297) target = $region112
        $region111: #{cuttlefish_forward.1} parent=107 // pred_region
          %p7300 = scmp.lt.s32.totalorder %s43, 3
          %s7301 = scalar_select %p7300, %s43, 3
          %p7302 = scmp.lt.s32.totalorder %s44, 0
          %s7303 = scalar_select %p7302, %s44, 0
          %s7304 = sadd.s32 %s7303, %s7301
          %s7305 = smul.addr %s7304, 8
          %s7306 = scalar_lea.vmem %s11, %s7305
        $region112: #{cuttlefish_forward.1} parent=107 // pred_fallthru
          _
      $region108: #{cuttlefish_forward.1} parent=5 // pred_fallthru
        _
    $region6: #{cuttlefish_forward.1} parent=1 // loop_footer
      %s36 = sadd.s32 1, %s32
    $region7: #{cuttlefish_forward.1} parent=1 // loop_footer_branch
      %31 = sbr.rel target = $region3
    $region8: #{cuttlefish_forward.1} parent=1 // loop_exit
      _
    %7307 = vsyncpa [#allocation3], 1
    %s7308 = scalar_lea.sflag [#allocation3], 1
    %7309 = vsyncpa %s7308, 1
    %7310 = vsyncpa [#allocation5], 1
    %s7311 = scalar_lea.sflag [#allocation5], 1
    %7312 = vsyncpa %s7311, 1
    %7313 = vsyncpa [#allocation8], 1
    %s7314 = scalar_lea.sflag [#allocation8], 1
    %7315 = vsyncpa %s7314, 1
    %7316 = vsyncpa [#allocation11], 1
    %s7317 = scalar_lea.sflag [#allocation11], 1
    %7318 = vsyncpa %s7317, 1
    %7319 = vsyncpa [#allocation14], 1
    %s7320 = scalar_lea.sflag [#allocation14], 1
    %7321 = vsyncpa %s7320, 1

</llo_original>
